<compile_context>
chip_gen: v7x
topology: tpu7x:2x2x1
jax: 0.10.0
libtpu: 0.0.40
codegen_flags: <defaults>
</compile_context>

<pallas_src>
import functools
import math

import jax
import jax.numpy as jnp
from jax.experimental import pallas as pl
from jax.experimental.pallas import tpu as pltpu

BN_EPS = 1e-5

# Remembers whether this JAX build accepts pipeline_mode=pl.Buffered(1).
_SINGLE_BUFFER_OK = None


def _round_up(x, m):
    return ((x + m - 1) // m) * m


def _cdiv(a, b):
    return -(-a // b)


def _vmem_budget_bytes():
    """Generation-aware usable-VMEM budget (~85% of physical VMEM)."""
    try:
        cap = int(pltpu.get_tpu_info().vmem_capacity_bytes)
    except Exception:
        cap = 64 << 20   # conservative: v7x physical VMEM (smallest supported gen)
    return max(16 << 20, int(cap * 0.85))


# --------------------------------------------------------------------------------------
# Pallas kernels
# --------------------------------------------------------------------------------------
def _conv_bias_relu_kernel(xp_ref, w_ref, b_ref, o_ref, patch_ref, *,
                           rows_out, w_out, ksize, stride, cin_p):
    """Folded KxK conv + bias + ReLU for one output-row tile (im2col scratch -> 1 matmul).

    xp_ref   : (Hp, Wp, Cin_p)          whole padded NHWC image of this batch element
    w_ref    : (K*K*Cin_p, Cout_p)      folded weight (block-diagonal over groups)
    b_ref    : (1, Cout_p)              folded bias (f32)
    o_ref    : (rows_out*W_out, Cout_p) flattened-spatial output tile (lane-dense)
    patch_ref: (rows_out*W_out, K*K*Cin_p) VMEM scratch im2col patch
    """
    r = pl.program_id(1)
    row0 = pl.multiple_of(r * (rows_out * stride), rows_out * stride)
    hw = rows_out * w_out
    kk = ksize * ksize

    # Build the im2col patch: each tap slab is read straight from the resident image
    # and stored into the scratch patch (no intermediate xrows / concatenate).
    for idx in range(kk):
        dy, dx = divmod(idx, ksize)
        if stride == 1:
            slab = xp_ref[pl.ds(row0 + dy, rows_out), pl.ds(dx, w_out), :]
        else:
            slab = xp_ref[pl.ds(row0 + dy, rows_out, stride=stride),
                          pl.ds(dx, w_out, stride=stride), :]
        patch_ref[:, idx * cin_p:(idx + 1) * cin_p] = slab.reshape(hw, cin_p)

    # ONE MXU matmul per row tile, f32 accumulation, fused bias + ReLU epilogue.
    acc = jnp.dot(patch_ref[...], w_ref[...], preferred_element_type=jnp.float32)
    o_ref[...] = jnp.maximum(acc + b_ref[...], 0.0).astype(o_ref.dtype)


def _dw_conv_bias_relu_kernel(xp_ref, w_ref, b_ref, o_ref, *,
                              rows_out, w_out, ksize, stride, c_chunk):
    """Depthwise path: per-tap VPU FMA in f32, channel-chunked accumulator.

    xp_ref: (Hp, Wp, C_p)   w_ref: (K*K, C_p)   b_ref: (1, C_p)
    o_ref : (rows_out, W_out, C_p)
    """
    r = pl.program_id(1)
    row0 = pl.multiple_of(r * (rows_out * stride), rows_out * stride)
    c_total = o_ref.shape[-1]
    kk = ksize * ksize

    for c0 in range(0, c_total, c_chunk):
        # Hoisted per-chunk weight/bias loads (single load, rows indexed in the tap loop).
        wk = w_ref[:, c0:c0 + c_chunk].astype(jnp.float32)        # (kk, c_chunk)
        bk = b_ref[:, c0:c0 + c_chunk].astype(jnp.float32)        # (1, c_chunk)
        acc = jnp.zeros((rows_out, w_out, c_chunk), jnp.float32)
        for idx in range(kk):
            dy, dx = divmod(idx, ksize)
            if stride == 1:
                slab = xp_ref[pl.ds(row0 + dy, rows_out), pl.ds(dx, w_out),
                              c0:c0 + c_chunk]
            else:
                slab = xp_ref[pl.ds(row0 + dy, rows_out, stride=stride),
                              pl.ds(dx, w_out, stride=stride), c0:c0 + c_chunk]
            acc = acc + slab.astype(jnp.float32) * wk[idx]
        y = jnp.maximum(acc + bk, 0.0)
        o_ref[:, :, c0:c0 + c_chunk] = y.astype(o_ref.dtype)


# --------------------------------------------------------------------------------------
# Parameter construction (deterministic, synthetic) — mirrors MobileOneConv2d's __init__.
# --------------------------------------------------------------------------------------
def _init_bn(key, c):
    k1, k2, k3, k4 = jax.random.split(key, 4)
    return dict(
        gamma=1.0 + 0.1 * jax.random.normal(k1, (c,), jnp.float32),
        beta=0.1 * jax.random.normal(k2, (c,), jnp.float32),
        mean=0.1 * jax.random.normal(k3, (c,), jnp.float32),
        var=1.0 + 0.5 * jax.random.uniform(k4, (c,), jnp.float32),
    )


def init_mobileone_params(key, cin, cout, ksize, stride, groups, num_conv_branches):
    cin_g = cin // groups
    kit = iter(jax.random.split(key, 2 * num_conv_branches + 6))
    params = {"conv_branches": [], "scale": None, "skip": None}
    for _ in range(num_conv_branches):
        w = 0.1 * jax.random.normal(next(kit), (cout, cin_g, ksize, ksize), jnp.float32)
        params["conv_branches"].append(dict(w=w, bn=_init_bn(next(kit), cout)))
    if ksize > 1:  # 1x1 "scale" branch
        w = 0.1 * jax.random.normal(next(kit), (cout, cin_g, 1, 1), jnp.float32)
        params["scale"] = dict(w=w, bn=_init_bn(next(kit), cout))
    if cin == cout and stride == 1:  # BN-only skip branch
        params["skip"] = _init_bn(next(kit), cin)
    return params


# --------------------------------------------------------------------------------------
# Glue: fold every branch's conv + eval-mode BN into one effective KxK weight + bias.
# --------------------------------------------------------------------------------------
def _fold_conv_bn(w, bn):
    t = bn["gamma"] / jnp.sqrt(bn["var"] + BN_EPS)
    return w * t[:, None, None, None], bn["beta"] - bn["mean"] * t


def _fold_branches(params, cin, cout, ksize, groups):
    cin_g = cin // groups
    w_eff = jnp.zeros((cout, cin_g, ksize, ksize), jnp.float32)
    b_eff = jnp.zeros((cout,), jnp.float32)
    for br in params["conv_branches"]:
        w, b = _fold_conv_bn(br["w"], br["bn"])
        w_eff, b_eff = w_eff + w, b_eff + b
    if params["scale"] is not None:
        w1, b1 = _fold_conv_bn(params["scale"]["w"], params["scale"]["bn"])
        pad = ksize // 2
        w_eff = w_eff + jnp.pad(w1, ((0, 0), (0, 0), (pad, pad), (pad, pad)))
        b_eff = b_eff + b1
    if params["skip"] is not None:
        idk = jnp.zeros((cout, cin_g, ksize, ksize), jnp.float32)
        for i in range(cout):
            idk = idk.at[i, i % cin_g, ksize // 2, ksize // 2].set(1.0)
        w, b = _fold_conv_bn(idk, params["skip"])
        w_eff, b_eff = w_eff + w, b_eff + b
    return w_eff, b_eff


# --------------------------------------------------------------------------------------
# Public wrapper: NCHW in / NCHW out (matches the PyTorch module).
# --------------------------------------------------------------------------------------
def mobileone_block_forward(x_nchw, params, *, kernel_size, stride, padding, groups,
                            compute_dtype=jnp.bfloat16, row_tile=None):
    global _SINGLE_BUFFER_OK
    n, cin, h, w = x_nchw.shape
    cout = params["conv_branches"][0]["w"].shape[0]
    assert padding == kernel_size // 2, "branch folding assumes padding == kernel_size // 2"
    assert cin % groups == 0 and cout % groups == 0
    cin_g, cout_g = cin // groups, cout // groups
    depthwise = (groups == cin and cout == cin)

    ks = kernel_size
    kk = ks * ks
    h_out = (h + 2 * padding - ks) // stride + 1
    w_out = (w + 2 * padding - ks) // stride + 1
    # TODO(synk): emit bf16 / NHWC directly (and fuse the valid-region slice into the
    #             consumer) when the surrounding model allows — halves output HBM bytes.
    out_dtype = x_nchw.dtype

    # ----- channel padding: lane-dense Cout; Cin -> 128 unless it is tiny -----
    if depthwise:
        cin_p = cout_p = _round_up(cout, 128)
    else:
        cin_p = _round_up(cin, 8) if cin <= 16 else _round_up(cin, 128)
        cout_p = _round_up(cout, 128)

    # ----- row tiling: ~512 output pixels (256 for depthwise), hw multiple of 8 -----
    step = 8 // math.gcd(w_out, 8)       # row_tile multiple of `step` -> hw % 8 == 0
    if row_tile is None:
        target = 256 if depthwise else 512
        row_tile = max(1, _cdiv(target, w_out))
    row_tile = min(h_out, _round_up(row_tile, step))
    # megacore: make sure there are at least 2 parallel grid steps when possible
    if n * _cdiv(h_out, row_tile) < 2 and row_tile > step:
        row_tile = max(step, (row_tile // 2 // step) * step)

    # ----- VMEM budget (generation-aware); shrink the row tile until it fits -----
    budget = _vmem_budget_bytes()
    it = jnp.dtype(compute_dtype).itemsize
    ot = jnp.dtype(out_dtype).itemsize
    wp_dim = w + 2 * padding

    def vmem_need(rt):
        n_rt = _cdiv(h_out, rt)
        hp_need = (n_rt * rt - 1) * stride + ks
        hp_tot = h + padding + max(0, hp_need - h - padding)
        hw_ = rt * w_out
        img_bufs = 1 if _SINGLE_BUFFER_OK is not False else 2
        img = img_bufs * hp_tot * wp_dim * cin_p * it
        if depthwise:
            wgt = 2 * kk * cout_p * it
            scratch = hw_ * 128 * 4                       # f32 accumulator chunk
        else:
            wgt = 2 * kk * cin_p * cout_p * it
            scratch = hw_ * kk * cin_p * it + hw_ * cout_p * 4
        outb = 2 * hw_ * cout_p * ot
        return int(1.25 * (img + wgt + cout_p * 4 + outb + scratch)) + (2 << 20)

    while vmem_need(row_tile) > budget and row_tile > step:
        row_tile = max(step, (row_tile // 2 // step) * step)
    # TODO(synk): if the whole padded image alone exceeds VMEM (very large feature maps),
    #             switch the image to memory_space=pl.ANY with a manual row-halo DMA
    #             double-buffer instead of relying on a resident image block.
    vmem_limit = int(min(max(vmem_need(row_tile), 8 << 20), budget))

    n_row_tiles = _cdiv(h_out, row_tile)
    h_out_p = n_row_tiles * row_tile
    hw = row_tile * w_out
    hp_needed = (h_out_p - 1) * stride + ks
    bot_pad = max(0, hp_needed - h - padding)
    hp_total = h + padding + bot_pad

    # ----- fold all branches into one effective KxK conv -----
    w_eff, b_eff = _fold_branches(params, cin, cout, ks, groups)
    b_kern = jnp.pad(b_eff, (0, cout_p - cout)).reshape(1, cout_p).astype(jnp.float32)
    if depthwise:
        w_kern = jnp.transpose(w_eff[:, 0, :, :], (1, 2, 0)).reshape(kk, cout)   # (K*K, C)
        w_kern = jnp.pad(w_kern, ((0, 0), (0, cout_p - cout))).astype(compute_dtype)
    else:
        if groups == 1:
            w_full = w_eff
        else:
            # TODO(synk): 1 < groups < Cin is fused into a single block-diagonal matmul
            #             (lane-dense, but groups-x flop waste for very large channel counts).
            w_full = jnp.zeros((cout, cin, ks, ks), jnp.float32)
            for g in range(groups):
                w_full = w_full.at[g * cout_g:(g + 1) * cout_g,
                                   g * cin_g:(g + 1) * cin_g].set(
                    w_eff[g * cout_g:(g + 1) * cout_g])
        w_kern = jnp.transpose(w_full, (2, 3, 1, 0))                   # (K, K, Cin, Cout)
        w_kern = jnp.pad(w_kern, ((0, 0), (0, 0),
                                  (0, cin_p - cin), (0, cout_p - cout)))
        w_kern = w_kern.reshape(kk * cin_p, cout_p).astype(compute_dtype)

    # ----- NHWC + spatial/channel zero pad (single wrapper pass) -----
    # TODO(synk): the conv halo is materialized by this wrapper-side pad (one extra HBM
    #             pass of the activation); in-kernel masked halo handling would remove it.
    x_nhwc = jnp.transpose(x_nchw, (0, 2, 3, 1))
    xp = jnp.pad(x_nhwc, ((0, 0), (padding, bot_pad), (padding, padding),
                          (0, cin_p - cin))).astype(compute_dtype)

    # ----- kernel selection -----
    if depthwise:
        kernel = functools.partial(_dw_conv_bias_relu_kernel, rows_out=row_tile,
                                   w_out=w_out, ksize=ks, stride=stride, c_chunk=128)
        out_shape = jax.ShapeDtypeStruct((n, h_out_p, w_out, cout_p), out_dtype)
        out_block = (None, row_tile, w_out, cout_p)
        out_index = lambda b, r: (b, r, 0, 0)
        w_shape = (kk, cout_p)
        scratch = ()
    else:
        kernel = functools.partial(_conv_bias_relu_kernel, rows_out=row_tile,
                                   w_out=w_out, ksize=ks, stride=stride, cin_p=cin_p)
        out_shape = jax.ShapeDtypeStruct((n, h_out_p * w_out, cout_p), out_dtype)
        out_block = (None, hw, cout_p)
        out_index = lambda b, r: (b, r, 0)
        w_shape = (kk * cin_p, cout_p)
        scratch = (pltpu.VMEM((hw, kk * cin_p), compute_dtype),)

    def run(single_buffer):
        def spec(shape, imap):
            if single_buffer:
                return pl.BlockSpec(shape, imap, pipeline_mode=pl.Buffered(1))
            return pl.BlockSpec(shape, imap)
        in_specs = [
            # whole padded image: resident across this batch element's row tiles
            spec((None, hp_total, wp_dim, cin_p), lambda b, r: (b, 0, 0, 0)),
            # folded weight / bias: constant index_map -> single buffer is enough
            spec(w_shape, lambda b, r: (0,) * len(w_shape)),
            spec((1, cout_p), lambda b, r: (0, 0)),
        ]
        return pl.pallas_call(
            kernel,
            out_shape=out_shape,
            grid=(n, n_row_tiles),
            in_specs=in_specs,
            out_specs=pl.BlockSpec(out_block, out_index),
            scratch_shapes=scratch,
            compiler_params=pltpu.CompilerParams(
                dimension_semantics=("parallel", "parallel"),
                vmem_limit_bytes=vmem_limit),
        )(xp, w_kern, b_kern)

    y_pad = None
    if _SINGLE_BUFFER_OK is not False:
        try:
            y_pad = jax.block_until_ready(run(True))
            _SINGLE_BUFFER_OK = True
        except Exception:        # pipeline_mode / Buffered(1) unsupported on this build
            _SINGLE_BUFFER_OK = False
    if y_pad is None:
        y_pad = run(False)

    if depthwise:
        y_nhwc = y_pad[:, :h_out, :, :cout]
    else:
        y_nhwc = y_pad.reshape(n, h_out_p, w_out, cout_p)[:, :h_out, :, :cout]
    return jnp.transpose(y_nhwc, (0, 3, 1, 2))


# --------------------------------------------------------------------------------------
# Pure-JAX reference (per-branch, unfolded) — eval-mode BN, matches the PyTorch forward.
# --------------------------------------------------------------------------------------
def _bn_eval(y, bn):
    scale = (bn["gamma"] / jnp.sqrt(bn["var"] + BN_EPS))[None, :, None, None]
    return (y - bn["mean"][None, :, None, None]) * scale + bn["beta"][None, :, None, None]


def reference_forward(x, params, *, kernel_size, stride, padding, groups):
    def conv(xx, w, pad):
        return jax.lax.conv_general_dilated(
            xx, w, window_strides=(stride, stride),
            padding=((pad, pad), (pad, pad)),
            dimension_numbers=("NCHW", "OIHW", "NCHW"),
            feature_group_count=groups,
            precision=jax.lax.Precision.HIGHEST)

    out = jnp.zeros_like(conv(x, params["conv_branches"][0]["w"], padding))
    if params["skip"] is not None:
        out = out + _bn_eval(x, params["skip"])
    if params["scale"] is not None:
        out = out + _bn_eval(conv(x, params["scale"]["w"], 0), params["scale"]["bn"])
    for br in params["conv_branches"]:
        out = out + _bn_eval(conv(x, br["w"], padding), br["bn"])
    return jnp.maximum(out, 0.0)


if __name__ == "__main__":
    key = jax.random.PRNGKey(0)
    kx, kp, kx2, kp2 = jax.random.split(key, 4)

    # --- config 1: MobileOneBlock(4, 4, kernel_size=3, stride=1, padding=1, groups=1,
    #                              use_se=False, num_conv_branches=2) ---
    N, Cin, H, W = 2, 4, 16, 16
    Cout, K, STRIDE, PAD, GROUPS, NUM_BRANCHES = 4, 3, 1, 1, 1, 2
    x = jax.random.normal(kx, (N, Cin, H, W), jnp.float32)
    params = init_mobileone_params(kp, Cin, Cout, K, STRIDE, GROUPS, NUM_BRANCHES)
    y_ref = reference_forward(x, params, kernel_size=K, stride=STRIDE,
                              padding=PAD, groups=GROUPS)
    y_scale = 1.0 + float(jnp.max(jnp.abs(y_ref)))

    # f32 compute path: checks the folded/im2col kernel math.
    y32 = mobileone_block_forward(x, params, kernel_size=K, stride=STRIDE, padding=PAD,
                                  groups=GROUPS, compute_dtype=jnp.float32)
    y32 = jax.block_until_ready(y32)
    assert y32.shape == (N, Cout, H, W), y32.shape
    err32 = float(jnp.max(jnp.abs(y32 - y_ref)))
    if err32 > 5e-3 * y_scale:
        raise AssertionError(f"f32 Pallas kernel mismatch vs reference: max |err| = {err32}")

    # bf16 compute path (default perf config): f32 accumulation, looser tolerance.
    ybf = mobileone_block_forward(x, params, kernel_size=K, stride=STRIDE, padding=PAD,
                                  groups=GROUPS)   # compute_dtype=bf16 default
    ybf = jax.block_until_ready(ybf)
    errbf = float(jnp.max(jnp.abs(ybf - y_ref)))
    if errbf > 2e-2 * y_scale:
        raise AssertionError(f"bf16 Pallas kernel mismatch: max |err| = {errbf}")

    # --- config 2: depthwise block (groups == Cin == Cout) exercising the VPU path ---
    N2, C2, H2, W2 = 2, 8, 16, 16
    x2 = jax.random.normal(kx2, (N2, C2, H2, W2), jnp.float32)
    params2 = init_mobileone_params(kp2, C2, C2, 3, 1, C2, 2)
    y2_ref = reference_forward(x2, params2, kernel_size=3, stride=1, padding=1, groups=C2)
    y2 = mobileone_block_forward(x2, params2, kernel_size=3, stride=1, padding=1,
                                 groups=C2, compute_dtype=jnp.float32)
    y2 = jax.block_until_ready(y2)
    assert y2.shape == (N2, C2, H2, W2), y2.shape
    err2 = float(jnp.max(jnp.abs(y2 - y2_ref)))
    if err2 > 5e-3 * (1.0 + float(jnp.max(jnp.abs(y2_ref)))):
        raise AssertionError(f"depthwise Pallas kernel mismatch: max |err| = {err2}")

    print("KERNEL_OK")
</pallas_src>

<mosaic_0001>
module attributes {stable_mosaic.version = 11 : i64} {
  func.func @_conv_bias_relu_kernel(%arg0: i32, %arg1: i32, %arg2: memref<1x18x18x8xf32, #tpu.memory_space<vmem>>, %arg3: memref<72x128xf32, #tpu.memory_space<vmem>>, %arg4: memref<1x128xf32, #tpu.memory_space<vmem>>, %arg5: memref<1x256x128xf32, #tpu.memory_space<vmem>>, %arg6: memref<256x72xf32, #tpu.memory_space<vmem>>) attributes {dimension_semantics = [#tpu.dimension_semantics<parallel>, #tpu.dimension_semantics<parallel>], iteration_bounds = array<i64: 2, 1>, scalar_prefetch = 0 : i64, scratch_operands = 1 : i64, tpu.core_type = #tpu.core_type<tc>, window_params = [{pipeline_mode = #tpu.pipeline_mode<synchronous>, transform_indices = @transform_0, window_bounds = array<i64: 1, 18, 18, 8>}, {pipeline_mode = #tpu.pipeline_mode<synchronous>, transform_indices = @transform_1, window_bounds = array<i64: 72, 128>}, {pipeline_mode = #tpu.pipeline_mode<synchronous>, transform_indices = @transform_2, window_bounds = array<i64: 1, 128>}, {transform_indices = @transform_3, window_bounds = array<i64: 1, 256, 128>}]} {
    %c16_i32 = arith.constant 16 : i32
    %0 = arith.muli %arg1, %c16_i32 : i32
    %1 = tpu.assume_multiple %0, 16 : i32
    %c0_i32 = arith.constant 0 : i32
    %2 = arith.addi %1, %c0_i32 : i32
    %c0 = arith.constant 0 : index
    %3 = arith.index_cast %2 : i32 to index
    %c0_0 = arith.constant 0 : index
    %c0_1 = arith.constant 0 : index
    %4 = vector.load %arg2[%c0, %3, %c0_0, %c0_1] : memref<1x18x18x8xf32, #tpu.memory_space<vmem>>, vector<1x16x16x8xf32>
    %5 = vector.shape_cast %4 : vector<1x16x16x8xf32> to vector<16x16x8xf32>
    %6 = vector.shape_cast %5 : vector<16x16x8xf32> to vector<256x8xf32>
    %c0_2 = arith.constant 0 : index
    %c0_3 = arith.constant 0 : index
    %7 = vector.load %arg6[%c0_2, %c0_3] : memref<256x72xf32, #tpu.memory_space<vmem>>, vector<256x8xf32>
    tpu.vector_store %arg6[%c0_2, %c0_3], %6 {strides = array<i32>} : memref<256x72xf32, #tpu.memory_space<vmem>>, vector<256x8xf32>,
    %c0_i32_4 = arith.constant 0 : i32
    %8 = arith.addi %1, %c0_i32_4 : i32
    %c0_5 = arith.constant 0 : index
    %9 = arith.index_cast %8 : i32 to index
    %c1 = arith.constant 1 : index
    %c0_6 = arith.constant 0 : index
    %10 = vector.load %arg2[%c0_5, %9, %c1, %c0_6] : memref<1x18x18x8xf32, #tpu.memory_space<vmem>>, vector<1x16x16x8xf32>
    %11 = vector.shape_cast %10 : vector<1x16x16x8xf32> to vector<16x16x8xf32>
    %12 = vector.shape_cast %11 : vector<16x16x8xf32> to vector<256x8xf32>
    %c0_7 = arith.constant 0 : index
    %c8 = arith.constant 8 : index
    %13 = vector.load %arg6[%c0_7, %c8] : memref<256x72xf32, #tpu.memory_space<vmem>>, vector<256x8xf32>
    tpu.vector_store %arg6[%c0_7, %c8], %12 {strides = array<i32>} : memref<256x72xf32, #tpu.memory_space<vmem>>, vector<256x8xf32>,
    %c0_i32_8 = arith.constant 0 : i32
    %14 = arith.addi %1, %c0_i32_8 : i32
    %c0_9 = arith.constant 0 : index
    %15 = arith.index_cast %14 : i32 to index
    %c2 = arith.constant 2 : index
    %c0_10 = arith.constant 0 : index
    %16 = vector.load %arg2[%c0_9, %15, %c2, %c0_10] : memref<1x18x18x8xf32, #tpu.memory_space<vmem>>, vector<1x16x16x8xf32>
    %17 = vector.shape_cast %16 : vector<1x16x16x8xf32> to vector<16x16x8xf32>
    %18 = vector.shape_cast %17 : vector<16x16x8xf32> to vector<256x8xf32>
    %c0_11 = arith.constant 0 : index
    %c16 = arith.constant 16 : index
    %19 = vector.load %arg6[%c0_11, %c16] : memref<256x72xf32, #tpu.memory_space<vmem>>, vector<256x8xf32>
    tpu.vector_store %arg6[%c0_11, %c16], %18 {strides = array<i32>} : memref<256x72xf32, #tpu.memory_space<vmem>>, vector<256x8xf32>,
    %c1_i32 = arith.constant 1 : i32
    %20 = arith.addi %1, %c1_i32 : i32
    %c0_12 = arith.constant 0 : index
    %21 = arith.index_cast %20 : i32 to index
    %c0_13 = arith.constant 0 : index
    %c0_14 = arith.constant 0 : index
    %22 = vector.load %arg2[%c0_12, %21, %c0_13, %c0_14] : memref<1x18x18x8xf32, #tpu.memory_space<vmem>>, vector<1x16x16x8xf32>
    %23 = vector.shape_cast %22 : vector<1x16x16x8xf32> to vector<16x16x8xf32>
    %24 = vector.shape_cast %23 : vector<16x16x8xf32> to vector<256x8xf32>
    %c0_15 = arith.constant 0 : index
    %c24 = arith.constant 24 : index
    %25 = vector.load %arg6[%c0_15, %c24] : memref<256x72xf32, #tpu.memory_space<vmem>>, vector<256x8xf32>
    tpu.vector_store %arg6[%c0_15, %c24], %24 {strides = array<i32>} : memref<256x72xf32, #tpu.memory_space<vmem>>, vector<256x8xf32>,
    %c1_i32_16 = arith.constant 1 : i32
    %26 = arith.addi %1, %c1_i32_16 : i32
    %c0_17 = arith.constant 0 : index
    %27 = arith.index_cast %26 : i32 to index
    %c1_18 = arith.constant 1 : index
    %c0_19 = arith.constant 0 : index
    %28 = vector.load %arg2[%c0_17, %27, %c1_18, %c0_19] : memref<1x18x18x8xf32, #tpu.memory_space<vmem>>, vector<1x16x16x8xf32>
    %29 = vector.shape_cast %28 : vector<1x16x16x8xf32> to vector<16x16x8xf32>
    %30 = vector.shape_cast %29 : vector<16x16x8xf32> to vector<256x8xf32>
    %c0_20 = arith.constant 0 : index
    %c32 = arith.constant 32 : index
    %31 = vector.load %arg6[%c0_20, %c32] : memref<256x72xf32, #tpu.memory_space<vmem>>, vector<256x8xf32>
    tpu.vector_store %arg6[%c0_20, %c32], %30 {strides = array<i32>} : memref<256x72xf32, #tpu.memory_space<vmem>>, vector<256x8xf32>,
    %c1_i32_21 = arith.constant 1 : i32
    %32 = arith.addi %1, %c1_i32_21 : i32
    %c0_22 = arith.constant 0 : index
    %33 = arith.index_cast %32 : i32 to index
    %c2_23 = arith.constant 2 : index
    %c0_24 = arith.constant 0 : index
    %34 = vector.load %arg2[%c0_22, %33, %c2_23, %c0_24] : memref<1x18x18x8xf32, #tpu.memory_space<vmem>>, vector<1x16x16x8xf32>
    %35 = vector.shape_cast %34 : vector<1x16x16x8xf32> to vector<16x16x8xf32>
    %36 = vector.shape_cast %35 : vector<16x16x8xf32> to vector<256x8xf32>
    %c0_25 = arith.constant 0 : index
    %c40 = arith.constant 40 : index
    %37 = vector.load %arg6[%c0_25, %c40] : memref<256x72xf32, #tpu.memory_space<vmem>>, vector<256x8xf32>
    tpu.vector_store %arg6[%c0_25, %c40], %36 {strides = array<i32>} : memref<256x72xf32, #tpu.memory_space<vmem>>, vector<256x8xf32>,
    %c2_i32 = arith.constant 2 : i32
    %38 = arith.addi %1, %c2_i32 : i32
    %c0_26 = arith.constant 0 : index
    %39 = arith.index_cast %38 : i32 to index
    %c0_27 = arith.constant 0 : index
    %c0_28 = arith.constant 0 : index
    %40 = vector.load %arg2[%c0_26, %39, %c0_27, %c0_28] : memref<1x18x18x8xf32, #tpu.memory_space<vmem>>, vector<1x16x16x8xf32>
    %41 = vector.shape_cast %40 : vector<1x16x16x8xf32> to vector<16x16x8xf32>
    %42 = vector.shape_cast %41 : vector<16x16x8xf32> to vector<256x8xf32>
    %c0_29 = arith.constant 0 : index
    %c48 = arith.constant 48 : index
    %43 = vector.load %arg6[%c0_29, %c48] : memref<256x72xf32, #tpu.memory_space<vmem>>, vector<256x8xf32>
    tpu.vector_store %arg6[%c0_29, %c48], %42 {strides = array<i32>} : memref<256x72xf32, #tpu.memory_space<vmem>>, vector<256x8xf32>,
    %c2_i32_30 = arith.constant 2 : i32
    %44 = arith.addi %1, %c2_i32_30 : i32
    %c0_31 = arith.constant 0 : index
    %45 = arith.index_cast %44 : i32 to index
    %c1_32 = arith.constant 1 : index
    %c0_33 = arith.constant 0 : index
    %46 = vector.load %arg2[%c0_31, %45, %c1_32, %c0_33] : memref<1x18x18x8xf32, #tpu.memory_space<vmem>>, vector<1x16x16x8xf32>
    %47 = vector.shape_cast %46 : vector<1x16x16x8xf32> to vector<16x16x8xf32>
    %48 = vector.shape_cast %47 : vector<16x16x8xf32> to vector<256x8xf32>
    %c0_34 = arith.constant 0 : index
    %c56 = arith.constant 56 : index
    %49 = vector.load %arg6[%c0_34, %c56] : memref<256x72xf32, #tpu.memory_space<vmem>>, vector<256x8xf32>
    tpu.vector_store %arg6[%c0_34, %c56], %48 {strides = array<i32>} : memref<256x72xf32, #tpu.memory_space<vmem>>, vector<256x8xf32>,
    %c2_i32_35 = arith.constant 2 : i32
    %50 = arith.addi %1, %c2_i32_35 : i32
    %c0_36 = arith.constant 0 : index
    %51 = arith.index_cast %50 : i32 to index
    %c2_37 = arith.constant 2 : index
    %c0_38 = arith.constant 0 : index
    %52 = vector.load %arg2[%c0_36, %51, %c2_37, %c0_38] : memref<1x18x18x8xf32, #tpu.memory_space<vmem>>, vector<1x16x16x8xf32>
    %53 = vector.shape_cast %52 : vector<1x16x16x8xf32> to vector<16x16x8xf32>
    %54 = vector.shape_cast %53 : vector<16x16x8xf32> to vector<256x8xf32>
    %c0_39 = arith.constant 0 : index
    %c64 = arith.constant 64 : index
    %55 = vector.load %arg6[%c0_39, %c64] : memref<256x72xf32, #tpu.memory_space<vmem>>, vector<256x8xf32>
    tpu.vector_store %arg6[%c0_39, %c64], %54 {strides = array<i32>} : memref<256x72xf32, #tpu.memory_space<vmem>>, vector<256x8xf32>,
    %c0_40 = arith.constant 0 : index
    %c0_41 = arith.constant 0 : index
    %56 = vector.load %arg6[%c0_40, %c0_41] : memref<256x72xf32, #tpu.memory_space<vmem>>, vector<256x72xf32>
    %c0_42 = arith.constant 0 : index
    %c0_43 = arith.constant 0 : index
    %57 = vector.load %arg3[%c0_42, %c0_43] : memref<72x128xf32, #tpu.memory_space<vmem>>, vector<72x128xf32>
    %cst = arith.constant dense<0.000000e+00> : vector<256x128xf32>
    %58 = tpu.matmul %56, %57, %cst {dimension_numbers = #tpu.dot_dimension_numbers<[1], [0], [0], [1], [0, 0, 1, 1], [], []>} : vector<256x72xf32>, vector<72x128xf32>, vector<256x128xf32> -> vector<256x128xf32>
    %c0_44 = arith.constant 0 : index
    %c0_45 = arith.constant 0 : index
    %59 = vector.load %arg4[%c0_44, %c0_45] : memref<1x128xf32, #tpu.memory_space<vmem>>, vector<1x128xf32>
    %60 = vector.broadcast %59 : vector<1x128xf32> to vector<256x128xf32>
    %61 = arith.addf %58, %60 : vector<256x128xf32>
    %cst_46 = arith.constant 0.000000e+00 : f32
    %62 = vector.broadcast %cst_46 : f32 to vector<256x128xf32>
    %63 = arith.maximumf %61, %62 : vector<256x128xf32>
    %c0_47 = arith.constant 0 : index
    %c0_48 = arith.constant 0 : index
    %c0_49 = arith.constant 0 : index
    %64 = vector.load %arg5[%c0_47, %c0_48, %c0_49] : memref<1x256x128xf32, #tpu.memory_space<vmem>>, vector<1x256x128xf32>
    %65 = vector.shape_cast %64 : vector<1x256x128xf32> to vector<256x128xf32>
    %66 = vector.shape_cast %63 : vector<256x128xf32> to vector<1x256x128xf32>
    tpu.vector_store %arg5[%c0_47, %c0_48, %c0_49], %66 {strides = array<i32>} : memref<1x256x128xf32, #tpu.memory_space<vmem>>, vector<1x256x128xf32>,
    return
  }
  func.func @transform_0(%arg0: i32, %arg1: i32) -> (i32, i32, i32, i32) {
    %c0_i32 = arith.constant 0 : i32
    %c0_i32_0 = arith.constant 0 : i32
    %c0_i32_1 = arith.constant 0 : i32
    %c0_i32_2 = arith.constant 0 : i32
    return %arg0, %c0_i32, %c0_i32_0, %c0_i32_1 : i32, i32, i32, i32
  }
  func.func @transform_1(%arg0: i32, %arg1: i32) -> (i32, i32) {
    %c0_i32 = arith.constant 0 : i32
    %c0_i32_0 = arith.constant 0 : i32
    %c0_i32_1 = arith.constant 0 : i32
    return %c0_i32, %c0_i32_0 : i32, i32
  }
  func.func @transform_2(%arg0: i32, %arg1: i32) -> (i32, i32) {
    %c0_i32 = arith.constant 0 : i32
    %c0_i32_0 = arith.constant 0 : i32
    %c0_i32_1 = arith.constant 0 : i32
    return %c0_i32, %c0_i32_0 : i32, i32
  }
  func.func @transform_3(%arg0: i32, %arg1: i32) -> (i32, i32, i32) {
    %c0_i32 = arith.constant 0 : i32
    %c0_i32_0 = arith.constant 0 : i32
    return %arg0, %arg1, %c0_i32 : i32, i32, i32
  }
}

module attributes {stable_mosaic.version = 11 : i64} {
  func.func @_conv_bias_relu_kernel(%arg0: i32, %arg1: i32, %arg2: memref<1x18x18x8xf32, #tpu.memory_space<vmem>>, %arg3: memref<72x128xf32, #tpu.memory_space<vmem>>, %arg4: memref<1x128xf32, #tpu.memory_space<vmem>>, %arg5: memref<1x256x128xf32, #tpu.memory_space<vmem>>, %arg6: memref<256x72xf32, #tpu.memory_space<vmem>>) attributes {dimension_semantics = [#tpu.dimension_semantics<parallel>, #tpu.dimension_semantics<parallel>], iteration_bounds = array<i64: 2, 1>, scalar_prefetch = 0 : i64, scratch_operands = 1 : i64, tpu.core_type = #tpu.core_type<tc>, window_params = [{transform_indices = @transform_0, window_bounds = array<i64: 1, 18, 18, 8>}, {pipeline_mode = #tpu.pipeline_mode<synchronous>, transform_indices = @transform_1, window_bounds = array<i64: 72, 128>}, {pipeline_mode = #tpu.pipeline_mode<synchronous>, transform_indices = @transform_2, window_bounds = array<i64: 1, 128>}, {transform_indices = @transform_3, window_bounds = array<i64: 1, 256, 128>}]} {
    %c16_i32 = arith.constant 16 : i32
    %0 = arith.muli %arg1, %c16_i32 : i32
    %1 = tpu.assume_multiple %0, 16 : i32
    %c0_i32 = arith.constant 0 : i32
    %2 = arith.addi %1, %c0_i32 : i32
    %c0 = arith.constant 0 : index
    %3 = arith.index_cast %2 : i32 to index
    %c0_0 = arith.constant 0 : index
    %c0_1 = arith.constant 0 : index
    %4 = vector.load %arg2[%c0, %3, %c0_0, %c0_1] : memref<1x18x18x8xf32, #tpu.memory_space<vmem>>, vector<1x16x16x8xf32>
    %5 = vector.shape_cast %4 : vector<1x16x16x8xf32> to vector<16x16x8xf32>
    %6 = vector.shape_cast %5 : vector<16x16x8xf32> to vector<256x8xf32>
    %c0_2 = arith.constant 0 : index
    %c0_3 = arith.constant 0 : index
    %7 = vector.load %arg6[%c0_2, %c0_3] : memref<256x72xf32, #tpu.memory_space<vmem>>, vector<256x8xf32>
    tpu.vector_store %arg6[%c0_2, %c0_3], %6 {strides = array<i32>} : memref<256x72xf32, #tpu.memory_space<vmem>>, vector<256x8xf32>,
    %c0_i32_4 = arith.constant 0 : i32
    %8 = arith.addi %1, %c0_i32_4 : i32
    %c0_5 = arith.constant 0 : index
    %9 = arith.index_cast %8 : i32 to index
    %c1 = arith.constant 1 : index
    %c0_6 = arith.constant 0 : index
    %10 = vector.load %arg2[%c0_5, %9, %c1, %c0_6] : memref<1x18x18x8xf32, #tpu.memory_space<vmem>>, vector<1x16x16x8xf32>
    %11 = vector.shape_cast %10 : vector<1x16x16x8xf32> to vector<16x16x8xf32>
    %12 = vector.shape_cast %11 : vector<16x16x8xf32> to vector<256x8xf32>
    %c0_7 = arith.constant 0 : index
    %c8 = arith.constant 8 : index
    %13 = vector.load %arg6[%c0_7, %c8] : memref<256x72xf32, #tpu.memory_space<vmem>>, vector<256x8xf32>
    tpu.vector_store %arg6[%c0_7, %c8], %12 {strides = array<i32>} : memref<256x72xf32, #tpu.memory_space<vmem>>, vector<256x8xf32>,
    %c0_i32_8 = arith.constant 0 : i32
    %14 = arith.addi %1, %c0_i32_8 : i32
    %c0_9 = arith.constant 0 : index
    %15 = arith.index_cast %14 : i32 to index
    %c2 = arith.constant 2 : index
    %c0_10 = arith.constant 0 : index
    %16 = vector.load %arg2[%c0_9, %15, %c2, %c0_10] : memref<1x18x18x8xf32, #tpu.memory_space<vmem>>, vector<1x16x16x8xf32>
    %17 = vector.shape_cast %16 : vector<1x16x16x8xf32> to vector<16x16x8xf32>
    %18 = vector.shape_cast %17 : vector<16x16x8xf32> to vector<256x8xf32>
    %c0_11 = arith.constant 0 : index
    %c16 = arith.constant 16 : index
    %19 = vector.load %arg6[%c0_11, %c16] : memref<256x72xf32, #tpu.memory_space<vmem>>, vector<256x8xf32>
    tpu.vector_store %arg6[%c0_11, %c16], %18 {strides = array<i32>} : memref<256x72xf32, #tpu.memory_space<vmem>>, vector<256x8xf32>,
    %c1_i32 = arith.constant 1 : i32
    %20 = arith.addi %1, %c1_i32 : i32
    %c0_12 = arith.constant 0 : index
    %21 = arith.index_cast %20 : i32 to index
    %c0_13 = arith.constant 0 : index
    %c0_14 = arith.constant 0 : index
    %22 = vector.load %arg2[%c0_12, %21, %c0_13, %c0_14] : memref<1x18x18x8xf32, #tpu.memory_space<vmem>>, vector<1x16x16x8xf32>
    %23 = vector.shape_cast %22 : vector<1x16x16x8xf32> to vector<16x16x8xf32>
    %24 = vector.shape_cast %23 : vector<16x16x8xf32> to vector<256x8xf32>
    %c0_15 = arith.constant 0 : index
    %c24 = arith.constant 24 : index
    %25 = vector.load %arg6[%c0_15, %c24] : memref<256x72xf32, #tpu.memory_space<vmem>>, vector<256x8xf32>
    tpu.vector_store %arg6[%c0_15, %c24], %24 {strides = array<i32>} : memref<256x72xf32, #tpu.memory_space<vmem>>, vector<256x8xf32>,
    %c1_i32_16 = arith.constant 1 : i32
    %26 = arith.addi %1, %c1_i32_16 : i32
    %c0_17 = arith.constant 0 : index
    %27 = arith.index_cast %26 : i32 to index
    %c1_18 = arith.constant 1 : index
    %c0_19 = arith.constant 0 : index
    %28 = vector.load %arg2[%c0_17, %27, %c1_18, %c0_19] : memref<1x18x18x8xf32, #tpu.memory_space<vmem>>, vector<1x16x16x8xf32>
    %29 = vector.shape_cast %28 : vector<1x16x16x8xf32> to vector<16x16x8xf32>
    %30 = vector.shape_cast %29 : vector<16x16x8xf32> to vector<256x8xf32>
    %c0_20 = arith.constant 0 : index
    %c32 = arith.constant 32 : index
    %31 = vector.load %arg6[%c0_20, %c32] : memref<256x72xf32, #tpu.memory_space<vmem>>, vector<256x8xf32>
    tpu.vector_store %arg6[%c0_20, %c32], %30 {strides = array<i32>} : memref<256x72xf32, #tpu.memory_space<vmem>>, vector<256x8xf32>,
    %c1_i32_21 = arith.constant 1 : i32
    %32 = arith.addi %1, %c1_i32_21 : i32
    %c0_22 = arith.constant 0 : index
    %33 = arith.index_cast %32 : i32 to index
    %c2_23 = arith.constant 2 : index
    %c0_24 = arith.constant 0 : index
    %34 = vector.load %arg2[%c0_22, %33, %c2_23, %c0_24] : memref<1x18x18x8xf32, #tpu.memory_space<vmem>>, vector<1x16x16x8xf32>
    %35 = vector.shape_cast %34 : vector<1x16x16x8xf32> to vector<16x16x8xf32>
    %36 = vector.shape_cast %35 : vector<16x16x8xf32> to vector<256x8xf32>
    %c0_25 = arith.constant 0 : index
    %c40 = arith.constant 40 : index
    %37 = vector.load %arg6[%c0_25, %c40] : memref<256x72xf32, #tpu.memory_space<vmem>>, vector<256x8xf32>
    tpu.vector_store %arg6[%c0_25, %c40], %36 {strides = array<i32>} : memref<256x72xf32, #tpu.memory_space<vmem>>, vector<256x8xf32>,
    %c2_i32 = arith.constant 2 : i32
    %38 = arith.addi %1, %c2_i32 : i32
    %c0_26 = arith.constant 0 : index
    %39 = arith.index_cast %38 : i32 to index
    %c0_27 = arith.constant 0 : index
    %c0_28 = arith.constant 0 : index
    %40 = vector.load %arg2[%c0_26, %39, %c0_27, %c0_28] : memref<1x18x18x8xf32, #tpu.memory_space<vmem>>, vector<1x16x16x8xf32>
    %41 = vector.shape_cast %40 : vector<1x16x16x8xf32> to vector<16x16x8xf32>
    %42 = vector.shape_cast %41 : vector<16x16x8xf32> to vector<256x8xf32>
    %c0_29 = arith.constant 0 : index
    %c48 = arith.constant 48 : index
    %43 = vector.load %arg6[%c0_29, %c48] : memref<256x72xf32, #tpu.memory_space<vmem>>, vector<256x8xf32>
    tpu.vector_store %arg6[%c0_29, %c48], %42 {strides = array<i32>} : memref<256x72xf32, #tpu.memory_space<vmem>>, vector<256x8xf32>,
    %c2_i32_30 = arith.constant 2 : i32
    %44 = arith.addi %1, %c2_i32_30 : i32
    %c0_31 = arith.constant 0 : index
    %45 = arith.index_cast %44 : i32 to index
    %c1_32 = arith.constant 1 : index
    %c0_33 = arith.constant 0 : index
    %46 = vector.load %arg2[%c0_31, %45, %c1_32, %c0_33] : memref<1x18x18x8xf32, #tpu.memory_space<vmem>>, vector<1x16x16x8xf32>
    %47 = vector.shape_cast %46 : vector<1x16x16x8xf32> to vector<16x16x8xf32>
    %48 = vector.shape_cast %47 : vector<16x16x8xf32> to vector<256x8xf32>
    %c0_34 = arith.constant 0 : index
    %c56 = arith.constant 56 : index
    %49 = vector.load %arg6[%c0_34, %c56] : memref<256x72xf32, #tpu.memory_space<vmem>>, vector<256x8xf32>
    tpu.vector_store %arg6[%c0_34, %c56], %48 {strides = array<i32>} : memref<256x72xf32, #tpu.memory_space<vmem>>, vector<256x8xf32>,
    %c2_i32_35 = arith.constant 2 : i32
    %50 = arith.addi %1, %c2_i32_35 : i32
    %c0_36 = arith.constant 0 : index
    %51 = arith.index_cast %50 : i32 to index
    %c2_37 = arith.constant 2 : index
    %c0_38 = arith.constant 0 : index
    %52 = vector.load %arg2[%c0_36, %51, %c2_37, %c0_38] : memref<1x18x18x8xf32, #tpu.memory_space<vmem>>, vector<1x16x16x8xf32>
    %53 = vector.shape_cast %52 : vector<1x16x16x8xf32> to vector<16x16x8xf32>
    %54 = vector.shape_cast %53 : vector<16x16x8xf32> to vector<256x8xf32>
    %c0_39 = arith.constant 0 : index
    %c64 = arith.constant 64 : index
    %55 = vector.load %arg6[%c0_39, %c64] : memref<256x72xf32, #tpu.memory_space<vmem>>, vector<256x8xf32>
    tpu.vector_store %arg6[%c0_39, %c64], %54 {strides = array<i32>} : memref<256x72xf32, #tpu.memory_space<vmem>>, vector<256x8xf32>,
    %c0_40 = arith.constant 0 : index
    %c0_41 = arith.constant 0 : index
    %56 = vector.load %arg6[%c0_40, %c0_41] : memref<256x72xf32, #tpu.memory_space<vmem>>, vector<256x72xf32>
    %c0_42 = arith.constant 0 : index
    %c0_43 = arith.constant 0 : index
    %57 = vector.load %arg3[%c0_42, %c0_43] : memref<72x128xf32, #tpu.memory_space<vmem>>, vector<72x128xf32>
    %cst = arith.constant dense<0.000000e+00> : vector<256x128xf32>
    %58 = tpu.matmul %56, %57, %cst {dimension_numbers = #tpu.dot_dimension_numbers<[1], [0], [0], [1], [0, 0, 1, 1], [], []>} : vector<256x72xf32>, vector<72x128xf32>, vector<256x128xf32> -> vector<256x128xf32>
    %c0_44 = arith.constant 0 : index
    %c0_45 = arith.constant 0 : index
    %59 = vector.load %arg4[%c0_44, %c0_45] : memref<1x128xf32, #tpu.memory_space<vmem>>, vector<1x128xf32>
    %60 = vector.broadcast %59 : vector<1x128xf32> to vector<256x128xf32>
    %61 = arith.addf %58, %60 : vector<256x128xf32>
    %cst_46 = arith.constant 0.000000e+00 : f32
    %62 = vector.broadcast %cst_46 : f32 to vector<256x128xf32>
    %63 = arith.maximumf %61, %62 : vector<256x128xf32>
    %c0_47 = arith.constant 0 : index
    %c0_48 = arith.constant 0 : index
    %c0_49 = arith.constant 0 : index
    %64 = vector.load %arg5[%c0_47, %c0_48, %c0_49] : memref<1x256x128xf32, #tpu.memory_space<vmem>>, vector<1x256x128xf32>
    %65 = vector.shape_cast %64 : vector<1x256x128xf32> to vector<256x128xf32>
    %66 = vector.shape_cast %63 : vector<256x128xf32> to vector<1x256x128xf32>
    tpu.vector_store %arg5[%c0_47, %c0_48, %c0_49], %66 {strides = array<i32>} : memref<1x256x128xf32, #tpu.memory_space<vmem>>, vector<1x256x128xf32>,
    return
  }
  func.func @transform_0(%arg0: i32, %arg1: i32) -> (i32, i32, i32, i32) {
    %c0_i32 = arith.constant 0 : i32
    %c0_i32_0 = arith.constant 0 : i32
    %c0_i32_1 = arith.constant 0 : i32
    %c0_i32_2 = arith.constant 0 : i32
    return %arg0, %c0_i32, %c0_i32_0, %c0_i32_1 : i32, i32, i32, i32
  }
  func.func @transform_1(%arg0: i32, %arg1: i32) -> (i32, i32) {
    %c0_i32 = arith.constant 0 : i32
    %c0_i32_0 = arith.constant 0 : i32
    %c0_i32_1 = arith.constant 0 : i32
    return %c0_i32, %c0_i32_0 : i32, i32
  }
  func.func @transform_2(%arg0: i32, %arg1: i32) -> (i32, i32) {
    %c0_i32 = arith.constant 0 : i32
    %c0_i32_0 = arith.constant 0 : i32
    %c0_i32_1 = arith.constant 0 : i32
    return %c0_i32, %c0_i32_0 : i32, i32
  }
  func.func @transform_3(%arg0: i32, %arg1: i32) -> (i32, i32, i32) {
    %c0_i32 = arith.constant 0 : i32
    %c0_i32_0 = arith.constant 0 : i32
    return %arg0, %arg1, %c0_i32 : i32, i32, i32
  }
}

</mosaic_0001>

<llo_original>
// kernel: tpu_custom_call.1
$region0: #{tpu_custom_call.1}
  #allocation0 [shape = 'u32[]', space=smem, size = 0x4, offset = 0x4, fixed_abs, tag = 'smem constant byte address 0x4 - core index']
  #allocation1 [shape = 'u32[144,128]{1,0:T(1,128)}', space=vmem, size = 0x12000, scoped, tag = 'internal scratch']
  #allocation2 [shape = 'f32[256,72]{1,0:T(8,128)}', space=vmem, size = 0x20000, scoped, tag = 'scratch operand']
  %s0 = inlined_call_operand.vmem [shape: f32[2,18,18,8], index: 0, kind: input, shape index: {}]
  %s1 = inlined_call_operand.vmem [shape: f32[72,128], index: 1, kind: input, shape index: {}]
  %s2 = inlined_call_operand.vmem [shape: f32[1,128], index: 2, kind: input, shape index: {}]
  %s3 = inlined_call_operand.hbm [shape: f32[2,256,128], index: 3, kind: output, shape index: {}]
  %s4 = sld [smem:[#allocation0]]
  $region45: #{tpu_custom_call.1} parent=0
    _
  %s6 = ssub.s32 1, %s4
  %s7 = scalar_select 0, %s6, %s4
  $region1: #{tpu_custom_call.1} parent=0
    #allocation3 [shape = 'u8[262144]{0}', space=vmem, size = 0x40000, scoped, tag = 'output window, operand 0']
    #allocation4 [shape = 's32[2]{0}', space=sflag, size = 0x8, scoped, tag = 'scoped memory for tpu_custom_call.1']
    %8 = vsyncpa [#allocation4], 0
    %s9 = scalar_lea.sflag [#allocation4], 1
    %10 = vsyncpa %s9, 0
    loop: start=0, step=1, limit=4
    $region2: #{tpu_custom_call.1} parent=1 // loop_pre_header
      _
    $region3: #{tpu_custom_call.1} parent=1 // loop_header
      %s12 = sphi 0, %s16
      %p13 = scmp.ge.s32.totalorder %s12, 4
      %s19 = sphi 0, %s31
      %s20 = sphi 0, %s27
      %s21 = sphi 0, %s19
      %s22 = sphi 0, %s20
      %s23 = sphi 0, %s21
      %s24 = sphi 0, %s22
      %s34 = sphi 0, %s36
      %s37 = sphi 0, %s34
      %s38 = sphi 0, %s37
      %s54 = sphi 0, %s38
      %s58 = sphi 0, %s58
      %s60 = sphi 0, %s58
      %s61 = sphi 0, %s60
      %s75 = sphi 0, %s61
      %s79 = sphi 0, %s79
      %s81 = sphi 0, %s79
      %s82 = sphi 0, %s81
      %s96 = sphi 0, %s82
      %s104 = sphi 0, %s106
      %s107 = sphi 0, %s104
      %s108 = sphi 0, %s107
      %s124 = sphi 0, %s108
    $region4: #{tpu_custom_call.1} parent=1 // loop_header_branch
      %15 = sbr.rel (%p13) target = $region8
    $region5: #{tpu_custom_call.1} parent=1 // loop_body
      %s17 = ssub.s32 %s12, 1
      %s18 = ssub.s32 %s12, 2
      %s25 = sadd.s32 1, %s20
      %p26 = scmp.ge.s32.totalorder %s25, 1
      %s27 = scalar_select %p26, 0, %s25
      %s28 = sadd.s32 1, %s19
      %s29 = scalar_select %p26, %s28, %s19
      %p30 = scmp.ge.s32.totalorder %s29, 2
      %s31 = scalar_select %p30, 0, %s29
      %s32 = ssub.s32 %s19, %s31
      %p33 = scmp.eq.s32.totalorder %s32, 0
      %s35 = sadd.s32 %s34, 1
      %s36 = scalar_select %p33, %s34, %s35
      %p39 = pneg %p33
      %p40 = scmp.eq.s32.totalorder %s12, 1
      %p41 = por %p39, %p40
      %p42 = scmp.ne.s32.totalorder %s34, %s37
      %p43 = scmp.eq.s32.totalorder %s12, 0
      %p44 = por %p42, %p43
      %p45 = scmp.ne.s32.totalorder %s34, %s37
      %p46 = scmp.eq.s32.totalorder %s17, 1
      %p47 = por %p45, %p46
      %p48 = scmp.ne.s32.totalorder %s37, %s38
      %p49 = scmp.eq.s32.totalorder %s17, 0
      %p50 = por %p48, %p49
      %p51 = scmp.ne.s32.totalorder %s37, %s38
      %p52 = scmp.eq.s32.totalorder %s18, 1
      %p53 = por %p51, %p52
      %p55 = scmp.ne.s32.totalorder %s38, %s54
      %p56 = scmp.eq.s32.totalorder %s18, 0
      %p57 = por %p55, %p56
      %s59 = sadd.s32 %s58, 1
      %p62 = scmp.eq.s32.totalorder %s12, 1
      %p63 = scmp.ne.s32.totalorder %s58, %s60
      %p64 = scmp.eq.s32.totalorder %s12, 0
      %p65 = por %p63, %p64
      %p66 = scmp.ne.s32.totalorder %s58, %s60
      %p67 = scmp.eq.s32.totalorder %s17, 1
      %p68 = por %p66, %p67
      %p69 = scmp.ne.s32.totalorder %s60, %s61
      %p70 = scmp.eq.s32.totalorder %s17, 0
      %p71 = por %p69, %p70
      %p72 = scmp.ne.s32.totalorder %s60, %s61
      %p73 = scmp.eq.s32.totalorder %s18, 1
      %p74 = por %p72, %p73
      %p76 = scmp.ne.s32.totalorder %s61, %s75
      %p77 = scmp.eq.s32.totalorder %s18, 0
      %p78 = por %p76, %p77
      %s80 = sadd.s32 %s79, 1
      %p83 = scmp.eq.s32.totalorder %s12, 1
      %p84 = scmp.ne.s32.totalorder %s79, %s81
      %p85 = scmp.eq.s32.totalorder %s12, 0
      %p86 = por %p84, %p85
      %p87 = scmp.ne.s32.totalorder %s79, %s81
      %p88 = scmp.eq.s32.totalorder %s17, 1
      %p89 = por %p87, %p88
      %p90 = scmp.ne.s32.totalorder %s81, %s82
      %p91 = scmp.eq.s32.totalorder %s17, 0
      %p92 = por %p90, %p91
      %p93 = scmp.ne.s32.totalorder %s81, %s82
      %p94 = scmp.eq.s32.totalorder %s18, 1
      %p95 = por %p93, %p94
      %p97 = scmp.ne.s32.totalorder %s82, %s96
      %p98 = scmp.eq.s32.totalorder %s18, 0
      %p99 = por %p97, %p98
      %s100 = ssub.s32 %s19, %s31
      %s101 = ssub.s32 %s20, %s27
      %s102 = sor.u32 %s100, %s101
      %p103 = scmp.eq.s32.totalorder %s102, 0
      %s105 = sadd.s32 %s104, 1
      %s106 = scalar_select %p103, %s104, %s105
      %p109 = pneg %p103
      %p110 = scmp.eq.s32.totalorder %s12, 1
      %p111 = por %p109, %p110
      %p112 = scmp.ne.s32.totalorder %s104, %s107
      %p113 = scmp.eq.s32.totalorder %s12, 0
      %p114 = por %p112, %p113
      %p115 = scmp.ne.s32.totalorder %s104, %s107
      %p116 = scmp.eq.s32.totalorder %s17, 1
      %p117 = por %p115, %p116
      %p118 = scmp.ne.s32.totalorder %s107, %s108
      %p119 = scmp.eq.s32.totalorder %s17, 0
      %p120 = por %p118, %p119
      %p121 = scmp.ne.s32.totalorder %s107, %s108
      %p122 = scmp.eq.s32.totalorder %s18, 1
      %p123 = por %p121, %p122
      %p125 = scmp.ne.s32.totalorder %s108, %s124
      %p126 = scmp.eq.s32.totalorder %s18, 0
      %p127 = por %p125, %p126
      %p128 = scmp.le.s32.totalorder 1, %s12
      %p129 = scmp.lt.s32.totalorder %s12, 3
      %p130 = pnand %p128, %p129
      %p131 = pneg %p130
      // Predicated region
      $region9: #{tpu_custom_call.1} parent=5 // pred_check
        _
      $region10: #{tpu_custom_call.1} parent=5 // pred_check_branch
        %133 = sbr.rel (%p130) target = $region12
      $region11: #{tpu_custom_call.1} parent=5 // pred_region
        %s134 = ssub.s32 %s12, 1
        // Predicated region
        $region13: #{tpu_custom_call.1} parent=11 // pred_check
          %p135 = pneg %p50
        $region14: #{tpu_custom_call.1} parent=11 // pred_check_branch
          %137 = sbr.rel (%p135) target = $region16
        $region15: #{tpu_custom_call.1} parent=11 // pred_region
          %p138 = scmp.lt.s32.totalorder %s21, 1
          %s139 = scalar_select %p138, %s21, 1
          %s140 = smul.addr %s139, 54
          %s141 = smul.addr %s140, 8
          %s142 = scalar_lea.vmem %s0, %s141
        $region16: #{tpu_custom_call.1} parent=11 // pred_fallthru
          _
        // Predicated region
        $region17: #{tpu_custom_call.1} parent=11 // pred_check
          %p143 = pneg %p71
        $region18: #{tpu_custom_call.1} parent=11 // pred_check_branch
          %145 = sbr.rel (%p143) target = $region20
        $region19: #{tpu_custom_call.1} parent=11 // pred_region
          _
        $region20: #{tpu_custom_call.1} parent=11 // pred_fallthru
          _
        // Predicated region
        $region21: #{tpu_custom_call.1} parent=11 // pred_check
          %p146 = pneg %p92
        $region22: #{tpu_custom_call.1} parent=11 // pred_check_branch
          %148 = sbr.rel (%p146) target = $region24
        $region23: #{tpu_custom_call.1} parent=11 // pred_region
          _
        $region24: #{tpu_custom_call.1} parent=11 // pred_fallthru
          _
      $region12: #{tpu_custom_call.1} parent=5 // pred_fallthru
        _
      %p149 = scmp.lt.s32.totalorder %s12, 2
      // Predicated region
      $region25: #{tpu_custom_call.1} parent=5 // pred_check
        %p150 = pneg %p149
      $region26: #{tpu_custom_call.1} parent=5 // pred_check_branch
        %152 = sbr.rel (%p150) target = $region28
      $region27: #{tpu_custom_call.1} parent=5 // pred_region
        _
      $region28: #{tpu_custom_call.1} parent=5 // pred_fallthru
        _
      %p153 = scmp.le.s32.totalorder 1, %s12
      %p154 = scmp.lt.s32.totalorder %s12, 3
      %p155 = pnand %p153, %p154
      %p156 = pneg %p155
      // Predicated region
      $region29: #{tpu_custom_call.1} parent=5 // pred_check
        _
      $region30: #{tpu_custom_call.1} parent=5 // pred_check_branch
        %158 = sbr.rel (%p155) target = $region32
      $region31: #{tpu_custom_call.1} parent=5 // pred_region
        %s159 = ssub.s32 %s12, 1
        %p160 = scmp.lt.s32.totalorder %s21, 1
        %s161 = scalar_select %p160, %s21, 1
        %s162 = smul.addr %s161, 54
        %s163 = smul.addr %s162, 8
        %s164 = scalar_lea.vmem %s0, %s163
        %p165 = pneg %p50
        %p166 = pneg %p47
        %p167 = pneg %p71
        %p168 = pneg %p68
        %p169 = pneg %p92
        %p170 = pneg %p89
        %p171 = pneg %p120
        %p172 = pneg %p117
        %s173 = sand.u32 %s107, 1
        %s174 = scalar_lea.sflag [#allocation4], %s173
        %s175 = sand.u32 %s107, 1
        %s176 = smul.addr %s175, 256
        %s177 = scalar_lea.vmem [#allocation3], %s176
        %p178 = scmp.lt.s32.totalorder %s21, 1
        %s179 = scalar_select %p178, %s21, 1
        %s180 = smul.addr %s179, 54
        %s181 = smul.addr %s180, 8
        %s182 = scalar_lea.vmem %s0, %s181
        %s183 = smul.u32 32, %s22
        %s184 = smul.u32 %s22, 16
        %s185 = smul.u32 %s184, 24
        %s186 = scalar_lea.vmem %s182, %s185
        %v187 = vld [vmem:[%s186] sm:$0xff]
        %v188 = vld [vmem:[%s186 + $0x8] sm:$0xff]
        %v189 = vld [vmem:[%s186 + $0x18] sm:$0xff]
        %v190 = vld [vmem:[%s186 + $0x20] sm:$0xff]
        %v191 = vld [vmem:[%s186 + $0x30] sm:$0xff]
        %v192 = vld [vmem:[%s186 + $0x38] sm:$0xff]
        %v193 = vld [vmem:[%s186 + $0x48] sm:$0xff]
        %v194 = vld [vmem:[%s186 + $0x50] sm:$0xff]
        %v195 = vld [vmem:[%s186 + $0x60] sm:$0xff]
        %v196 = vld [vmem:[%s186 + $0x68] sm:$0xff]
        %v197 = vld [vmem:[%s186 + $0x78] sm:$0xff]
        %v198 = vld [vmem:[%s186 + $0x80] sm:$0xff]
        %v199 = vld [vmem:[%s186 + $0x90] sm:$0xff]
        %v200 = vld [vmem:[%s186 + $0x98] sm:$0xff]
        %v201 = vld [vmem:[%s186 + $0xa8] sm:$0xff]
        %v202 = vld [vmem:[%s186 + $0xb0] sm:$0xff]
        %v203 = vld [vmem:[%s186 + $0xc0] sm:$0xff]
        %v204 = vld [vmem:[%s186 + $0xc8] sm:$0xff]
        %v205 = vld [vmem:[%s186 + $0xd8] sm:$0xff]
        %v206 = vld [vmem:[%s186 + $0xe0] sm:$0xff]
        %v207 = vld [vmem:[%s186 + $0xf0] sm:$0xff]
        %v208 = vld [vmem:[%s186 + $0xf8] sm:$0xff]
        %v209 = vld [vmem:[%s186 + $0x108] sm:$0xff]
        %v210 = vld [vmem:[%s186 + $0x110] sm:$0xff]
        %v211 = vld [vmem:[%s186 + $0x120] sm:$0xff]
        %v212 = vld [vmem:[%s186 + $0x128] sm:$0xff]
        %v213 = vld [vmem:[%s186 + $0x138] sm:$0xff]
        %v214 = vld [vmem:[%s186 + $0x140] sm:$0xff]
        %v215 = vld [vmem:[%s186 + $0x150] sm:$0xff]
        %v216 = vld [vmem:[%s186 + $0x158] sm:$0xff]
        %v217 = vld [vmem:[%s186 + $0x168] sm:$0xff]
        %v218 = vld [vmem:[%s186 + $0x170] sm:$0xff]
        %vm219 = vcmask 64512
        %220 = vst.msk [vmem:[#allocation2] sm:$0xff] %vm219, %v187
        %221 = vst.msk [vmem:[#allocation2 + $0x8] sm:$0xff] %vm219, %v188
        %222 = vst.msk [vmem:[#allocation2 + $0x10] sm:$0xff] %vm219, %v189
        %223 = vst.msk [vmem:[#allocation2 + $0x18] sm:$0xff] %vm219, %v190
        %224 = vst.msk [vmem:[#allocation2 + $0x20] sm:$0xff] %vm219, %v191
        %225 = vst.msk [vmem:[#allocation2 + $0x28] sm:$0xff] %vm219, %v192
        %226 = vst.msk [vmem:[#allocation2 + $0x30] sm:$0xff] %vm219, %v193
        %227 = vst.msk [vmem:[#allocation2 + $0x38] sm:$0xff] %vm219, %v194
        %228 = vst.msk [vmem:[#allocation2 + $0x40] sm:$0xff] %vm219, %v195
        %229 = vst.msk [vmem:[#allocation2 + $0x48] sm:$0xff] %vm219, %v196
        %230 = vst.msk [vmem:[#allocation2 + $0x50] sm:$0xff] %vm219, %v197
        %231 = vst.msk [vmem:[#allocation2 + $0x58] sm:$0xff] %vm219, %v198
        %232 = vst.msk [vmem:[#allocation2 + $0x60] sm:$0xff] %vm219, %v199
        %233 = vst.msk [vmem:[#allocation2 + $0x68] sm:$0xff] %vm219, %v200
        %234 = vst.msk [vmem:[#allocation2 + $0x70] sm:$0xff] %vm219, %v201
        %235 = vst.msk [vmem:[#allocation2 + $0x78] sm:$0xff] %vm219, %v202
        %236 = vst.msk [vmem:[#allocation2 + $0x80] sm:$0xff] %vm219, %v203
        %237 = vst.msk [vmem:[#allocation2 + $0x88] sm:$0xff] %vm219, %v204
        %238 = vst.msk [vmem:[#allocation2 + $0x90] sm:$0xff] %vm219, %v205
        %239 = vst.msk [vmem:[#allocation2 + $0x98] sm:$0xff] %vm219, %v206
        %240 = vst.msk [vmem:[#allocation2 + $0xa0] sm:$0xff] %vm219, %v207
        %241 = vst.msk [vmem:[#allocation2 + $0xa8] sm:$0xff] %vm219, %v208
        %242 = vst.msk [vmem:[#allocation2 + $0xb0] sm:$0xff] %vm219, %v209
        %243 = vst.msk [vmem:[#allocation2 + $0xb8] sm:$0xff] %vm219, %v210
        %244 = vst.msk [vmem:[#allocation2 + $0xc0] sm:$0xff] %vm219, %v211
        %245 = vst.msk [vmem:[#allocation2 + $0xc8] sm:$0xff] %vm219, %v212
        %246 = vst.msk [vmem:[#allocation2 + $0xd0] sm:$0xff] %vm219, %v213
        %247 = vst.msk [vmem:[#allocation2 + $0xd8] sm:$0xff] %vm219, %v214
        %248 = vst.msk [vmem:[#allocation2 + $0xe0] sm:$0xff] %vm219, %v215
        %249 = vst.msk [vmem:[#allocation2 + $0xe8] sm:$0xff] %vm219, %v216
        %250 = vst.msk [vmem:[#allocation2 + $0xf0] sm:$0xff] %vm219, %v217
        %251 = vst.msk [vmem:[#allocation2 + $0xf8] sm:$0xff] %vm219, %v218
        %v252 = vld [vmem:[%s186 + $0x1] sm:$0xff]
        %v253 = vld [vmem:[%s186 + $0x9] sm:$0xff]
        %v254 = vld [vmem:[%s186 + $0x19] sm:$0xff]
        %v255 = vld [vmem:[%s186 + $0x21] sm:$0xff]
        %v256 = vld [vmem:[%s186 + $0x31] sm:$0xff]
        %v257 = vld [vmem:[%s186 + $0x39] sm:$0xff]
        %v258 = vld [vmem:[%s186 + $0x49] sm:$0xff]
        %v259 = vld [vmem:[%s186 + $0x51] sm:$0xff]
        %v260 = vld [vmem:[%s186 + $0x61] sm:$0xff]
        %v261 = vld [vmem:[%s186 + $0x69] sm:$0xff]
        %v262 = vld [vmem:[%s186 + $0x79] sm:$0xff]
        %v263 = vld [vmem:[%s186 + $0x81] sm:$0xff]
        %v264 = vld [vmem:[%s186 + $0x91] sm:$0xff]
        %v265 = vld [vmem:[%s186 + $0x99] sm:$0xff]
        %v266 = vld [vmem:[%s186 + $0xa9] sm:$0xff]
        %v267 = vld [vmem:[%s186 + $0xb1] sm:$0xff]
        %v268 = vld [vmem:[%s186 + $0xc1] sm:$0xff]
        %v269 = vld [vmem:[%s186 + $0xc9] sm:$0xff]
        %v270 = vld [vmem:[%s186 + $0xd9] sm:$0xff]
        %v271 = vld [vmem:[%s186 + $0xe1] sm:$0xff]
        %v272 = vld [vmem:[%s186 + $0xf1] sm:$0xff]
        %v273 = vld [vmem:[%s186 + $0xf9] sm:$0xff]
        %v274 = vld [vmem:[%s186 + $0x109] sm:$0xff]
        %v275 = vld [vmem:[%s186 + $0x111] sm:$0xff]
        %v276 = vld [vmem:[%s186 + $0x121] sm:$0xff]
        %v277 = vld [vmem:[%s186 + $0x129] sm:$0xff]
        %v278 = vld [vmem:[%s186 + $0x139] sm:$0xff]
        %v279 = vld [vmem:[%s186 + $0x141] sm:$0xff]
        %v280 = vld [vmem:[%s186 + $0x151] sm:$0xff]
        %v281 = vld [vmem:[%s186 + $0x159] sm:$0xff]
        %v282 = vld [vmem:[%s186 + $0x169] sm:$0xff]
        %v283 = vld [vmem:[%s186 + $0x171] sm:$0xff]
        %316 = vrot.lane.b32.xlu0 %v252, 8
        %v317 = vpop.permute.xlu0 %316
        %318 = vrot.lane.b32.xlu0 %v253, 8
        %v319 = vpop.permute.xlu0 %318
        %320 = vrot.lane.b32.xlu0 %v254, 8
        %v321 = vpop.permute.xlu0 %320
        %322 = vrot.lane.b32.xlu0 %v255, 8
        %v323 = vpop.permute.xlu0 %322
        %324 = vrot.lane.b32.xlu0 %v256, 8
        %v325 = vpop.permute.xlu0 %324
        %326 = vrot.lane.b32.xlu0 %v257, 8
        %v327 = vpop.permute.xlu0 %326
        %328 = vrot.lane.b32.xlu0 %v258, 8
        %v329 = vpop.permute.xlu0 %328
        %330 = vrot.lane.b32.xlu0 %v259, 8
        %v331 = vpop.permute.xlu0 %330
        %332 = vrot.lane.b32.xlu0 %v260, 8
        %v333 = vpop.permute.xlu0 %332
        %334 = vrot.lane.b32.xlu0 %v261, 8
        %v335 = vpop.permute.xlu0 %334
        %336 = vrot.lane.b32.xlu0 %v262, 8
        %v337 = vpop.permute.xlu0 %336
        %338 = vrot.lane.b32.xlu0 %v263, 8
        %v339 = vpop.permute.xlu0 %338
        %340 = vrot.lane.b32.xlu0 %v264, 8
        %v341 = vpop.permute.xlu0 %340
        %342 = vrot.lane.b32.xlu0 %v265, 8
        %v343 = vpop.permute.xlu0 %342
        %344 = vrot.lane.b32.xlu0 %v266, 8
        %v345 = vpop.permute.xlu0 %344
        %346 = vrot.lane.b32.xlu0 %v267, 8
        %v347 = vpop.permute.xlu0 %346
        %348 = vrot.lane.b32.xlu0 %v268, 8
        %v349 = vpop.permute.xlu0 %348
        %350 = vrot.lane.b32.xlu0 %v269, 8
        %v351 = vpop.permute.xlu0 %350
        %352 = vrot.lane.b32.xlu0 %v270, 8
        %v353 = vpop.permute.xlu0 %352
        %354 = vrot.lane.b32.xlu0 %v271, 8
        %v355 = vpop.permute.xlu0 %354
        %356 = vrot.lane.b32.xlu0 %v272, 8
        %v357 = vpop.permute.xlu0 %356
        %358 = vrot.lane.b32.xlu0 %v273, 8
        %v359 = vpop.permute.xlu0 %358
        %360 = vrot.lane.b32.xlu0 %v274, 8
        %v361 = vpop.permute.xlu0 %360
        %362 = vrot.lane.b32.xlu0 %v275, 8
        %v363 = vpop.permute.xlu0 %362
        %364 = vrot.lane.b32.xlu0 %v276, 8
        %v365 = vpop.permute.xlu0 %364
        %366 = vrot.lane.b32.xlu0 %v277, 8
        %v367 = vpop.permute.xlu0 %366
        %368 = vrot.lane.b32.xlu0 %v278, 8
        %v369 = vpop.permute.xlu0 %368
        %370 = vrot.lane.b32.xlu0 %v279, 8
        %v371 = vpop.permute.xlu0 %370
        %372 = vrot.lane.b32.xlu0 %v280, 8
        %v373 = vpop.permute.xlu0 %372
        %374 = vrot.lane.b32.xlu0 %v281, 8
        %v375 = vpop.permute.xlu0 %374
        %376 = vrot.lane.b32.xlu0 %v282, 8
        %v377 = vpop.permute.xlu0 %376
        %378 = vrot.lane.b32.xlu0 %v283, 8
        %v379 = vpop.permute.xlu0 %378
        %vm412 = vcmask 130112
        %413 = vst.msk [vmem:[#allocation2] sm:$0xff] %vm412, %v317
        %414 = vst.msk [vmem:[#allocation2 + $0x8] sm:$0xff] %vm412, %v319
        %415 = vst.msk [vmem:[#allocation2 + $0x10] sm:$0xff] %vm412, %v321
        %416 = vst.msk [vmem:[#allocation2 + $0x18] sm:$0xff] %vm412, %v323
        %417 = vst.msk [vmem:[#allocation2 + $0x20] sm:$0xff] %vm412, %v325
        %418 = vst.msk [vmem:[#allocation2 + $0x28] sm:$0xff] %vm412, %v327
        %419 = vst.msk [vmem:[#allocation2 + $0x30] sm:$0xff] %vm412, %v329
        %420 = vst.msk [vmem:[#allocation2 + $0x38] sm:$0xff] %vm412, %v331
        %421 = vst.msk [vmem:[#allocation2 + $0x40] sm:$0xff] %vm412, %v333
        %422 = vst.msk [vmem:[#allocation2 + $0x48] sm:$0xff] %vm412, %v335
        %423 = vst.msk [vmem:[#allocation2 + $0x50] sm:$0xff] %vm412, %v337
        %424 = vst.msk [vmem:[#allocation2 + $0x58] sm:$0xff] %vm412, %v339
        %425 = vst.msk [vmem:[#allocation2 + $0x60] sm:$0xff] %vm412, %v341
        %426 = vst.msk [vmem:[#allocation2 + $0x68] sm:$0xff] %vm412, %v343
        %427 = vst.msk [vmem:[#allocation2 + $0x70] sm:$0xff] %vm412, %v345
        %428 = vst.msk [vmem:[#allocation2 + $0x78] sm:$0xff] %vm412, %v347
        %429 = vst.msk [vmem:[#allocation2 + $0x80] sm:$0xff] %vm412, %v349
        %430 = vst.msk [vmem:[#allocation2 + $0x88] sm:$0xff] %vm412, %v351
        %431 = vst.msk [vmem:[#allocation2 + $0x90] sm:$0xff] %vm412, %v353
        %432 = vst.msk [vmem:[#allocation2 + $0x98] sm:$0xff] %vm412, %v355
        %433 = vst.msk [vmem:[#allocation2 + $0xa0] sm:$0xff] %vm412, %v357
        %434 = vst.msk [vmem:[#allocation2 + $0xa8] sm:$0xff] %vm412, %v359
        %435 = vst.msk [vmem:[#allocation2 + $0xb0] sm:$0xff] %vm412, %v361
        %436 = vst.msk [vmem:[#allocation2 + $0xb8] sm:$0xff] %vm412, %v363
        %437 = vst.msk [vmem:[#allocation2 + $0xc0] sm:$0xff] %vm412, %v365
        %438 = vst.msk [vmem:[#allocation2 + $0xc8] sm:$0xff] %vm412, %v367
        %439 = vst.msk [vmem:[#allocation2 + $0xd0] sm:$0xff] %vm412, %v369
        %440 = vst.msk [vmem:[#allocation2 + $0xd8] sm:$0xff] %vm412, %v371
        %441 = vst.msk [vmem:[#allocation2 + $0xe0] sm:$0xff] %vm412, %v373
        %442 = vst.msk [vmem:[#allocation2 + $0xe8] sm:$0xff] %vm412, %v375
        %443 = vst.msk [vmem:[#allocation2 + $0xf0] sm:$0xff] %vm412, %v377
        %444 = vst.msk [vmem:[#allocation2 + $0xf8] sm:$0xff] %vm412, %v379
        %v445 = vld [vmem:[%s186 + $0x2] sm:$0xff]
        %v446 = vld [vmem:[%s186 + $0xa] sm:$0xff]
        %v447 = vld [vmem:[%s186 + $0x1a] sm:$0xff]
        %v448 = vld [vmem:[%s186 + $0x22] sm:$0xff]
        %v449 = vld [vmem:[%s186 + $0x32] sm:$0xff]
        %v450 = vld [vmem:[%s186 + $0x3a] sm:$0xff]
        %v451 = vld [vmem:[%s186 + $0x4a] sm:$0xff]
        %v452 = vld [vmem:[%s186 + $0x52] sm:$0xff]
        %v453 = vld [vmem:[%s186 + $0x62] sm:$0xff]
        %v454 = vld [vmem:[%s186 + $0x6a] sm:$0xff]
        %v455 = vld [vmem:[%s186 + $0x7a] sm:$0xff]
        %v456 = vld [vmem:[%s186 + $0x82] sm:$0xff]
        %v457 = vld [vmem:[%s186 + $0x92] sm:$0xff]
        %v458 = vld [vmem:[%s186 + $0x9a] sm:$0xff]
        %v459 = vld [vmem:[%s186 + $0xaa] sm:$0xff]
        %v460 = vld [vmem:[%s186 + $0xb2] sm:$0xff]
        %v461 = vld [vmem:[%s186 + $0xc2] sm:$0xff]
        %v462 = vld [vmem:[%s186 + $0xca] sm:$0xff]
        %v463 = vld [vmem:[%s186 + $0xda] sm:$0xff]
        %v464 = vld [vmem:[%s186 + $0xe2] sm:$0xff]
        %v465 = vld [vmem:[%s186 + $0xf2] sm:$0xff]
        %v466 = vld [vmem:[%s186 + $0xfa] sm:$0xff]
        %v467 = vld [vmem:[%s186 + $0x10a] sm:$0xff]
        %v468 = vld [vmem:[%s186 + $0x112] sm:$0xff]
        %v469 = vld [vmem:[%s186 + $0x122] sm:$0xff]
        %v470 = vld [vmem:[%s186 + $0x12a] sm:$0xff]
        %v471 = vld [vmem:[%s186 + $0x13a] sm:$0xff]
        %v472 = vld [vmem:[%s186 + $0x142] sm:$0xff]
        %v473 = vld [vmem:[%s186 + $0x152] sm:$0xff]
        %v474 = vld [vmem:[%s186 + $0x15a] sm:$0xff]
        %v475 = vld [vmem:[%s186 + $0x16a] sm:$0xff]
        %v476 = vld [vmem:[%s186 + $0x172] sm:$0xff]
        %509 = vrot.lane.b32.xlu0 %v445, 16
        %v510 = vpop.permute.xlu0 %509
        %511 = vrot.lane.b32.xlu0 %v446, 16
        %v512 = vpop.permute.xlu0 %511
        %513 = vrot.lane.b32.xlu0 %v447, 16
        %v514 = vpop.permute.xlu0 %513
        %515 = vrot.lane.b32.xlu0 %v448, 16
        %v516 = vpop.permute.xlu0 %515
        %517 = vrot.lane.b32.xlu0 %v449, 16
        %v518 = vpop.permute.xlu0 %517
        %519 = vrot.lane.b32.xlu0 %v450, 16
        %v520 = vpop.permute.xlu0 %519
        %521 = vrot.lane.b32.xlu0 %v451, 16
        %v522 = vpop.permute.xlu0 %521
        %523 = vrot.lane.b32.xlu0 %v452, 16
        %v524 = vpop.permute.xlu0 %523
        %525 = vrot.lane.b32.xlu0 %v453, 16
        %v526 = vpop.permute.xlu0 %525
        %527 = vrot.lane.b32.xlu0 %v454, 16
        %v528 = vpop.permute.xlu0 %527
        %529 = vrot.lane.b32.xlu0 %v455, 16
        %v530 = vpop.permute.xlu0 %529
        %531 = vrot.lane.b32.xlu0 %v456, 16
        %v532 = vpop.permute.xlu0 %531
        %533 = vrot.lane.b32.xlu0 %v457, 16
        %v534 = vpop.permute.xlu0 %533
        %535 = vrot.lane.b32.xlu0 %v458, 16
        %v536 = vpop.permute.xlu0 %535
        %537 = vrot.lane.b32.xlu0 %v459, 16
        %v538 = vpop.permute.xlu0 %537
        %539 = vrot.lane.b32.xlu0 %v460, 16
        %v540 = vpop.permute.xlu0 %539
        %541 = vrot.lane.b32.xlu0 %v461, 16
        %v542 = vpop.permute.xlu0 %541
        %543 = vrot.lane.b32.xlu0 %v462, 16
        %v544 = vpop.permute.xlu0 %543
        %545 = vrot.lane.b32.xlu0 %v463, 16
        %v546 = vpop.permute.xlu0 %545
        %547 = vrot.lane.b32.xlu0 %v464, 16
        %v548 = vpop.permute.xlu0 %547
        %549 = vrot.lane.b32.xlu0 %v465, 16
        %v550 = vpop.permute.xlu0 %549
        %551 = vrot.lane.b32.xlu0 %v466, 16
        %v552 = vpop.permute.xlu0 %551
        %553 = vrot.lane.b32.xlu0 %v467, 16
        %v554 = vpop.permute.xlu0 %553
        %555 = vrot.lane.b32.xlu0 %v468, 16
        %v556 = vpop.permute.xlu0 %555
        %557 = vrot.lane.b32.xlu0 %v469, 16
        %v558 = vpop.permute.xlu0 %557
        %559 = vrot.lane.b32.xlu0 %v470, 16
        %v560 = vpop.permute.xlu0 %559
        %561 = vrot.lane.b32.xlu0 %v471, 16
        %v562 = vpop.permute.xlu0 %561
        %563 = vrot.lane.b32.xlu0 %v472, 16
        %v564 = vpop.permute.xlu0 %563
        %565 = vrot.lane.b32.xlu0 %v473, 16
        %v566 = vpop.permute.xlu0 %565
        %567 = vrot.lane.b32.xlu0 %v474, 16
        %v568 = vpop.permute.xlu0 %567
        %569 = vrot.lane.b32.xlu0 %v475, 16
        %v570 = vpop.permute.xlu0 %569
        %571 = vrot.lane.b32.xlu0 %v476, 16
        %v572 = vpop.permute.xlu0 %571
        %vm605 = vcmask 195712
        %606 = vst.msk [vmem:[#allocation2] sm:$0xff] %vm605, %v510
        %607 = vst.msk [vmem:[#allocation2 + $0x8] sm:$0xff] %vm605, %v512
        %608 = vst.msk [vmem:[#allocation2 + $0x10] sm:$0xff] %vm605, %v514
        %609 = vst.msk [vmem:[#allocation2 + $0x18] sm:$0xff] %vm605, %v516
        %610 = vst.msk [vmem:[#allocation2 + $0x20] sm:$0xff] %vm605, %v518
        %611 = vst.msk [vmem:[#allocation2 + $0x28] sm:$0xff] %vm605, %v520
        %612 = vst.msk [vmem:[#allocation2 + $0x30] sm:$0xff] %vm605, %v522
        %613 = vst.msk [vmem:[#allocation2 + $0x38] sm:$0xff] %vm605, %v524
        %614 = vst.msk [vmem:[#allocation2 + $0x40] sm:$0xff] %vm605, %v526
        %615 = vst.msk [vmem:[#allocation2 + $0x48] sm:$0xff] %vm605, %v528
        %616 = vst.msk [vmem:[#allocation2 + $0x50] sm:$0xff] %vm605, %v530
        %617 = vst.msk [vmem:[#allocation2 + $0x58] sm:$0xff] %vm605, %v532
        %618 = vst.msk [vmem:[#allocation2 + $0x60] sm:$0xff] %vm605, %v534
        %619 = vst.msk [vmem:[#allocation2 + $0x68] sm:$0xff] %vm605, %v536
        %620 = vst.msk [vmem:[#allocation2 + $0x70] sm:$0xff] %vm605, %v538
        %621 = vst.msk [vmem:[#allocation2 + $0x78] sm:$0xff] %vm605, %v540
        %622 = vst.msk [vmem:[#allocation2 + $0x80] sm:$0xff] %vm605, %v542
        %623 = vst.msk [vmem:[#allocation2 + $0x88] sm:$0xff] %vm605, %v544
        %624 = vst.msk [vmem:[#allocation2 + $0x90] sm:$0xff] %vm605, %v546
        %625 = vst.msk [vmem:[#allocation2 + $0x98] sm:$0xff] %vm605, %v548
        %626 = vst.msk [vmem:[#allocation2 + $0xa0] sm:$0xff] %vm605, %v550
        %627 = vst.msk [vmem:[#allocation2 + $0xa8] sm:$0xff] %vm605, %v552
        %628 = vst.msk [vmem:[#allocation2 + $0xb0] sm:$0xff] %vm605, %v554
        %629 = vst.msk [vmem:[#allocation2 + $0xb8] sm:$0xff] %vm605, %v556
        %630 = vst.msk [vmem:[#allocation2 + $0xc0] sm:$0xff] %vm605, %v558
        %631 = vst.msk [vmem:[#allocation2 + $0xc8] sm:$0xff] %vm605, %v560
        %632 = vst.msk [vmem:[#allocation2 + $0xd0] sm:$0xff] %vm605, %v562
        %633 = vst.msk [vmem:[#allocation2 + $0xd8] sm:$0xff] %vm605, %v564
        %634 = vst.msk [vmem:[#allocation2 + $0xe0] sm:$0xff] %vm605, %v566
        %635 = vst.msk [vmem:[#allocation2 + $0xe8] sm:$0xff] %vm605, %v568
        %636 = vst.msk [vmem:[#allocation2 + $0xf0] sm:$0xff] %vm605, %v570
        %637 = vst.msk [vmem:[#allocation2 + $0xf8] sm:$0xff] %vm605, %v572
        %s638 = sadd.s32 %s184, 1
        %s639 = smul.u32 %s638, 24
        %s640 = scalar_lea.vmem %s182, %s639
        %v641 = vld [vmem:[%s640] sm:$0xff]
        %v642 = vld [vmem:[%s640 + $0x8] sm:$0xff]
        %v643 = vld [vmem:[%s640 + $0x18] sm:$0xff]
        %v644 = vld [vmem:[%s640 + $0x20] sm:$0xff]
        %v645 = vld [vmem:[%s640 + $0x30] sm:$0xff]
        %v646 = vld [vmem:[%s640 + $0x38] sm:$0xff]
        %v647 = vld [vmem:[%s640 + $0x48] sm:$0xff]
        %v648 = vld [vmem:[%s640 + $0x50] sm:$0xff]
        %v649 = vld [vmem:[%s640 + $0x60] sm:$0xff]
        %v650 = vld [vmem:[%s640 + $0x68] sm:$0xff]
        %v651 = vld [vmem:[%s640 + $0x78] sm:$0xff]
        %v652 = vld [vmem:[%s640 + $0x80] sm:$0xff]
        %v653 = vld [vmem:[%s640 + $0x90] sm:$0xff]
        %v654 = vld [vmem:[%s640 + $0x98] sm:$0xff]
        %v655 = vld [vmem:[%s640 + $0xa8] sm:$0xff]
        %v656 = vld [vmem:[%s640 + $0xb0] sm:$0xff]
        %v657 = vld [vmem:[%s640 + $0xc0] sm:$0xff]
        %v658 = vld [vmem:[%s640 + $0xc8] sm:$0xff]
        %v659 = vld [vmem:[%s640 + $0xd8] sm:$0xff]
        %v660 = vld [vmem:[%s640 + $0xe0] sm:$0xff]
        %v661 = vld [vmem:[%s640 + $0xf0] sm:$0xff]
        %v662 = vld [vmem:[%s640 + $0xf8] sm:$0xff]
        %v663 = vld [vmem:[%s640 + $0x108] sm:$0xff]
        %v664 = vld [vmem:[%s640 + $0x110] sm:$0xff]
        %v665 = vld [vmem:[%s640 + $0x120] sm:$0xff]
        %v666 = vld [vmem:[%s640 + $0x128] sm:$0xff]
        %v667 = vld [vmem:[%s640 + $0x138] sm:$0xff]
        %v668 = vld [vmem:[%s640 + $0x140] sm:$0xff]
        %v669 = vld [vmem:[%s640 + $0x150] sm:$0xff]
        %v670 = vld [vmem:[%s640 + $0x158] sm:$0xff]
        %v671 = vld [vmem:[%s640 + $0x168] sm:$0xff]
        %v672 = vld [vmem:[%s640 + $0x170] sm:$0xff]
        %705 = vrot.lane.b32.xlu0 %v641, 24
        %v706 = vpop.permute.xlu0 %705
        %707 = vrot.lane.b32.xlu0 %v642, 24
        %v708 = vpop.permute.xlu0 %707
        %709 = vrot.lane.b32.xlu0 %v643, 24
        %v710 = vpop.permute.xlu0 %709
        %711 = vrot.lane.b32.xlu0 %v644, 24
        %v712 = vpop.permute.xlu0 %711
        %713 = vrot.lane.b32.xlu0 %v645, 24
        %v714 = vpop.permute.xlu0 %713
        %715 = vrot.lane.b32.xlu0 %v646, 24
        %v716 = vpop.permute.xlu0 %715
        %717 = vrot.lane.b32.xlu0 %v647, 24
        %v718 = vpop.permute.xlu0 %717
        %719 = vrot.lane.b32.xlu0 %v648, 24
        %v720 = vpop.permute.xlu0 %719
        %721 = vrot.lane.b32.xlu0 %v649, 24
        %v722 = vpop.permute.xlu0 %721
        %723 = vrot.lane.b32.xlu0 %v650, 24
        %v724 = vpop.permute.xlu0 %723
        %725 = vrot.lane.b32.xlu0 %v651, 24
        %v726 = vpop.permute.xlu0 %725
        %727 = vrot.lane.b32.xlu0 %v652, 24
        %v728 = vpop.permute.xlu0 %727
        %729 = vrot.lane.b32.xlu0 %v653, 24
        %v730 = vpop.permute.xlu0 %729
        %731 = vrot.lane.b32.xlu0 %v654, 24
        %v732 = vpop.permute.xlu0 %731
        %733 = vrot.lane.b32.xlu0 %v655, 24
        %v734 = vpop.permute.xlu0 %733
        %735 = vrot.lane.b32.xlu0 %v656, 24
        %v736 = vpop.permute.xlu0 %735
        %737 = vrot.lane.b32.xlu0 %v657, 24
        %v738 = vpop.permute.xlu0 %737
        %739 = vrot.lane.b32.xlu0 %v658, 24
        %v740 = vpop.permute.xlu0 %739
        %741 = vrot.lane.b32.xlu0 %v659, 24
        %v742 = vpop.permute.xlu0 %741
        %743 = vrot.lane.b32.xlu0 %v660, 24
        %v744 = vpop.permute.xlu0 %743
        %745 = vrot.lane.b32.xlu0 %v661, 24
        %v746 = vpop.permute.xlu0 %745
        %747 = vrot.lane.b32.xlu0 %v662, 24
        %v748 = vpop.permute.xlu0 %747
        %749 = vrot.lane.b32.xlu0 %v663, 24
        %v750 = vpop.permute.xlu0 %749
        %751 = vrot.lane.b32.xlu0 %v664, 24
        %v752 = vpop.permute.xlu0 %751
        %753 = vrot.lane.b32.xlu0 %v665, 24
        %v754 = vpop.permute.xlu0 %753
        %755 = vrot.lane.b32.xlu0 %v666, 24
        %v756 = vpop.permute.xlu0 %755
        %757 = vrot.lane.b32.xlu0 %v667, 24
        %v758 = vpop.permute.xlu0 %757
        %759 = vrot.lane.b32.xlu0 %v668, 24
        %v760 = vpop.permute.xlu0 %759
        %761 = vrot.lane.b32.xlu0 %v669, 24
        %v762 = vpop.permute.xlu0 %761
        %763 = vrot.lane.b32.xlu0 %v670, 24
        %v764 = vpop.permute.xlu0 %763
        %765 = vrot.lane.b32.xlu0 %v671, 24
        %v766 = vpop.permute.xlu0 %765
        %767 = vrot.lane.b32.xlu0 %v672, 24
        %v768 = vpop.permute.xlu0 %767
        %vm801 = vcmask 261312
        %802 = vst.msk [vmem:[#allocation2] sm:$0xff] %vm801, %v706
        %803 = vst.msk [vmem:[#allocation2 + $0x8] sm:$0xff] %vm801, %v708
        %804 = vst.msk [vmem:[#allocation2 + $0x10] sm:$0xff] %vm801, %v710
        %805 = vst.msk [vmem:[#allocation2 + $0x18] sm:$0xff] %vm801, %v712
        %806 = vst.msk [vmem:[#allocation2 + $0x20] sm:$0xff] %vm801, %v714
        %807 = vst.msk [vmem:[#allocation2 + $0x28] sm:$0xff] %vm801, %v716
        %808 = vst.msk [vmem:[#allocation2 + $0x30] sm:$0xff] %vm801, %v718
        %809 = vst.msk [vmem:[#allocation2 + $0x38] sm:$0xff] %vm801, %v720
        %810 = vst.msk [vmem:[#allocation2 + $0x40] sm:$0xff] %vm801, %v722
        %811 = vst.msk [vmem:[#allocation2 + $0x48] sm:$0xff] %vm801, %v724
        %812 = vst.msk [vmem:[#allocation2 + $0x50] sm:$0xff] %vm801, %v726
        %813 = vst.msk [vmem:[#allocation2 + $0x58] sm:$0xff] %vm801, %v728
        %814 = vst.msk [vmem:[#allocation2 + $0x60] sm:$0xff] %vm801, %v730
        %815 = vst.msk [vmem:[#allocation2 + $0x68] sm:$0xff] %vm801, %v732
        %816 = vst.msk [vmem:[#allocation2 + $0x70] sm:$0xff] %vm801, %v734
        %817 = vst.msk [vmem:[#allocation2 + $0x78] sm:$0xff] %vm801, %v736
        %818 = vst.msk [vmem:[#allocation2 + $0x80] sm:$0xff] %vm801, %v738
        %819 = vst.msk [vmem:[#allocation2 + $0x88] sm:$0xff] %vm801, %v740
        %820 = vst.msk [vmem:[#allocation2 + $0x90] sm:$0xff] %vm801, %v742
        %821 = vst.msk [vmem:[#allocation2 + $0x98] sm:$0xff] %vm801, %v744
        %822 = vst.msk [vmem:[#allocation2 + $0xa0] sm:$0xff] %vm801, %v746
        %823 = vst.msk [vmem:[#allocation2 + $0xa8] sm:$0xff] %vm801, %v748
        %824 = vst.msk [vmem:[#allocation2 + $0xb0] sm:$0xff] %vm801, %v750
        %825 = vst.msk [vmem:[#allocation2 + $0xb8] sm:$0xff] %vm801, %v752
        %826 = vst.msk [vmem:[#allocation2 + $0xc0] sm:$0xff] %vm801, %v754
        %827 = vst.msk [vmem:[#allocation2 + $0xc8] sm:$0xff] %vm801, %v756
        %828 = vst.msk [vmem:[#allocation2 + $0xd0] sm:$0xff] %vm801, %v758
        %829 = vst.msk [vmem:[#allocation2 + $0xd8] sm:$0xff] %vm801, %v760
        %830 = vst.msk [vmem:[#allocation2 + $0xe0] sm:$0xff] %vm801, %v762
        %831 = vst.msk [vmem:[#allocation2 + $0xe8] sm:$0xff] %vm801, %v764
        %832 = vst.msk [vmem:[#allocation2 + $0xf0] sm:$0xff] %vm801, %v766
        %833 = vst.msk [vmem:[#allocation2 + $0xf8] sm:$0xff] %vm801, %v768
        %v834 = vld [vmem:[%s640 + $0x1] sm:$0xff]
        %v835 = vld [vmem:[%s640 + $0x9] sm:$0xff]
        %v836 = vld [vmem:[%s640 + $0x19] sm:$0xff]
        %v837 = vld [vmem:[%s640 + $0x21] sm:$0xff]
        %v838 = vld [vmem:[%s640 + $0x31] sm:$0xff]
        %v839 = vld [vmem:[%s640 + $0x39] sm:$0xff]
        %v840 = vld [vmem:[%s640 + $0x49] sm:$0xff]
        %v841 = vld [vmem:[%s640 + $0x51] sm:$0xff]
        %v842 = vld [vmem:[%s640 + $0x61] sm:$0xff]
        %v843 = vld [vmem:[%s640 + $0x69] sm:$0xff]
        %v844 = vld [vmem:[%s640 + $0x79] sm:$0xff]
        %v845 = vld [vmem:[%s640 + $0x81] sm:$0xff]
        %v846 = vld [vmem:[%s640 + $0x91] sm:$0xff]
        %v847 = vld [vmem:[%s640 + $0x99] sm:$0xff]
        %v848 = vld [vmem:[%s640 + $0xa9] sm:$0xff]
        %v849 = vld [vmem:[%s640 + $0xb1] sm:$0xff]
        %v850 = vld [vmem:[%s640 + $0xc1] sm:$0xff]
        %v851 = vld [vmem:[%s640 + $0xc9] sm:$0xff]
        %v852 = vld [vmem:[%s640 + $0xd9] sm:$0xff]
        %v853 = vld [vmem:[%s640 + $0xe1] sm:$0xff]
        %v854 = vld [vmem:[%s640 + $0xf1] sm:$0xff]
        %v855 = vld [vmem:[%s640 + $0xf9] sm:$0xff]
        %v856 = vld [vmem:[%s640 + $0x109] sm:$0xff]
        %v857 = vld [vmem:[%s640 + $0x111] sm:$0xff]
        %v858 = vld [vmem:[%s640 + $0x121] sm:$0xff]
        %v859 = vld [vmem:[%s640 + $0x129] sm:$0xff]
        %v860 = vld [vmem:[%s640 + $0x139] sm:$0xff]
        %v861 = vld [vmem:[%s640 + $0x141] sm:$0xff]
        %v862 = vld [vmem:[%s640 + $0x151] sm:$0xff]
        %v863 = vld [vmem:[%s640 + $0x159] sm:$0xff]
        %v864 = vld [vmem:[%s640 + $0x169] sm:$0xff]
        %v865 = vld [vmem:[%s640 + $0x171] sm:$0xff]
        %898 = vrot.lane.b32.xlu0 %v834, 32
        %v899 = vpop.permute.xlu0 %898
        %900 = vrot.lane.b32.xlu0 %v835, 32
        %v901 = vpop.permute.xlu0 %900
        %902 = vrot.lane.b32.xlu0 %v836, 32
        %v903 = vpop.permute.xlu0 %902
        %904 = vrot.lane.b32.xlu0 %v837, 32
        %v905 = vpop.permute.xlu0 %904
        %906 = vrot.lane.b32.xlu0 %v838, 32
        %v907 = vpop.permute.xlu0 %906
        %908 = vrot.lane.b32.xlu0 %v839, 32
        %v909 = vpop.permute.xlu0 %908
        %910 = vrot.lane.b32.xlu0 %v840, 32
        %v911 = vpop.permute.xlu0 %910
        %912 = vrot.lane.b32.xlu0 %v841, 32
        %v913 = vpop.permute.xlu0 %912
        %914 = vrot.lane.b32.xlu0 %v842, 32
        %v915 = vpop.permute.xlu0 %914
        %916 = vrot.lane.b32.xlu0 %v843, 32
        %v917 = vpop.permute.xlu0 %916
        %918 = vrot.lane.b32.xlu0 %v844, 32
        %v919 = vpop.permute.xlu0 %918
        %920 = vrot.lane.b32.xlu0 %v845, 32
        %v921 = vpop.permute.xlu0 %920
        %922 = vrot.lane.b32.xlu0 %v846, 32
        %v923 = vpop.permute.xlu0 %922
        %924 = vrot.lane.b32.xlu0 %v847, 32
        %v925 = vpop.permute.xlu0 %924
        %926 = vrot.lane.b32.xlu0 %v848, 32
        %v927 = vpop.permute.xlu0 %926
        %928 = vrot.lane.b32.xlu0 %v849, 32
        %v929 = vpop.permute.xlu0 %928
        %930 = vrot.lane.b32.xlu0 %v850, 32
        %v931 = vpop.permute.xlu0 %930
        %932 = vrot.lane.b32.xlu0 %v851, 32
        %v933 = vpop.permute.xlu0 %932
        %934 = vrot.lane.b32.xlu0 %v852, 32
        %v935 = vpop.permute.xlu0 %934
        %936 = vrot.lane.b32.xlu0 %v853, 32
        %v937 = vpop.permute.xlu0 %936
        %938 = vrot.lane.b32.xlu0 %v854, 32
        %v939 = vpop.permute.xlu0 %938
        %940 = vrot.lane.b32.xlu0 %v855, 32
        %v941 = vpop.permute.xlu0 %940
        %942 = vrot.lane.b32.xlu0 %v856, 32
        %v943 = vpop.permute.xlu0 %942
        %944 = vrot.lane.b32.xlu0 %v857, 32
        %v945 = vpop.permute.xlu0 %944
        %946 = vrot.lane.b32.xlu0 %v858, 32
        %v947 = vpop.permute.xlu0 %946
        %948 = vrot.lane.b32.xlu0 %v859, 32
        %v949 = vpop.permute.xlu0 %948
        %950 = vrot.lane.b32.xlu0 %v860, 32
        %v951 = vpop.permute.xlu0 %950
        %952 = vrot.lane.b32.xlu0 %v861, 32
        %v953 = vpop.permute.xlu0 %952
        %954 = vrot.lane.b32.xlu0 %v862, 32
        %v955 = vpop.permute.xlu0 %954
        %956 = vrot.lane.b32.xlu0 %v863, 32
        %v957 = vpop.permute.xlu0 %956
        %958 = vrot.lane.b32.xlu0 %v864, 32
        %v959 = vpop.permute.xlu0 %958
        %960 = vrot.lane.b32.xlu0 %v865, 32
        %v961 = vpop.permute.xlu0 %960
        %vm994 = vcmask 326912
        %995 = vst.msk [vmem:[#allocation2] sm:$0xff] %vm994, %v899
        %996 = vst.msk [vmem:[#allocation2 + $0x8] sm:$0xff] %vm994, %v901
        %997 = vst.msk [vmem:[#allocation2 + $0x10] sm:$0xff] %vm994, %v903
        %998 = vst.msk [vmem:[#allocation2 + $0x18] sm:$0xff] %vm994, %v905
        %999 = vst.msk [vmem:[#allocation2 + $0x20] sm:$0xff] %vm994, %v907
        %1000 = vst.msk [vmem:[#allocation2 + $0x28] sm:$0xff] %vm994, %v909
        %1001 = vst.msk [vmem:[#allocation2 + $0x30] sm:$0xff] %vm994, %v911
        %1002 = vst.msk [vmem:[#allocation2 + $0x38] sm:$0xff] %vm994, %v913
        %1003 = vst.msk [vmem:[#allocation2 + $0x40] sm:$0xff] %vm994, %v915
        %1004 = vst.msk [vmem:[#allocation2 + $0x48] sm:$0xff] %vm994, %v917
        %1005 = vst.msk [vmem:[#allocation2 + $0x50] sm:$0xff] %vm994, %v919
        %1006 = vst.msk [vmem:[#allocation2 + $0x58] sm:$0xff] %vm994, %v921
        %1007 = vst.msk [vmem:[#allocation2 + $0x60] sm:$0xff] %vm994, %v923
        %1008 = vst.msk [vmem:[#allocation2 + $0x68] sm:$0xff] %vm994, %v925
        %1009 = vst.msk [vmem:[#allocation2 + $0x70] sm:$0xff] %vm994, %v927
        %1010 = vst.msk [vmem:[#allocation2 + $0x78] sm:$0xff] %vm994, %v929
        %1011 = vst.msk [vmem:[#allocation2 + $0x80] sm:$0xff] %vm994, %v931
        %1012 = vst.msk [vmem:[#allocation2 + $0x88] sm:$0xff] %vm994, %v933
        %1013 = vst.msk [vmem:[#allocation2 + $0x90] sm:$0xff] %vm994, %v935
        %1014 = vst.msk [vmem:[#allocation2 + $0x98] sm:$0xff] %vm994, %v937
        %1015 = vst.msk [vmem:[#allocation2 + $0xa0] sm:$0xff] %vm994, %v939
        %1016 = vst.msk [vmem:[#allocation2 + $0xa8] sm:$0xff] %vm994, %v941
        %1017 = vst.msk [vmem:[#allocation2 + $0xb0] sm:$0xff] %vm994, %v943
        %1018 = vst.msk [vmem:[#allocation2 + $0xb8] sm:$0xff] %vm994, %v945
        %1019 = vst.msk [vmem:[#allocation2 + $0xc0] sm:$0xff] %vm994, %v947
        %1020 = vst.msk [vmem:[#allocation2 + $0xc8] sm:$0xff] %vm994, %v949
        %1021 = vst.msk [vmem:[#allocation2 + $0xd0] sm:$0xff] %vm994, %v951
        %1022 = vst.msk [vmem:[#allocation2 + $0xd8] sm:$0xff] %vm994, %v953
        %1023 = vst.msk [vmem:[#allocation2 + $0xe0] sm:$0xff] %vm994, %v955
        %1024 = vst.msk [vmem:[#allocation2 + $0xe8] sm:$0xff] %vm994, %v957
        %1025 = vst.msk [vmem:[#allocation2 + $0xf0] sm:$0xff] %vm994, %v959
        %1026 = vst.msk [vmem:[#allocation2 + $0xf8] sm:$0xff] %vm994, %v961
        %v1027 = vld [vmem:[%s640 + $0x2] sm:$0xff]
        %v1028 = vld [vmem:[%s640 + $0xa] sm:$0xff]
        %v1029 = vld [vmem:[%s640 + $0x1a] sm:$0xff]
        %v1030 = vld [vmem:[%s640 + $0x22] sm:$0xff]
        %v1031 = vld [vmem:[%s640 + $0x32] sm:$0xff]
        %v1032 = vld [vmem:[%s640 + $0x3a] sm:$0xff]
        %v1033 = vld [vmem:[%s640 + $0x4a] sm:$0xff]
        %v1034 = vld [vmem:[%s640 + $0x52] sm:$0xff]
        %v1035 = vld [vmem:[%s640 + $0x62] sm:$0xff]
        %v1036 = vld [vmem:[%s640 + $0x6a] sm:$0xff]
        %v1037 = vld [vmem:[%s640 + $0x7a] sm:$0xff]
        %v1038 = vld [vmem:[%s640 + $0x82] sm:$0xff]
        %v1039 = vld [vmem:[%s640 + $0x92] sm:$0xff]
        %v1040 = vld [vmem:[%s640 + $0x9a] sm:$0xff]
        %v1041 = vld [vmem:[%s640 + $0xaa] sm:$0xff]
        %v1042 = vld [vmem:[%s640 + $0xb2] sm:$0xff]
        %v1043 = vld [vmem:[%s640 + $0xc2] sm:$0xff]
        %v1044 = vld [vmem:[%s640 + $0xca] sm:$0xff]
        %v1045 = vld [vmem:[%s640 + $0xda] sm:$0xff]
        %v1046 = vld [vmem:[%s640 + $0xe2] sm:$0xff]
        %v1047 = vld [vmem:[%s640 + $0xf2] sm:$0xff]
        %v1048 = vld [vmem:[%s640 + $0xfa] sm:$0xff]
        %v1049 = vld [vmem:[%s640 + $0x10a] sm:$0xff]
        %v1050 = vld [vmem:[%s640 + $0x112] sm:$0xff]
        %v1051 = vld [vmem:[%s640 + $0x122] sm:$0xff]
        %v1052 = vld [vmem:[%s640 + $0x12a] sm:$0xff]
        %v1053 = vld [vmem:[%s640 + $0x13a] sm:$0xff]
        %v1054 = vld [vmem:[%s640 + $0x142] sm:$0xff]
        %v1055 = vld [vmem:[%s640 + $0x152] sm:$0xff]
        %v1056 = vld [vmem:[%s640 + $0x15a] sm:$0xff]
        %v1057 = vld [vmem:[%s640 + $0x16a] sm:$0xff]
        %v1058 = vld [vmem:[%s640 + $0x172] sm:$0xff]
        %1091 = vrot.lane.b32.xlu0 %v1027, 40
        %v1092 = vpop.permute.xlu0 %1091
        %1093 = vrot.lane.b32.xlu0 %v1028, 40
        %v1094 = vpop.permute.xlu0 %1093
        %1095 = vrot.lane.b32.xlu0 %v1029, 40
        %v1096 = vpop.permute.xlu0 %1095
        %1097 = vrot.lane.b32.xlu0 %v1030, 40
        %v1098 = vpop.permute.xlu0 %1097
        %1099 = vrot.lane.b32.xlu0 %v1031, 40
        %v1100 = vpop.permute.xlu0 %1099
        %1101 = vrot.lane.b32.xlu0 %v1032, 40
        %v1102 = vpop.permute.xlu0 %1101
        %1103 = vrot.lane.b32.xlu0 %v1033, 40
        %v1104 = vpop.permute.xlu0 %1103
        %1105 = vrot.lane.b32.xlu0 %v1034, 40
        %v1106 = vpop.permute.xlu0 %1105
        %1107 = vrot.lane.b32.xlu0 %v1035, 40
        %v1108 = vpop.permute.xlu0 %1107
        %1109 = vrot.lane.b32.xlu0 %v1036, 40
        %v1110 = vpop.permute.xlu0 %1109
        %1111 = vrot.lane.b32.xlu0 %v1037, 40
        %v1112 = vpop.permute.xlu0 %1111
        %1113 = vrot.lane.b32.xlu0 %v1038, 40
        %v1114 = vpop.permute.xlu0 %1113
        %1115 = vrot.lane.b32.xlu0 %v1039, 40
        %v1116 = vpop.permute.xlu0 %1115
        %1117 = vrot.lane.b32.xlu0 %v1040, 40
        %v1118 = vpop.permute.xlu0 %1117
        %1119 = vrot.lane.b32.xlu0 %v1041, 40
        %v1120 = vpop.permute.xlu0 %1119
        %1121 = vrot.lane.b32.xlu0 %v1042, 40
        %v1122 = vpop.permute.xlu0 %1121
        %1123 = vrot.lane.b32.xlu0 %v1043, 40
        %v1124 = vpop.permute.xlu0 %1123
        %1125 = vrot.lane.b32.xlu0 %v1044, 40
        %v1126 = vpop.permute.xlu0 %1125
        %1127 = vrot.lane.b32.xlu0 %v1045, 40
        %v1128 = vpop.permute.xlu0 %1127
        %1129 = vrot.lane.b32.xlu0 %v1046, 40
        %v1130 = vpop.permute.xlu0 %1129
        %1131 = vrot.lane.b32.xlu0 %v1047, 40
        %v1132 = vpop.permute.xlu0 %1131
        %1133 = vrot.lane.b32.xlu0 %v1048, 40
        %v1134 = vpop.permute.xlu0 %1133
        %1135 = vrot.lane.b32.xlu0 %v1049, 40
        %v1136 = vpop.permute.xlu0 %1135
        %1137 = vrot.lane.b32.xlu0 %v1050, 40
        %v1138 = vpop.permute.xlu0 %1137
        %1139 = vrot.lane.b32.xlu0 %v1051, 40
        %v1140 = vpop.permute.xlu0 %1139
        %1141 = vrot.lane.b32.xlu0 %v1052, 40
        %v1142 = vpop.permute.xlu0 %1141
        %1143 = vrot.lane.b32.xlu0 %v1053, 40
        %v1144 = vpop.permute.xlu0 %1143
        %1145 = vrot.lane.b32.xlu0 %v1054, 40
        %v1146 = vpop.permute.xlu0 %1145
        %1147 = vrot.lane.b32.xlu0 %v1055, 40
        %v1148 = vpop.permute.xlu0 %1147
        %1149 = vrot.lane.b32.xlu0 %v1056, 40
        %v1150 = vpop.permute.xlu0 %1149
        %1151 = vrot.lane.b32.xlu0 %v1057, 40
        %v1152 = vpop.permute.xlu0 %1151
        %1153 = vrot.lane.b32.xlu0 %v1058, 40
        %v1154 = vpop.permute.xlu0 %1153
        %vm1187 = vcmask 392512
        %1188 = vst.msk [vmem:[#allocation2] sm:$0xff] %vm1187, %v1092
        %1189 = vst.msk [vmem:[#allocation2 + $0x8] sm:$0xff] %vm1187, %v1094
        %1190 = vst.msk [vmem:[#allocation2 + $0x10] sm:$0xff] %vm1187, %v1096
        %1191 = vst.msk [vmem:[#allocation2 + $0x18] sm:$0xff] %vm1187, %v1098
        %1192 = vst.msk [vmem:[#allocation2 + $0x20] sm:$0xff] %vm1187, %v1100
        %1193 = vst.msk [vmem:[#allocation2 + $0x28] sm:$0xff] %vm1187, %v1102
        %1194 = vst.msk [vmem:[#allocation2 + $0x30] sm:$0xff] %vm1187, %v1104
        %1195 = vst.msk [vmem:[#allocation2 + $0x38] sm:$0xff] %vm1187, %v1106
        %1196 = vst.msk [vmem:[#allocation2 + $0x40] sm:$0xff] %vm1187, %v1108
        %1197 = vst.msk [vmem:[#allocation2 + $0x48] sm:$0xff] %vm1187, %v1110
        %1198 = vst.msk [vmem:[#allocation2 + $0x50] sm:$0xff] %vm1187, %v1112
        %1199 = vst.msk [vmem:[#allocation2 + $0x58] sm:$0xff] %vm1187, %v1114
        %1200 = vst.msk [vmem:[#allocation2 + $0x60] sm:$0xff] %vm1187, %v1116
        %1201 = vst.msk [vmem:[#allocation2 + $0x68] sm:$0xff] %vm1187, %v1118
        %1202 = vst.msk [vmem:[#allocation2 + $0x70] sm:$0xff] %vm1187, %v1120
        %1203 = vst.msk [vmem:[#allocation2 + $0x78] sm:$0xff] %vm1187, %v1122
        %1204 = vst.msk [vmem:[#allocation2 + $0x80] sm:$0xff] %vm1187, %v1124
        %1205 = vst.msk [vmem:[#allocation2 + $0x88] sm:$0xff] %vm1187, %v1126
        %1206 = vst.msk [vmem:[#allocation2 + $0x90] sm:$0xff] %vm1187, %v1128
        %1207 = vst.msk [vmem:[#allocation2 + $0x98] sm:$0xff] %vm1187, %v1130
        %1208 = vst.msk [vmem:[#allocation2 + $0xa0] sm:$0xff] %vm1187, %v1132
        %1209 = vst.msk [vmem:[#allocation2 + $0xa8] sm:$0xff] %vm1187, %v1134
        %1210 = vst.msk [vmem:[#allocation2 + $0xb0] sm:$0xff] %vm1187, %v1136
        %1211 = vst.msk [vmem:[#allocation2 + $0xb8] sm:$0xff] %vm1187, %v1138
        %1212 = vst.msk [vmem:[#allocation2 + $0xc0] sm:$0xff] %vm1187, %v1140
        %1213 = vst.msk [vmem:[#allocation2 + $0xc8] sm:$0xff] %vm1187, %v1142
        %1214 = vst.msk [vmem:[#allocation2 + $0xd0] sm:$0xff] %vm1187, %v1144
        %1215 = vst.msk [vmem:[#allocation2 + $0xd8] sm:$0xff] %vm1187, %v1146
        %1216 = vst.msk [vmem:[#allocation2 + $0xe0] sm:$0xff] %vm1187, %v1148
        %1217 = vst.msk [vmem:[#allocation2 + $0xe8] sm:$0xff] %vm1187, %v1150
        %1218 = vst.msk [vmem:[#allocation2 + $0xf0] sm:$0xff] %vm1187, %v1152
        %1219 = vst.msk [vmem:[#allocation2 + $0xf8] sm:$0xff] %vm1187, %v1154
        %s1220 = sadd.s32 %s184, 2
        %s1221 = smul.u32 %s1220, 24
        %s1222 = scalar_lea.vmem %s182, %s1221
        %v1223 = vld [vmem:[%s1222] sm:$0xff]
        %v1224 = vld [vmem:[%s1222 + $0x8] sm:$0xff]
        %v1225 = vld [vmem:[%s1222 + $0x18] sm:$0xff]
        %v1226 = vld [vmem:[%s1222 + $0x20] sm:$0xff]
        %v1227 = vld [vmem:[%s1222 + $0x30] sm:$0xff]
        %v1228 = vld [vmem:[%s1222 + $0x38] sm:$0xff]
        %v1229 = vld [vmem:[%s1222 + $0x48] sm:$0xff]
        %v1230 = vld [vmem:[%s1222 + $0x50] sm:$0xff]
        %v1231 = vld [vmem:[%s1222 + $0x60] sm:$0xff]
        %v1232 = vld [vmem:[%s1222 + $0x68] sm:$0xff]
        %v1233 = vld [vmem:[%s1222 + $0x78] sm:$0xff]
        %v1234 = vld [vmem:[%s1222 + $0x80] sm:$0xff]
        %v1235 = vld [vmem:[%s1222 + $0x90] sm:$0xff]
        %v1236 = vld [vmem:[%s1222 + $0x98] sm:$0xff]
        %v1237 = vld [vmem:[%s1222 + $0xa8] sm:$0xff]
        %v1238 = vld [vmem:[%s1222 + $0xb0] sm:$0xff]
        %v1239 = vld [vmem:[%s1222 + $0xc0] sm:$0xff]
        %v1240 = vld [vmem:[%s1222 + $0xc8] sm:$0xff]
        %v1241 = vld [vmem:[%s1222 + $0xd8] sm:$0xff]
        %v1242 = vld [vmem:[%s1222 + $0xe0] sm:$0xff]
        %v1243 = vld [vmem:[%s1222 + $0xf0] sm:$0xff]
        %v1244 = vld [vmem:[%s1222 + $0xf8] sm:$0xff]
        %v1245 = vld [vmem:[%s1222 + $0x108] sm:$0xff]
        %v1246 = vld [vmem:[%s1222 + $0x110] sm:$0xff]
        %v1247 = vld [vmem:[%s1222 + $0x120] sm:$0xff]
        %v1248 = vld [vmem:[%s1222 + $0x128] sm:$0xff]
        %v1249 = vld [vmem:[%s1222 + $0x138] sm:$0xff]
        %v1250 = vld [vmem:[%s1222 + $0x140] sm:$0xff]
        %v1251 = vld [vmem:[%s1222 + $0x150] sm:$0xff]
        %v1252 = vld [vmem:[%s1222 + $0x158] sm:$0xff]
        %v1253 = vld [vmem:[%s1222 + $0x168] sm:$0xff]
        %v1254 = vld [vmem:[%s1222 + $0x170] sm:$0xff]
        %1287 = vrot.lane.b32.xlu0 %v1223, 48
        %v1288 = vpop.permute.xlu0 %1287
        %1289 = vrot.lane.b32.xlu0 %v1224, 48
        %v1290 = vpop.permute.xlu0 %1289
        %1291 = vrot.lane.b32.xlu0 %v1225, 48
        %v1292 = vpop.permute.xlu0 %1291
        %1293 = vrot.lane.b32.xlu0 %v1226, 48
        %v1294 = vpop.permute.xlu0 %1293
        %1295 = vrot.lane.b32.xlu0 %v1227, 48
        %v1296 = vpop.permute.xlu0 %1295
        %1297 = vrot.lane.b32.xlu0 %v1228, 48
        %v1298 = vpop.permute.xlu0 %1297
        %1299 = vrot.lane.b32.xlu0 %v1229, 48
        %v1300 = vpop.permute.xlu0 %1299
        %1301 = vrot.lane.b32.xlu0 %v1230, 48
        %v1302 = vpop.permute.xlu0 %1301
        %1303 = vrot.lane.b32.xlu0 %v1231, 48
        %v1304 = vpop.permute.xlu0 %1303
        %1305 = vrot.lane.b32.xlu0 %v1232, 48
        %v1306 = vpop.permute.xlu0 %1305
        %1307 = vrot.lane.b32.xlu0 %v1233, 48
        %v1308 = vpop.permute.xlu0 %1307
        %1309 = vrot.lane.b32.xlu0 %v1234, 48
        %v1310 = vpop.permute.xlu0 %1309
        %1311 = vrot.lane.b32.xlu0 %v1235, 48
        %v1312 = vpop.permute.xlu0 %1311
        %1313 = vrot.lane.b32.xlu0 %v1236, 48
        %v1314 = vpop.permute.xlu0 %1313
        %1315 = vrot.lane.b32.xlu0 %v1237, 48
        %v1316 = vpop.permute.xlu0 %1315
        %1317 = vrot.lane.b32.xlu0 %v1238, 48
        %v1318 = vpop.permute.xlu0 %1317
        %1319 = vrot.lane.b32.xlu0 %v1239, 48
        %v1320 = vpop.permute.xlu0 %1319
        %1321 = vrot.lane.b32.xlu0 %v1240, 48
        %v1322 = vpop.permute.xlu0 %1321
        %1323 = vrot.lane.b32.xlu0 %v1241, 48
        %v1324 = vpop.permute.xlu0 %1323
        %1325 = vrot.lane.b32.xlu0 %v1242, 48
        %v1326 = vpop.permute.xlu0 %1325
        %1327 = vrot.lane.b32.xlu0 %v1243, 48
        %v1328 = vpop.permute.xlu0 %1327
        %1329 = vrot.lane.b32.xlu0 %v1244, 48
        %v1330 = vpop.permute.xlu0 %1329
        %1331 = vrot.lane.b32.xlu0 %v1245, 48
        %v1332 = vpop.permute.xlu0 %1331
        %1333 = vrot.lane.b32.xlu0 %v1246, 48
        %v1334 = vpop.permute.xlu0 %1333
        %1335 = vrot.lane.b32.xlu0 %v1247, 48
        %v1336 = vpop.permute.xlu0 %1335
        %1337 = vrot.lane.b32.xlu0 %v1248, 48
        %v1338 = vpop.permute.xlu0 %1337
        %1339 = vrot.lane.b32.xlu0 %v1249, 48
        %v1340 = vpop.permute.xlu0 %1339
        %1341 = vrot.lane.b32.xlu0 %v1250, 48
        %v1342 = vpop.permute.xlu0 %1341
        %1343 = vrot.lane.b32.xlu0 %v1251, 48
        %v1344 = vpop.permute.xlu0 %1343
        %1345 = vrot.lane.b32.xlu0 %v1252, 48
        %v1346 = vpop.permute.xlu0 %1345
        %1347 = vrot.lane.b32.xlu0 %v1253, 48
        %v1348 = vpop.permute.xlu0 %1347
        %1349 = vrot.lane.b32.xlu0 %v1254, 48
        %v1350 = vpop.permute.xlu0 %1349
        %vm1383 = vcmask 458112
        %1384 = vst.msk [vmem:[#allocation2] sm:$0xff] %vm1383, %v1288
        %1385 = vst.msk [vmem:[#allocation2 + $0x8] sm:$0xff] %vm1383, %v1290
        %1386 = vst.msk [vmem:[#allocation2 + $0x10] sm:$0xff] %vm1383, %v1292
        %1387 = vst.msk [vmem:[#allocation2 + $0x18] sm:$0xff] %vm1383, %v1294
        %1388 = vst.msk [vmem:[#allocation2 + $0x20] sm:$0xff] %vm1383, %v1296
        %1389 = vst.msk [vmem:[#allocation2 + $0x28] sm:$0xff] %vm1383, %v1298
        %1390 = vst.msk [vmem:[#allocation2 + $0x30] sm:$0xff] %vm1383, %v1300
        %1391 = vst.msk [vmem:[#allocation2 + $0x38] sm:$0xff] %vm1383, %v1302
        %1392 = vst.msk [vmem:[#allocation2 + $0x40] sm:$0xff] %vm1383, %v1304
        %1393 = vst.msk [vmem:[#allocation2 + $0x48] sm:$0xff] %vm1383, %v1306
        %1394 = vst.msk [vmem:[#allocation2 + $0x50] sm:$0xff] %vm1383, %v1308
        %1395 = vst.msk [vmem:[#allocation2 + $0x58] sm:$0xff] %vm1383, %v1310
        %1396 = vst.msk [vmem:[#allocation2 + $0x60] sm:$0xff] %vm1383, %v1312
        %1397 = vst.msk [vmem:[#allocation2 + $0x68] sm:$0xff] %vm1383, %v1314
        %1398 = vst.msk [vmem:[#allocation2 + $0x70] sm:$0xff] %vm1383, %v1316
        %1399 = vst.msk [vmem:[#allocation2 + $0x78] sm:$0xff] %vm1383, %v1318
        %1400 = vst.msk [vmem:[#allocation2 + $0x80] sm:$0xff] %vm1383, %v1320
        %1401 = vst.msk [vmem:[#allocation2 + $0x88] sm:$0xff] %vm1383, %v1322
        %1402 = vst.msk [vmem:[#allocation2 + $0x90] sm:$0xff] %vm1383, %v1324
        %1403 = vst.msk [vmem:[#allocation2 + $0x98] sm:$0xff] %vm1383, %v1326
        %1404 = vst.msk [vmem:[#allocation2 + $0xa0] sm:$0xff] %vm1383, %v1328
        %1405 = vst.msk [vmem:[#allocation2 + $0xa8] sm:$0xff] %vm1383, %v1330
        %1406 = vst.msk [vmem:[#allocation2 + $0xb0] sm:$0xff] %vm1383, %v1332
        %1407 = vst.msk [vmem:[#allocation2 + $0xb8] sm:$0xff] %vm1383, %v1334
        %1408 = vst.msk [vmem:[#allocation2 + $0xc0] sm:$0xff] %vm1383, %v1336
        %1409 = vst.msk [vmem:[#allocation2 + $0xc8] sm:$0xff] %vm1383, %v1338
        %1410 = vst.msk [vmem:[#allocation2 + $0xd0] sm:$0xff] %vm1383, %v1340
        %1411 = vst.msk [vmem:[#allocation2 + $0xd8] sm:$0xff] %vm1383, %v1342
        %1412 = vst.msk [vmem:[#allocation2 + $0xe0] sm:$0xff] %vm1383, %v1344
        %1413 = vst.msk [vmem:[#allocation2 + $0xe8] sm:$0xff] %vm1383, %v1346
        %1414 = vst.msk [vmem:[#allocation2 + $0xf0] sm:$0xff] %vm1383, %v1348
        %1415 = vst.msk [vmem:[#allocation2 + $0xf8] sm:$0xff] %vm1383, %v1350
        %v1416 = vld [vmem:[%s1222 + $0x1] sm:$0xff]
        %v1417 = vld [vmem:[%s1222 + $0x9] sm:$0xff]
        %v1418 = vld [vmem:[%s1222 + $0x19] sm:$0xff]
        %v1419 = vld [vmem:[%s1222 + $0x21] sm:$0xff]
        %v1420 = vld [vmem:[%s1222 + $0x31] sm:$0xff]
        %v1421 = vld [vmem:[%s1222 + $0x39] sm:$0xff]
        %v1422 = vld [vmem:[%s1222 + $0x49] sm:$0xff]
        %v1423 = vld [vmem:[%s1222 + $0x51] sm:$0xff]
        %v1424 = vld [vmem:[%s1222 + $0x61] sm:$0xff]
        %v1425 = vld [vmem:[%s1222 + $0x69] sm:$0xff]
        %v1426 = vld [vmem:[%s1222 + $0x79] sm:$0xff]
        %v1427 = vld [vmem:[%s1222 + $0x81] sm:$0xff]
        %v1428 = vld [vmem:[%s1222 + $0x91] sm:$0xff]
        %v1429 = vld [vmem:[%s1222 + $0x99] sm:$0xff]
        %v1430 = vld [vmem:[%s1222 + $0xa9] sm:$0xff]
        %v1431 = vld [vmem:[%s1222 + $0xb1] sm:$0xff]
        %v1432 = vld [vmem:[%s1222 + $0xc1] sm:$0xff]
        %v1433 = vld [vmem:[%s1222 + $0xc9] sm:$0xff]
        %v1434 = vld [vmem:[%s1222 + $0xd9] sm:$0xff]
        %v1435 = vld [vmem:[%s1222 + $0xe1] sm:$0xff]
        %v1436 = vld [vmem:[%s1222 + $0xf1] sm:$0xff]
        %v1437 = vld [vmem:[%s1222 + $0xf9] sm:$0xff]
        %v1438 = vld [vmem:[%s1222 + $0x109] sm:$0xff]
        %v1439 = vld [vmem:[%s1222 + $0x111] sm:$0xff]
        %v1440 = vld [vmem:[%s1222 + $0x121] sm:$0xff]
        %v1441 = vld [vmem:[%s1222 + $0x129] sm:$0xff]
        %v1442 = vld [vmem:[%s1222 + $0x139] sm:$0xff]
        %v1443 = vld [vmem:[%s1222 + $0x141] sm:$0xff]
        %v1444 = vld [vmem:[%s1222 + $0x151] sm:$0xff]
        %v1445 = vld [vmem:[%s1222 + $0x159] sm:$0xff]
        %v1446 = vld [vmem:[%s1222 + $0x169] sm:$0xff]
        %v1447 = vld [vmem:[%s1222 + $0x171] sm:$0xff]
        %1480 = vrot.lane.b32.xlu0 %v1416, 56
        %v1481 = vpop.permute.xlu0 %1480
        %1482 = vrot.lane.b32.xlu0 %v1417, 56
        %v1483 = vpop.permute.xlu0 %1482
        %1484 = vrot.lane.b32.xlu0 %v1418, 56
        %v1485 = vpop.permute.xlu0 %1484
        %1486 = vrot.lane.b32.xlu0 %v1419, 56
        %v1487 = vpop.permute.xlu0 %1486
        %1488 = vrot.lane.b32.xlu0 %v1420, 56
        %v1489 = vpop.permute.xlu0 %1488
        %1490 = vrot.lane.b32.xlu0 %v1421, 56
        %v1491 = vpop.permute.xlu0 %1490
        %1492 = vrot.lane.b32.xlu0 %v1422, 56
        %v1493 = vpop.permute.xlu0 %1492
        %1494 = vrot.lane.b32.xlu0 %v1423, 56
        %v1495 = vpop.permute.xlu0 %1494
        %1496 = vrot.lane.b32.xlu0 %v1424, 56
        %v1497 = vpop.permute.xlu0 %1496
        %1498 = vrot.lane.b32.xlu0 %v1425, 56
        %v1499 = vpop.permute.xlu0 %1498
        %1500 = vrot.lane.b32.xlu0 %v1426, 56
        %v1501 = vpop.permute.xlu0 %1500
        %1502 = vrot.lane.b32.xlu0 %v1427, 56
        %v1503 = vpop.permute.xlu0 %1502
        %1504 = vrot.lane.b32.xlu0 %v1428, 56
        %v1505 = vpop.permute.xlu0 %1504
        %1506 = vrot.lane.b32.xlu0 %v1429, 56
        %v1507 = vpop.permute.xlu0 %1506
        %1508 = vrot.lane.b32.xlu0 %v1430, 56
        %v1509 = vpop.permute.xlu0 %1508
        %1510 = vrot.lane.b32.xlu0 %v1431, 56
        %v1511 = vpop.permute.xlu0 %1510
        %1512 = vrot.lane.b32.xlu0 %v1432, 56
        %v1513 = vpop.permute.xlu0 %1512
        %1514 = vrot.lane.b32.xlu0 %v1433, 56
        %v1515 = vpop.permute.xlu0 %1514
        %1516 = vrot.lane.b32.xlu0 %v1434, 56
        %v1517 = vpop.permute.xlu0 %1516
        %1518 = vrot.lane.b32.xlu0 %v1435, 56
        %v1519 = vpop.permute.xlu0 %1518
        %1520 = vrot.lane.b32.xlu0 %v1436, 56
        %v1521 = vpop.permute.xlu0 %1520
        %1522 = vrot.lane.b32.xlu0 %v1437, 56
        %v1523 = vpop.permute.xlu0 %1522
        %1524 = vrot.lane.b32.xlu0 %v1438, 56
        %v1525 = vpop.permute.xlu0 %1524
        %1526 = vrot.lane.b32.xlu0 %v1439, 56
        %v1527 = vpop.permute.xlu0 %1526
        %1528 = vrot.lane.b32.xlu0 %v1440, 56
        %v1529 = vpop.permute.xlu0 %1528
        %1530 = vrot.lane.b32.xlu0 %v1441, 56
        %v1531 = vpop.permute.xlu0 %1530
        %1532 = vrot.lane.b32.xlu0 %v1442, 56
        %v1533 = vpop.permute.xlu0 %1532
        %1534 = vrot.lane.b32.xlu0 %v1443, 56
        %v1535 = vpop.permute.xlu0 %1534
        %1536 = vrot.lane.b32.xlu0 %v1444, 56
        %v1537 = vpop.permute.xlu0 %1536
        %1538 = vrot.lane.b32.xlu0 %v1445, 56
        %v1539 = vpop.permute.xlu0 %1538
        %1540 = vrot.lane.b32.xlu0 %v1446, 56
        %v1541 = vpop.permute.xlu0 %1540
        %1542 = vrot.lane.b32.xlu0 %v1447, 56
        %v1543 = vpop.permute.xlu0 %1542
        %vm1576 = vcmask 523712
        %1577 = vst.msk [vmem:[#allocation2] sm:$0xff] %vm1576, %v1481
        %1578 = vst.msk [vmem:[#allocation2 + $0x8] sm:$0xff] %vm1576, %v1483
        %1579 = vst.msk [vmem:[#allocation2 + $0x10] sm:$0xff] %vm1576, %v1485
        %1580 = vst.msk [vmem:[#allocation2 + $0x18] sm:$0xff] %vm1576, %v1487
        %1581 = vst.msk [vmem:[#allocation2 + $0x20] sm:$0xff] %vm1576, %v1489
        %1582 = vst.msk [vmem:[#allocation2 + $0x28] sm:$0xff] %vm1576, %v1491
        %1583 = vst.msk [vmem:[#allocation2 + $0x30] sm:$0xff] %vm1576, %v1493
        %1584 = vst.msk [vmem:[#allocation2 + $0x38] sm:$0xff] %vm1576, %v1495
        %1585 = vst.msk [vmem:[#allocation2 + $0x40] sm:$0xff] %vm1576, %v1497
        %1586 = vst.msk [vmem:[#allocation2 + $0x48] sm:$0xff] %vm1576, %v1499
        %1587 = vst.msk [vmem:[#allocation2 + $0x50] sm:$0xff] %vm1576, %v1501
        %1588 = vst.msk [vmem:[#allocation2 + $0x58] sm:$0xff] %vm1576, %v1503
        %1589 = vst.msk [vmem:[#allocation2 + $0x60] sm:$0xff] %vm1576, %v1505
        %1590 = vst.msk [vmem:[#allocation2 + $0x68] sm:$0xff] %vm1576, %v1507
        %1591 = vst.msk [vmem:[#allocation2 + $0x70] sm:$0xff] %vm1576, %v1509
        %1592 = vst.msk [vmem:[#allocation2 + $0x78] sm:$0xff] %vm1576, %v1511
        %1593 = vst.msk [vmem:[#allocation2 + $0x80] sm:$0xff] %vm1576, %v1513
        %1594 = vst.msk [vmem:[#allocation2 + $0x88] sm:$0xff] %vm1576, %v1515
        %1595 = vst.msk [vmem:[#allocation2 + $0x90] sm:$0xff] %vm1576, %v1517
        %1596 = vst.msk [vmem:[#allocation2 + $0x98] sm:$0xff] %vm1576, %v1519
        %1597 = vst.msk [vmem:[#allocation2 + $0xa0] sm:$0xff] %vm1576, %v1521
        %1598 = vst.msk [vmem:[#allocation2 + $0xa8] sm:$0xff] %vm1576, %v1523
        %1599 = vst.msk [vmem:[#allocation2 + $0xb0] sm:$0xff] %vm1576, %v1525
        %1600 = vst.msk [vmem:[#allocation2 + $0xb8] sm:$0xff] %vm1576, %v1527
        %1601 = vst.msk [vmem:[#allocation2 + $0xc0] sm:$0xff] %vm1576, %v1529
        %1602 = vst.msk [vmem:[#allocation2 + $0xc8] sm:$0xff] %vm1576, %v1531
        %1603 = vst.msk [vmem:[#allocation2 + $0xd0] sm:$0xff] %vm1576, %v1533
        %1604 = vst.msk [vmem:[#allocation2 + $0xd8] sm:$0xff] %vm1576, %v1535
        %1605 = vst.msk [vmem:[#allocation2 + $0xe0] sm:$0xff] %vm1576, %v1537
        %1606 = vst.msk [vmem:[#allocation2 + $0xe8] sm:$0xff] %vm1576, %v1539
        %1607 = vst.msk [vmem:[#allocation2 + $0xf0] sm:$0xff] %vm1576, %v1541
        %1608 = vst.msk [vmem:[#allocation2 + $0xf8] sm:$0xff] %vm1576, %v1543
        %v1609 = vld [vmem:[%s1222 + $0x2] sm:$0xff]
        %v1610 = vld [vmem:[%s1222 + $0xa] sm:$0xff]
        %v1611 = vld [vmem:[%s1222 + $0x1a] sm:$0xff]
        %v1612 = vld [vmem:[%s1222 + $0x22] sm:$0xff]
        %v1613 = vld [vmem:[%s1222 + $0x32] sm:$0xff]
        %v1614 = vld [vmem:[%s1222 + $0x3a] sm:$0xff]
        %v1615 = vld [vmem:[%s1222 + $0x4a] sm:$0xff]
        %v1616 = vld [vmem:[%s1222 + $0x52] sm:$0xff]
        %v1617 = vld [vmem:[%s1222 + $0x62] sm:$0xff]
        %v1618 = vld [vmem:[%s1222 + $0x6a] sm:$0xff]
        %v1619 = vld [vmem:[%s1222 + $0x7a] sm:$0xff]
        %v1620 = vld [vmem:[%s1222 + $0x82] sm:$0xff]
        %v1621 = vld [vmem:[%s1222 + $0x92] sm:$0xff]
        %v1622 = vld [vmem:[%s1222 + $0x9a] sm:$0xff]
        %v1623 = vld [vmem:[%s1222 + $0xaa] sm:$0xff]
        %v1624 = vld [vmem:[%s1222 + $0xb2] sm:$0xff]
        %v1625 = vld [vmem:[%s1222 + $0xc2] sm:$0xff]
        %v1626 = vld [vmem:[%s1222 + $0xca] sm:$0xff]
        %v1627 = vld [vmem:[%s1222 + $0xda] sm:$0xff]
        %v1628 = vld [vmem:[%s1222 + $0xe2] sm:$0xff]
        %v1629 = vld [vmem:[%s1222 + $0xf2] sm:$0xff]
        %v1630 = vld [vmem:[%s1222 + $0xfa] sm:$0xff]
        %v1631 = vld [vmem:[%s1222 + $0x10a] sm:$0xff]
        %v1632 = vld [vmem:[%s1222 + $0x112] sm:$0xff]
        %v1633 = vld [vmem:[%s1222 + $0x122] sm:$0xff]
        %v1634 = vld [vmem:[%s1222 + $0x12a] sm:$0xff]
        %v1635 = vld [vmem:[%s1222 + $0x13a] sm:$0xff]
        %v1636 = vld [vmem:[%s1222 + $0x142] sm:$0xff]
        %v1637 = vld [vmem:[%s1222 + $0x152] sm:$0xff]
        %v1638 = vld [vmem:[%s1222 + $0x15a] sm:$0xff]
        %v1639 = vld [vmem:[%s1222 + $0x16a] sm:$0xff]
        %v1640 = vld [vmem:[%s1222 + $0x172] sm:$0xff]
        %1673 = vrot.lane.b32.xlu0 %v1609, 64
        %v1674 = vpop.permute.xlu0 %1673
        %1675 = vrot.lane.b32.xlu0 %v1610, 64
        %v1676 = vpop.permute.xlu0 %1675
        %1677 = vrot.lane.b32.xlu0 %v1611, 64
        %v1678 = vpop.permute.xlu0 %1677
        %1679 = vrot.lane.b32.xlu0 %v1612, 64
        %v1680 = vpop.permute.xlu0 %1679
        %1681 = vrot.lane.b32.xlu0 %v1613, 64
        %v1682 = vpop.permute.xlu0 %1681
        %1683 = vrot.lane.b32.xlu0 %v1614, 64
        %v1684 = vpop.permute.xlu0 %1683
        %1685 = vrot.lane.b32.xlu0 %v1615, 64
        %v1686 = vpop.permute.xlu0 %1685
        %1687 = vrot.lane.b32.xlu0 %v1616, 64
        %v1688 = vpop.permute.xlu0 %1687
        %1689 = vrot.lane.b32.xlu0 %v1617, 64
        %v1690 = vpop.permute.xlu0 %1689
        %1691 = vrot.lane.b32.xlu0 %v1618, 64
        %v1692 = vpop.permute.xlu0 %1691
        %1693 = vrot.lane.b32.xlu0 %v1619, 64
        %v1694 = vpop.permute.xlu0 %1693
        %1695 = vrot.lane.b32.xlu0 %v1620, 64
        %v1696 = vpop.permute.xlu0 %1695
        %1697 = vrot.lane.b32.xlu0 %v1621, 64
        %v1698 = vpop.permute.xlu0 %1697
        %1699 = vrot.lane.b32.xlu0 %v1622, 64
        %v1700 = vpop.permute.xlu0 %1699
        %1701 = vrot.lane.b32.xlu0 %v1623, 64
        %v1702 = vpop.permute.xlu0 %1701
        %1703 = vrot.lane.b32.xlu0 %v1624, 64
        %v1704 = vpop.permute.xlu0 %1703
        %1705 = vrot.lane.b32.xlu0 %v1625, 64
        %v1706 = vpop.permute.xlu0 %1705
        %1707 = vrot.lane.b32.xlu0 %v1626, 64
        %v1708 = vpop.permute.xlu0 %1707
        %1709 = vrot.lane.b32.xlu0 %v1627, 64
        %v1710 = vpop.permute.xlu0 %1709
        %1711 = vrot.lane.b32.xlu0 %v1628, 64
        %v1712 = vpop.permute.xlu0 %1711
        %1713 = vrot.lane.b32.xlu0 %v1629, 64
        %v1714 = vpop.permute.xlu0 %1713
        %1715 = vrot.lane.b32.xlu0 %v1630, 64
        %v1716 = vpop.permute.xlu0 %1715
        %1717 = vrot.lane.b32.xlu0 %v1631, 64
        %v1718 = vpop.permute.xlu0 %1717
        %1719 = vrot.lane.b32.xlu0 %v1632, 64
        %v1720 = vpop.permute.xlu0 %1719
        %1721 = vrot.lane.b32.xlu0 %v1633, 64
        %v1722 = vpop.permute.xlu0 %1721
        %1723 = vrot.lane.b32.xlu0 %v1634, 64
        %v1724 = vpop.permute.xlu0 %1723
        %1725 = vrot.lane.b32.xlu0 %v1635, 64
        %v1726 = vpop.permute.xlu0 %1725
        %1727 = vrot.lane.b32.xlu0 %v1636, 64
        %v1728 = vpop.permute.xlu0 %1727
        %1729 = vrot.lane.b32.xlu0 %v1637, 64
        %v1730 = vpop.permute.xlu0 %1729
        %1731 = vrot.lane.b32.xlu0 %v1638, 64
        %v1732 = vpop.permute.xlu0 %1731
        %1733 = vrot.lane.b32.xlu0 %v1639, 64
        %v1734 = vpop.permute.xlu0 %1733
        %1735 = vrot.lane.b32.xlu0 %v1640, 64
        %v1736 = vpop.permute.xlu0 %1735
        %vm1769 = vcmask 589312
        %1770 = vst.msk [vmem:[#allocation2] sm:$0xff] %vm1769, %v1674
        %1771 = vst.msk [vmem:[#allocation2 + $0x8] sm:$0xff] %vm1769, %v1676
        %1772 = vst.msk [vmem:[#allocation2 + $0x10] sm:$0xff] %vm1769, %v1678
        %1773 = vst.msk [vmem:[#allocation2 + $0x18] sm:$0xff] %vm1769, %v1680
        %1774 = vst.msk [vmem:[#allocation2 + $0x20] sm:$0xff] %vm1769, %v1682
        %1775 = vst.msk [vmem:[#allocation2 + $0x28] sm:$0xff] %vm1769, %v1684
        %1776 = vst.msk [vmem:[#allocation2 + $0x30] sm:$0xff] %vm1769, %v1686
        %1777 = vst.msk [vmem:[#allocation2 + $0x38] sm:$0xff] %vm1769, %v1688
        %1778 = vst.msk [vmem:[#allocation2 + $0x40] sm:$0xff] %vm1769, %v1690
        %1779 = vst.msk [vmem:[#allocation2 + $0x48] sm:$0xff] %vm1769, %v1692
        %1780 = vst.msk [vmem:[#allocation2 + $0x50] sm:$0xff] %vm1769, %v1694
        %1781 = vst.msk [vmem:[#allocation2 + $0x58] sm:$0xff] %vm1769, %v1696
        %1782 = vst.msk [vmem:[#allocation2 + $0x60] sm:$0xff] %vm1769, %v1698
        %1783 = vst.msk [vmem:[#allocation2 + $0x68] sm:$0xff] %vm1769, %v1700
        %1784 = vst.msk [vmem:[#allocation2 + $0x70] sm:$0xff] %vm1769, %v1702
        %1785 = vst.msk [vmem:[#allocation2 + $0x78] sm:$0xff] %vm1769, %v1704
        %1786 = vst.msk [vmem:[#allocation2 + $0x80] sm:$0xff] %vm1769, %v1706
        %1787 = vst.msk [vmem:[#allocation2 + $0x88] sm:$0xff] %vm1769, %v1708
        %1788 = vst.msk [vmem:[#allocation2 + $0x90] sm:$0xff] %vm1769, %v1710
        %1789 = vst.msk [vmem:[#allocation2 + $0x98] sm:$0xff] %vm1769, %v1712
        %1790 = vst.msk [vmem:[#allocation2 + $0xa0] sm:$0xff] %vm1769, %v1714
        %1791 = vst.msk [vmem:[#allocation2 + $0xa8] sm:$0xff] %vm1769, %v1716
        %1792 = vst.msk [vmem:[#allocation2 + $0xb0] sm:$0xff] %vm1769, %v1718
        %1793 = vst.msk [vmem:[#allocation2 + $0xb8] sm:$0xff] %vm1769, %v1720
        %1794 = vst.msk [vmem:[#allocation2 + $0xc0] sm:$0xff] %vm1769, %v1722
        %1795 = vst.msk [vmem:[#allocation2 + $0xc8] sm:$0xff] %vm1769, %v1724
        %1796 = vst.msk [vmem:[#allocation2 + $0xd0] sm:$0xff] %vm1769, %v1726
        %1797 = vst.msk [vmem:[#allocation2 + $0xd8] sm:$0xff] %vm1769, %v1728
        %1798 = vst.msk [vmem:[#allocation2 + $0xe0] sm:$0xff] %vm1769, %v1730
        %1799 = vst.msk [vmem:[#allocation2 + $0xe8] sm:$0xff] %vm1769, %v1732
        %1800 = vst.msk [vmem:[#allocation2 + $0xf0] sm:$0xff] %vm1769, %v1734
        %1801 = vst.msk [vmem:[#allocation2 + $0xf8] sm:$0xff] %vm1769, %v1736
        %v1802 = vld [vmem:[#allocation2] sm:$0xff]
        %v1803 = vld [vmem:[#allocation2 + $0x8] sm:$0xff]
        %v1804 = vld [vmem:[#allocation2 + $0x10] sm:$0xff]
        %v1805 = vld [vmem:[#allocation2 + $0x18] sm:$0xff]
        %v1806 = vld [vmem:[#allocation2 + $0x20] sm:$0xff]
        %v1807 = vld [vmem:[#allocation2 + $0x28] sm:$0xff]
        %v1808 = vld [vmem:[#allocation2 + $0x30] sm:$0xff]
        %v1809 = vld [vmem:[#allocation2 + $0x38] sm:$0xff]
        %v1810 = vld [vmem:[#allocation2 + $0x40] sm:$0xff]
        %v1811 = vld [vmem:[#allocation2 + $0x48] sm:$0xff]
        %v1812 = vld [vmem:[#allocation2 + $0x50] sm:$0xff]
        %v1813 = vld [vmem:[#allocation2 + $0x58] sm:$0xff]
        %v1814 = vld [vmem:[#allocation2 + $0x60] sm:$0xff]
        %v1815 = vld [vmem:[#allocation2 + $0x68] sm:$0xff]
        %v1816 = vld [vmem:[#allocation2 + $0x70] sm:$0xff]
        %v1817 = vld [vmem:[#allocation2 + $0x78] sm:$0xff]
        %v1818 = vld [vmem:[#allocation2 + $0x80] sm:$0xff]
        %v1819 = vld [vmem:[#allocation2 + $0x88] sm:$0xff]
        %v1820 = vld [vmem:[#allocation2 + $0x90] sm:$0xff]
        %v1821 = vld [vmem:[#allocation2 + $0x98] sm:$0xff]
        %v1822 = vld [vmem:[#allocation2 + $0xa0] sm:$0xff]
        %v1823 = vld [vmem:[#allocation2 + $0xa8] sm:$0xff]
        %v1824 = vld [vmem:[#allocation2 + $0xb0] sm:$0xff]
        %v1825 = vld [vmem:[#allocation2 + $0xb8] sm:$0xff]
        %v1826 = vld [vmem:[#allocation2 + $0xc0] sm:$0xff]
        %v1827 = vld [vmem:[#allocation2 + $0xc8] sm:$0xff]
        %v1828 = vld [vmem:[#allocation2 + $0xd0] sm:$0xff]
        %v1829 = vld [vmem:[#allocation2 + $0xd8] sm:$0xff]
        %v1830 = vld [vmem:[#allocation2 + $0xe0] sm:$0xff]
        %v1831 = vld [vmem:[#allocation2 + $0xe8] sm:$0xff]
        %v1832 = vld [vmem:[#allocation2 + $0xf0] sm:$0xff]
        %v1833 = vld [vmem:[#allocation2 + $0xf8] sm:$0xff]
        %v1834 = vld [vmem:[%s1] sm:$0xff]
        %v1835 = vld [vmem:[%s1 + $0x8] sm:$0xff]
        %v1836 = vld [vmem:[%s1 + $0x10] sm:$0xff]
        %v1837 = vld [vmem:[%s1 + $0x18] sm:$0xff]
        %v1838 = vld [vmem:[%s1 + $0x20] sm:$0xff]
        %v1839 = vld [vmem:[%s1 + $0x28] sm:$0xff]
        %v1840 = vld [vmem:[%s1 + $0x30] sm:$0xff]
        %v1841 = vld [vmem:[%s1 + $0x38] sm:$0xff]
        %v1842 = vld [vmem:[%s1 + $0x40] sm:$0xff]
        %v1843 = vld [vmem:[%s2] sm:$0x1]
        %v1845 = vlaneseq
        %v1846 = vshrl.u32 %v1845, 7
        %v1847 = vsub.s32 0, %v1846
        %v1848 = vrot.slane %v1843, %v1847
        %vm1850 = vcmask 588800
        %v1852 = vsel %vm1850, %v1802, 0
        %v1855 = vsel %vm1850, %v1803, 0
        %v1858 = vsel %vm1850, %v1804, 0
        %v1861 = vsel %vm1850, %v1805, 0
        %v1864 = vsel %vm1850, %v1806, 0
        %v1867 = vsel %vm1850, %v1807, 0
        %v1870 = vsel %vm1850, %v1808, 0
        %v1873 = vsel %vm1850, %v1809, 0
        %v1876 = vsel %vm1850, %v1810, 0
        %v1879 = vsel %vm1850, %v1811, 0
        %v1882 = vsel %vm1850, %v1812, 0
        %v1885 = vsel %vm1850, %v1813, 0
        %v1888 = vsel %vm1850, %v1814, 0
        %v1891 = vsel %vm1850, %v1815, 0
        %v1894 = vsel %vm1850, %v1816, 0
        %v1897 = vsel %vm1850, %v1817, 0
        %v1900 = vsel %vm1850, %v1818, 0
        %v1903 = vsel %vm1850, %v1819, 0
        %v1906 = vsel %vm1850, %v1820, 0
        %v1909 = vsel %vm1850, %v1821, 0
        %v1912 = vsel %vm1850, %v1822, 0
        %v1915 = vsel %vm1850, %v1823, 0
        %v1918 = vsel %vm1850, %v1824, 0
        %v1921 = vsel %vm1850, %v1825, 0
        %v1924 = vsel %vm1850, %v1826, 0
        %v1927 = vsel %vm1850, %v1827, 0
        %v1930 = vsel %vm1850, %v1828, 0
        %v1933 = vsel %vm1850, %v1829, 0
        %v1936 = vsel %vm1850, %v1830, 0
        %v1939 = vsel %vm1850, %v1831, 0
        %v1942 = vsel %vm1850, %v1832, 0
        %v1945 = vsel %vm1850, %v1833, 0
        %1947 = vmatprep.subr.mxu0 0.0
        %1948 = vmatpush1.msra.mxu0 %v1834
        %1949 = vmatprep.subr.mxu0 0.0
        %1950 = vmatpush1.msra.mxu0 %v1835
        %1951 = vmatprep.subr.mxu0 0.0
        %1952 = vmatpush1.msra.mxu0 %v1836
        %1953 = vmatprep.subr.mxu0 0.0
        %1954 = vmatpush1.msra.mxu0 %v1837
        %1955 = vmatprep.subr.mxu0 0.0
        %1956 = vmatpush1.msra.mxu0 %v1838
        %1957 = vmatprep.subr.mxu0 0.0
        %1958 = vmatpush1.msra.mxu0 %v1839
        %1959 = vmatprep.subr.mxu0 0.0
        %1960 = vmatpush1.msra.mxu0 %v1840
        %1961 = vmatprep.subr.mxu0 0.0
        %1962 = vmatpush1.msra.mxu0 %v1841
        %1963 = vmatprep.subr.mxu0 0.0
        %1964 = vmatpush1.msra.mxu0 %v1842
        %1965 = vmatprep.subr.mxu0 0.0
        %1966 = vmatpush1.msra.mxu0 0.0
        %1967 = vmatprep.subr.mxu0 0.0
        %1968 = vmatpush1.msra.mxu0 0.0
        %1969 = vmatprep.subr.mxu0 0.0
        %1970 = vmatpush1.msra.mxu0 0.0
        %1971 = vmatprep.subr.mxu0 0.0
        %1972 = vmatpush1.msra.mxu0 0.0
        %1973 = vmatprep.subr.mxu0 0.0
        %1974 = vmatpush1.msra.mxu0 0.0
        %1975 = vmatprep.subr.mxu0 0.0
        %1976 = vmatpush1.msra.mxu0 0.0
        %1977 = vmatprep.subr.mxu0 0.0
        %1978 = vmatpush1.msra.mxu0 0.0
        %1979 = vmatprep.subr.mxu0 0.0
        %1980 = vmatpush1.msra.mxu0 0.0
        %1981 = vmatprep.subr.mxu0 0.0
        %1982 = vmatpush1.msra.mxu0 0.0
        %1983 = vmatprep.subr.mxu0 0.0
        %1984 = vmatpush1.msra.mxu0 0.0
        %1985 = vmatprep.subr.mxu0 0.0
        %1986 = vmatpush1.msra.mxu0 0.0
        %1987 = vmatprep.subr.mxu0 0.0
        %1988 = vmatpush1.msra.mxu0 0.0
        %1989 = vmatprep.subr.mxu0 0.0
        %1990 = vmatpush1.msra.mxu0 0.0
        %1991 = vmatprep.subr.mxu0 0.0
        %1992 = vmatpush1.msra.mxu0 0.0
        %1993 = vmatprep.subr.mxu0 0.0
        %1994 = vmatpush1.msra.mxu0 0.0
        %1995 = vmatprep.subr.mxu0 0.0
        %1996 = vmatpush1.msra.mxu0 0.0
        %1997 = vmatprep.subr.mxu0 0.0
        %1998 = vmatpush1.msra.mxu0 0.0
        %1999 = vmatprep.subr.mxu0 0.0
        %2000 = vmatpush1.msra.mxu0 0.0
        %2001 = vmatprep.subr.mxu0 0.0
        %2002 = vmatpush1.msra.mxu0 0.0
        %2003 = vmatprep.subr.mxu0 0.0
        %2004 = vmatpush1.msra.mxu0 0.0
        %2005 = vmatprep.subr.mxu0 0.0
        %2006 = vmatpush1.msra.mxu0 0.0
        %2007 = vmatprep.subr.mxu0 0.0
        %2008 = vmatpush1.msra.mxu0 0.0
        %2009 = vmatprep.subr.mxu0 0.0
        %2010 = vmatpush1.msra.mxu0 0.0
        %2011 = vmatprep.mubr.f32.mxu0 0.0
        %2012 = vmatmul.mubr.f32.gmra.mrb[0].mxu0 %v1852
        %v2013 = vpop.f32.mrb[0].mxu0
        %v2014 = vadd.f32 %v1848, %v2013
        %v2015 = vpop.f32.mrb[0].mxu0
        %2016 = vmatprep.mubr.f32.mxu0 0.0
        %2017 = vmatmul.mubr.f32.gmra.mrb[0].mxu0 %v1855
        %v2018 = vpop.f32.mrb[0].mxu0
        %v2019 = vadd.f32 %v1848, %v2018
        %v2020 = vpop.f32.mrb[0].mxu0
        %2021 = vmatprep.mubr.f32.mxu0 0.0
        %2022 = vmatmul.mubr.f32.gmra.mrb[0].mxu0 %v1858
        %v2023 = vpop.f32.mrb[0].mxu0
        %v2024 = vadd.f32 %v1848, %v2023
        %v2025 = vpop.f32.mrb[0].mxu0
        %2026 = vmatprep.mubr.f32.mxu0 0.0
        %2027 = vmatmul.mubr.f32.gmra.mrb[0].mxu0 %v1861
        %v2028 = vpop.f32.mrb[0].mxu0
        %v2029 = vadd.f32 %v1848, %v2028
        %v2030 = vpop.f32.mrb[0].mxu0
        %2031 = vmatprep.mubr.f32.mxu0 0.0
        %2032 = vmatmul.mubr.f32.gmra.mrb[0].mxu0 %v1864
        %v2033 = vpop.f32.mrb[0].mxu0
        %v2034 = vadd.f32 %v1848, %v2033
        %v2035 = vpop.f32.mrb[0].mxu0
        %2036 = vmatprep.mubr.f32.mxu0 0.0
        %2037 = vmatmul.mubr.f32.gmra.mrb[0].mxu0 %v1867
        %v2038 = vpop.f32.mrb[0].mxu0
        %v2039 = vadd.f32 %v1848, %v2038
        %v2040 = vpop.f32.mrb[0].mxu0
        %2041 = vmatprep.mubr.f32.mxu0 0.0
        %2042 = vmatmul.mubr.f32.gmra.mrb[0].mxu0 %v1870
        %v2043 = vpop.f32.mrb[0].mxu0
        %v2044 = vadd.f32 %v1848, %v2043
        %v2045 = vpop.f32.mrb[0].mxu0
        %2046 = vmatprep.mubr.f32.mxu0 0.0
        %2047 = vmatmul.mubr.f32.gmra.mrb[0].mxu0 %v1873
        %v2048 = vpop.f32.mrb[0].mxu0
        %v2049 = vadd.f32 %v1848, %v2048
        %v2050 = vpop.f32.mrb[0].mxu0
        %2051 = vmatprep.mubr.f32.mxu0 0.0
        %2052 = vmatmul.mubr.f32.gmra.mrb[0].mxu0 %v1876
        %v2053 = vpop.f32.mrb[0].mxu0
        %v2054 = vadd.f32 %v1848, %v2053
        %v2055 = vpop.f32.mrb[0].mxu0
        %2056 = vmatprep.mubr.f32.mxu0 0.0
        %2057 = vmatmul.mubr.f32.gmra.mrb[0].mxu0 %v1879
        %v2058 = vpop.f32.mrb[0].mxu0
        %v2059 = vadd.f32 %v1848, %v2058
        %v2060 = vpop.f32.mrb[0].mxu0
        %2061 = vmatprep.mubr.f32.mxu0 0.0
        %2062 = vmatmul.mubr.f32.gmra.mrb[0].mxu0 %v1882
        %v2063 = vpop.f32.mrb[0].mxu0
        %v2064 = vadd.f32 %v1848, %v2063
        %v2065 = vpop.f32.mrb[0].mxu0
        %2066 = vmatprep.mubr.f32.mxu0 0.0
        %2067 = vmatmul.mubr.f32.gmra.mrb[0].mxu0 %v1885
        %v2068 = vpop.f32.mrb[0].mxu0
        %v2069 = vadd.f32 %v1848, %v2068
        %v2070 = vpop.f32.mrb[0].mxu0
        %2071 = vmatprep.mubr.f32.mxu0 0.0
        %2072 = vmatmul.mubr.f32.gmra.mrb[0].mxu0 %v1888
        %v2073 = vpop.f32.mrb[0].mxu0
        %v2074 = vadd.f32 %v1848, %v2073
        %v2075 = vpop.f32.mrb[0].mxu0
        %2076 = vmatprep.mubr.f32.mxu0 0.0
        %2077 = vmatmul.mubr.f32.gmra.mrb[0].mxu0 %v1891
        %v2078 = vpop.f32.mrb[0].mxu0
        %v2079 = vadd.f32 %v1848, %v2078
        %v2080 = vpop.f32.mrb[0].mxu0
        %2081 = vmatprep.mubr.f32.mxu0 0.0
        %2082 = vmatmul.mubr.f32.gmra.mrb[0].mxu0 %v1894
        %v2083 = vpop.f32.mrb[0].mxu0
        %v2084 = vadd.f32 %v1848, %v2083
        %v2085 = vpop.f32.mrb[0].mxu0
        %2086 = vmatprep.mubr.f32.mxu0 0.0
        %2087 = vmatmul.mubr.f32.gmra.mrb[0].mxu0 %v1897
        %v2088 = vpop.f32.mrb[0].mxu0
        %v2089 = vadd.f32 %v1848, %v2088
        %v2090 = vpop.f32.mrb[0].mxu0
        %2091 = vmatprep.mubr.f32.mxu0 0.0
        %2092 = vmatmul.mubr.f32.gmra.mrb[0].mxu0 %v1900
        %v2093 = vpop.f32.mrb[0].mxu0
        %v2094 = vadd.f32 %v1848, %v2093
        %v2095 = vpop.f32.mrb[0].mxu0
        %2096 = vmatprep.mubr.f32.mxu0 0.0
        %2097 = vmatmul.mubr.f32.gmra.mrb[0].mxu0 %v1903
        %v2098 = vpop.f32.mrb[0].mxu0
        %v2099 = vadd.f32 %v1848, %v2098
        %v2100 = vpop.f32.mrb[0].mxu0
        %2101 = vmatprep.mubr.f32.mxu0 0.0
        %2102 = vmatmul.mubr.f32.gmra.mrb[0].mxu0 %v1906
        %v2103 = vpop.f32.mrb[0].mxu0
        %v2104 = vadd.f32 %v1848, %v2103
        %v2105 = vpop.f32.mrb[0].mxu0
        %2106 = vmatprep.mubr.f32.mxu0 0.0
        %2107 = vmatmul.mubr.f32.gmra.mrb[0].mxu0 %v1909
        %v2108 = vpop.f32.mrb[0].mxu0
        %v2109 = vadd.f32 %v1848, %v2108
        %v2110 = vpop.f32.mrb[0].mxu0
        %2111 = vmatprep.mubr.f32.mxu0 0.0
        %2112 = vmatmul.mubr.f32.gmra.mrb[0].mxu0 %v1912
        %v2113 = vpop.f32.mrb[0].mxu0
        %v2114 = vadd.f32 %v1848, %v2113
        %v2115 = vpop.f32.mrb[0].mxu0
        %2116 = vmatprep.mubr.f32.mxu0 0.0
        %2117 = vmatmul.mubr.f32.gmra.mrb[0].mxu0 %v1915
        %v2118 = vpop.f32.mrb[0].mxu0
        %v2119 = vadd.f32 %v1848, %v2118
        %v2120 = vpop.f32.mrb[0].mxu0
        %2121 = vmatprep.mubr.f32.mxu0 0.0
        %2122 = vmatmul.mubr.f32.gmra.mrb[0].mxu0 %v1918
        %v2123 = vpop.f32.mrb[0].mxu0
        %v2124 = vadd.f32 %v1848, %v2123
        %v2125 = vpop.f32.mrb[0].mxu0
        %2126 = vmatprep.mubr.f32.mxu0 0.0
        %2127 = vmatmul.mubr.f32.gmra.mrb[0].mxu0 %v1921
        %v2128 = vpop.f32.mrb[0].mxu0
        %v2129 = vadd.f32 %v1848, %v2128
        %v2130 = vpop.f32.mrb[0].mxu0
        %2131 = vmatprep.mubr.f32.mxu0 0.0
        %2132 = vmatmul.mubr.f32.gmra.mrb[0].mxu0 %v1924
        %v2133 = vpop.f32.mrb[0].mxu0
        %v2134 = vadd.f32 %v1848, %v2133
        %v2135 = vpop.f32.mrb[0].mxu0
        %2136 = vmatprep.mubr.f32.mxu0 0.0
        %2137 = vmatmul.mubr.f32.gmra.mrb[0].mxu0 %v1927
        %v2138 = vpop.f32.mrb[0].mxu0
        %v2139 = vadd.f32 %v1848, %v2138
        %v2140 = vpop.f32.mrb[0].mxu0
        %2141 = vmatprep.mubr.f32.mxu0 0.0
        %2142 = vmatmul.mubr.f32.gmra.mrb[0].mxu0 %v1930
        %v2143 = vpop.f32.mrb[0].mxu0
        %v2144 = vadd.f32 %v1848, %v2143
        %v2145 = vpop.f32.mrb[0].mxu0
        %2146 = vmatprep.mubr.f32.mxu0 0.0
        %2147 = vmatmul.mubr.f32.gmra.mrb[0].mxu0 %v1933
        %v2148 = vpop.f32.mrb[0].mxu0
        %v2149 = vadd.f32 %v1848, %v2148
        %v2150 = vpop.f32.mrb[0].mxu0
        %2151 = vmatprep.mubr.f32.mxu0 0.0
        %2152 = vmatmul.mubr.f32.gmra.mrb[0].mxu0 %v1936
        %v2153 = vpop.f32.mrb[0].mxu0
        %v2154 = vadd.f32 %v1848, %v2153
        %v2155 = vpop.f32.mrb[0].mxu0
        %2156 = vmatprep.mubr.f32.mxu0 0.0
        %2157 = vmatmul.mubr.f32.gmra.mrb[0].mxu0 %v1939
        %v2158 = vpop.f32.mrb[0].mxu0
        %v2159 = vadd.f32 %v1848, %v2158
        %v2160 = vpop.f32.mrb[0].mxu0
        %2161 = vmatprep.mubr.f32.mxu0 0.0
        %2162 = vmatmul.mubr.f32.gmra.mrb[0].mxu0 %v1942
        %v2163 = vpop.f32.mrb[0].mxu0
        %v2164 = vadd.f32 %v1848, %v2163
        %v2165 = vpop.f32.mrb[0].mxu0
        %2166 = vmatprep.mubr.f32.mxu0 0.0
        %2167 = vmatmul.mubr.f32.gmra.mrb[0].mxu0 %v1945
        %v2168 = vpop.f32.mrb[0].mxu0
        %v2169 = vadd.f32 %v1848, %v2168
        %v2170 = vpop.f32.mrb[0].mxu0
        %2171 = vdwg.mxu0
        %v2172 = vmax.f32 %v2014, 0.0
        %v2173 = vmax.f32 %v2019, 0.0
        %v2174 = vmax.f32 %v2024, 0.0
        %v2175 = vmax.f32 %v2029, 0.0
        %v2176 = vmax.f32 %v2034, 0.0
        %v2177 = vmax.f32 %v2039, 0.0
        %v2178 = vmax.f32 %v2044, 0.0
        %v2179 = vmax.f32 %v2049, 0.0
        %v2180 = vmax.f32 %v2054, 0.0
        %v2181 = vmax.f32 %v2059, 0.0
        %v2182 = vmax.f32 %v2064, 0.0
        %v2183 = vmax.f32 %v2069, 0.0
        %v2184 = vmax.f32 %v2074, 0.0
        %v2185 = vmax.f32 %v2079, 0.0
        %v2186 = vmax.f32 %v2084, 0.0
        %v2187 = vmax.f32 %v2089, 0.0
        %v2188 = vmax.f32 %v2094, 0.0
        %v2189 = vmax.f32 %v2099, 0.0
        %v2190 = vmax.f32 %v2104, 0.0
        %v2191 = vmax.f32 %v2109, 0.0
        %v2192 = vmax.f32 %v2114, 0.0
        %v2193 = vmax.f32 %v2119, 0.0
        %v2194 = vmax.f32 %v2124, 0.0
        %v2195 = vmax.f32 %v2129, 0.0
        %v2196 = vmax.f32 %v2134, 0.0
        %v2197 = vmax.f32 %v2139, 0.0
        %v2198 = vmax.f32 %v2144, 0.0
        %v2199 = vmax.f32 %v2149, 0.0
        %v2200 = vmax.f32 %v2154, 0.0
        %v2201 = vmax.f32 %v2159, 0.0
        %v2202 = vmax.f32 %v2164, 0.0
        %v2203 = vmax.f32 %v2169, 0.0
        %2204 = vst [vmem:[%s177] sm:$0xff] %v2172
        %2205 = vst [vmem:[%s177 + $0x8] sm:$0xff] %v2173
        %2206 = vst [vmem:[%s177 + $0x10] sm:$0xff] %v2174
        %2207 = vst [vmem:[%s177 + $0x18] sm:$0xff] %v2175
        %2208 = vst [vmem:[%s177 + $0x20] sm:$0xff] %v2176
        %2209 = vst [vmem:[%s177 + $0x28] sm:$0xff] %v2177
        %2210 = vst [vmem:[%s177 + $0x30] sm:$0xff] %v2178
        %2211 = vst [vmem:[%s177 + $0x38] sm:$0xff] %v2179
        %2212 = vst [vmem:[%s177 + $0x40] sm:$0xff] %v2180
        %2213 = vst [vmem:[%s177 + $0x48] sm:$0xff] %v2181
        %2214 = vst [vmem:[%s177 + $0x50] sm:$0xff] %v2182
        %2215 = vst [vmem:[%s177 + $0x58] sm:$0xff] %v2183
        %2216 = vst [vmem:[%s177 + $0x60] sm:$0xff] %v2184
        %2217 = vst [vmem:[%s177 + $0x68] sm:$0xff] %v2185
        %2218 = vst [vmem:[%s177 + $0x70] sm:$0xff] %v2186
        %2219 = vst [vmem:[%s177 + $0x78] sm:$0xff] %v2187
        %2220 = vst [vmem:[%s177 + $0x80] sm:$0xff] %v2188
        %2221 = vst [vmem:[%s177 + $0x88] sm:$0xff] %v2189
        %2222 = vst [vmem:[%s177 + $0x90] sm:$0xff] %v2190
        %2223 = vst [vmem:[%s177 + $0x98] sm:$0xff] %v2191
        %2224 = vst [vmem:[%s177 + $0xa0] sm:$0xff] %v2192
        %2225 = vst [vmem:[%s177 + $0xa8] sm:$0xff] %v2193
        %2226 = vst [vmem:[%s177 + $0xb0] sm:$0xff] %v2194
        %2227 = vst [vmem:[%s177 + $0xb8] sm:$0xff] %v2195
        %2228 = vst [vmem:[%s177 + $0xc0] sm:$0xff] %v2196
        %2229 = vst [vmem:[%s177 + $0xc8] sm:$0xff] %v2197
        %2230 = vst [vmem:[%s177 + $0xd0] sm:$0xff] %v2198
        %2231 = vst [vmem:[%s177 + $0xd8] sm:$0xff] %v2199
        %2232 = vst [vmem:[%s177 + $0xe0] sm:$0xff] %v2200
        %2233 = vst [vmem:[%s177 + $0xe8] sm:$0xff] %v2201
        %2234 = vst [vmem:[%s177 + $0xf0] sm:$0xff] %v2202
        %2235 = vst [vmem:[%s177 + $0xf8] sm:$0xff] %v2203
        %s2236 = sand.u32 %s107, 1
        %s2237 = scalar_lea.sflag [#allocation4], %s2236
        %s2238 = sand.u32 %s107, 1
        %s2239 = smul.addr %s2238, 256
        %s2240 = scalar_lea.vmem [#allocation3], %s2239
        // Predicated region
        $region33: #{tpu_custom_call.1} parent=31 // pred_check
          %p2241 = pneg %p117
        $region34: #{tpu_custom_call.1} parent=31 // pred_check_branch
          %2243 = sbr.rel (%p2241) target = $region36
        $region35: #{tpu_custom_call.1} parent=31 // pred_region
          %s2244 = smul.u32 32, %s22
          %s2246 = ssub.s32 4096, 4096
          %2247 = vsyncadd %s2237, %s2246
          %s2248 = smul.addr %s21, 32
          %s2249 = sadd.s32 %s2244, %s2248
          %s2250 = smul.addr %s2249, 128
          %s2251 = scalar_lea.hbm %s3, %s2250
          %s2252 = sshll.u32 %s2240, 4
          %s2253 = int_to_ptr.vmem [resolvable:$true] %s2252
          %2258 = dma.vmem_to_hbm [thread:$0]  %s2253, 4096, %s2251, %s2237, 128, 128, 8
        $region36: #{tpu_custom_call.1} parent=31 // pred_fallthru
          _
      $region32: #{tpu_custom_call.1} parent=5 // pred_fallthru
        _
      %p2259 = scmp.le.s32.totalorder 2, %s12
      // Predicated region
      $region37: #{tpu_custom_call.1} parent=5 // pred_check
        %p2260 = pneg %p2259
      $region38: #{tpu_custom_call.1} parent=5 // pred_check_branch
        %2262 = sbr.rel (%p2260) target = $region40
      $region39: #{tpu_custom_call.1} parent=5 // pred_region
        %s2263 = ssub.s32 %s12, 2
        // Predicated region
        $region41: #{tpu_custom_call.1} parent=39 // pred_check
          %p2264 = pneg %p123
        $region42: #{tpu_custom_call.1} parent=39 // pred_check_branch
          %2266 = sbr.rel (%p2264) target = $region44
        $region43: #{tpu_custom_call.1} parent=39 // pred_region
          %s2267 = sand.u32 %s108, 1
          %s2268 = scalar_lea.sflag [#allocation4], %s2267
          %s2269 = sand.u32 %s108, 1
          %s2270 = smul.addr %s2269, 256
          %s2271 = scalar_lea.vmem [#allocation3], %s2270
          %2272 = dma.done %s2268, 4096
        $region44: #{tpu_custom_call.1} parent=39 // pred_fallthru
          _
      $region40: #{tpu_custom_call.1} parent=5 // pred_fallthru
        _
    $region6: #{tpu_custom_call.1} parent=1 // loop_footer
      %s16 = sadd.s32 1, %s12
    $region7: #{tpu_custom_call.1} parent=1 // loop_footer_branch
      %11 = sbr.rel target = $region3
    $region8: #{tpu_custom_call.1} parent=1 // loop_exit
      _
    %2273 = vsyncpa [#allocation4], 1
    %s2274 = scalar_lea.sflag [#allocation4], 1
    %2275 = vsyncpa %s2274, 1

// kernel: tpu_custom_call.1
$region0: #{tpu_custom_call.1}
  #allocation0 [shape = 'u32[]', space=smem, size = 0x4, offset = 0x4, fixed_abs, tag = 'smem constant byte address 0x4 - core index']
  #allocation1 [shape = 'u32[144,128]{1,0:T(1,128)}', space=vmem, size = 0x12000, scoped, tag = 'internal scratch']
  #allocation2 [shape = 'f32[256,72]{1,0:T(8,128)}', space=vmem, size = 0x20000, scoped, tag = 'scratch operand']
  %s0 = inlined_call_operand.vmem [shape: f32[2,18,18,8], index: 0, kind: input, shape index: {}]
  %s1 = inlined_call_operand.vmem [shape: f32[72,128], index: 1, kind: input, shape index: {}]
  %s2 = inlined_call_operand.vmem [shape: f32[1,128], index: 2, kind: input, shape index: {}]
  %s3 = inlined_call_operand.hbm [shape: f32[2,256,128], index: 3, kind: output, shape index: {}]
  %s4 = sld [smem:[#allocation0]]
  $region45: #{tpu_custom_call.1} parent=0
    _
  %s6 = ssub.s32 1, %s4
  %s7 = scalar_select 0, %s6, %s4
  $region1: #{tpu_custom_call.1} parent=0
    #allocation3 [shape = 'u8[262144]{0}', space=vmem, size = 0x40000, scoped, tag = 'output window, operand 0']
    #allocation4 [shape = 's32[2]{0}', space=sflag, size = 0x8, scoped, tag = 'scoped memory for tpu_custom_call.1']
    %8 = vsyncpa [#allocation4], 0
    %s9 = scalar_lea.sflag [#allocation4], 1
    %10 = vsyncpa %s9, 0
    loop: start=0, step=1, limit=4
    $region2: #{tpu_custom_call.1} parent=1 // loop_pre_header
      _
    $region3: #{tpu_custom_call.1} parent=1 // loop_header
      %s12 = sphi 0, %s16
      %p13 = scmp.ge.s32.totalorder %s12, 4
      %s19 = sphi 0, %s31
      %s20 = sphi 0, %s27
      %s21 = sphi 0, %s19
      %s22 = sphi 0, %s20
      %s23 = sphi 0, %s21
      %s24 = sphi 0, %s22
      %s34 = sphi 0, %s36
      %s37 = sphi 0, %s34
      %s38 = sphi 0, %s37
      %s54 = sphi 0, %s38
      %s58 = sphi 0, %s58
      %s60 = sphi 0, %s58
      %s61 = sphi 0, %s60
      %s75 = sphi 0, %s61
      %s79 = sphi 0, %s79
      %s81 = sphi 0, %s79
      %s82 = sphi 0, %s81
      %s96 = sphi 0, %s82
      %s104 = sphi 0, %s106
      %s107 = sphi 0, %s104
      %s108 = sphi 0, %s107
      %s124 = sphi 0, %s108
    $region4: #{tpu_custom_call.1} parent=1 // loop_header_branch
      %15 = sbr.rel (%p13) target = $region8
    $region5: #{tpu_custom_call.1} parent=1 // loop_body
      %s17 = ssub.s32 %s12, 1
      %s18 = ssub.s32 %s12, 2
      %s25 = sadd.s32 1, %s20
      %p26 = scmp.ge.s32.totalorder %s25, 1
      %s27 = scalar_select %p26, 0, %s25
      %s28 = sadd.s32 1, %s19
      %s29 = scalar_select %p26, %s28, %s19
      %p30 = scmp.ge.s32.totalorder %s29, 2
      %s31 = scalar_select %p30, 0, %s29
      %s32 = ssub.s32 %s19, %s31
      %p33 = scmp.eq.s32.totalorder %s32, 0
      %s35 = sadd.s32 %s34, 1
      %s36 = scalar_select %p33, %s34, %s35
      %p39 = pneg %p33
      %p40 = scmp.eq.s32.totalorder %s12, 1
      %p41 = por %p39, %p40
      %p42 = scmp.ne.s32.totalorder %s34, %s37
      %p43 = scmp.eq.s32.totalorder %s12, 0
      %p44 = por %p42, %p43
      %p45 = scmp.ne.s32.totalorder %s34, %s37
      %p46 = scmp.eq.s32.totalorder %s17, 1
      %p47 = por %p45, %p46
      %p48 = scmp.ne.s32.totalorder %s37, %s38
      %p49 = scmp.eq.s32.totalorder %s17, 0
      %p50 = por %p48, %p49
      %p51 = scmp.ne.s32.totalorder %s37, %s38
      %p52 = scmp.eq.s32.totalorder %s18, 1
      %p53 = por %p51, %p52
      %p55 = scmp.ne.s32.totalorder %s38, %s54
      %p56 = scmp.eq.s32.totalorder %s18, 0
      %p57 = por %p55, %p56
      %s59 = sadd.s32 %s58, 1
      %p62 = scmp.eq.s32.totalorder %s12, 1
      %p63 = scmp.ne.s32.totalorder %s58, %s60
      %p64 = scmp.eq.s32.totalorder %s12, 0
      %p65 = por %p63, %p64
      %p66 = scmp.ne.s32.totalorder %s58, %s60
      %p67 = scmp.eq.s32.totalorder %s17, 1
      %p68 = por %p66, %p67
      %p69 = scmp.ne.s32.totalorder %s60, %s61
      %p70 = scmp.eq.s32.totalorder %s17, 0
      %p71 = por %p69, %p70
      %p72 = scmp.ne.s32.totalorder %s60, %s61
      %p73 = scmp.eq.s32.totalorder %s18, 1
      %p74 = por %p72, %p73
      %p76 = scmp.ne.s32.totalorder %s61, %s75
      %p77 = scmp.eq.s32.totalorder %s18, 0
      %p78 = por %p76, %p77
      %s80 = sadd.s32 %s79, 1
      %p83 = scmp.eq.s32.totalorder %s12, 1
      %p84 = scmp.ne.s32.totalorder %s79, %s81
      %p85 = scmp.eq.s32.totalorder %s12, 0
      %p86 = por %p84, %p85
      %p87 = scmp.ne.s32.totalorder %s79, %s81
      %p88 = scmp.eq.s32.totalorder %s17, 1
      %p89 = por %p87, %p88
      %p90 = scmp.ne.s32.totalorder %s81, %s82
      %p91 = scmp.eq.s32.totalorder %s17, 0
      %p92 = por %p90, %p91
      %p93 = scmp.ne.s32.totalorder %s81, %s82
      %p94 = scmp.eq.s32.totalorder %s18, 1
      %p95 = por %p93, %p94
      %p97 = scmp.ne.s32.totalorder %s82, %s96
      %p98 = scmp.eq.s32.totalorder %s18, 0
      %p99 = por %p97, %p98
      %s100 = ssub.s32 %s19, %s31
      %s101 = ssub.s32 %s20, %s27
      %s102 = sor.u32 %s100, %s101
      %p103 = scmp.eq.s32.totalorder %s102, 0
      %s105 = sadd.s32 %s104, 1
      %s106 = scalar_select %p103, %s104, %s105
      %p109 = pneg %p103
      %p110 = scmp.eq.s32.totalorder %s12, 1
      %p111 = por %p109, %p110
      %p112 = scmp.ne.s32.totalorder %s104, %s107
      %p113 = scmp.eq.s32.totalorder %s12, 0
      %p114 = por %p112, %p113
      %p115 = scmp.ne.s32.totalorder %s104, %s107
      %p116 = scmp.eq.s32.totalorder %s17, 1
      %p117 = por %p115, %p116
      %p118 = scmp.ne.s32.totalorder %s107, %s108
      %p119 = scmp.eq.s32.totalorder %s17, 0
      %p120 = por %p118, %p119
      %p121 = scmp.ne.s32.totalorder %s107, %s108
      %p122 = scmp.eq.s32.totalorder %s18, 1
      %p123 = por %p121, %p122
      %p125 = scmp.ne.s32.totalorder %s108, %s124
      %p126 = scmp.eq.s32.totalorder %s18, 0
      %p127 = por %p125, %p126
      %p128 = scmp.le.s32.totalorder 1, %s12
      %p129 = scmp.lt.s32.totalorder %s12, 3
      %p130 = pnand %p128, %p129
      %p131 = pneg %p130
      // Predicated region
      $region9: #{tpu_custom_call.1} parent=5 // pred_check
        _
      $region10: #{tpu_custom_call.1} parent=5 // pred_check_branch
        %133 = sbr.rel (%p130) target = $region12
      $region11: #{tpu_custom_call.1} parent=5 // pred_region
        %s134 = ssub.s32 %s12, 1
        // Predicated region
        $region13: #{tpu_custom_call.1} parent=11 // pred_check
          %p135 = pneg %p71
        $region14: #{tpu_custom_call.1} parent=11 // pred_check_branch
          %137 = sbr.rel (%p135) target = $region16
        $region15: #{tpu_custom_call.1} parent=11 // pred_region
          _
        $region16: #{tpu_custom_call.1} parent=11 // pred_fallthru
          _
        // Predicated region
        $region17: #{tpu_custom_call.1} parent=11 // pred_check
          %p138 = pneg %p92
        $region18: #{tpu_custom_call.1} parent=11 // pred_check_branch
          %140 = sbr.rel (%p138) target = $region20
        $region19: #{tpu_custom_call.1} parent=11 // pred_region
          _
        $region20: #{tpu_custom_call.1} parent=11 // pred_fallthru
          _
      $region12: #{tpu_custom_call.1} parent=5 // pred_fallthru
        _
      %p141 = scmp.lt.s32.totalorder %s12, 2
      // Predicated region
      $region21: #{tpu_custom_call.1} parent=5 // pred_check
        %p142 = pneg %p141
      $region22: #{tpu_custom_call.1} parent=5 // pred_check_branch
        %144 = sbr.rel (%p142) target = $region24
      $region23: #{tpu_custom_call.1} parent=5 // pred_region
        // Predicated region
        $region25: #{tpu_custom_call.1} parent=23 // pred_check
          %p145 = pneg %p44
        $region26: #{tpu_custom_call.1} parent=23 // pred_check_branch
          %147 = sbr.rel (%p145) target = $region28
        $region27: #{tpu_custom_call.1} parent=23 // pred_region
          %p148 = scmp.lt.s32.totalorder %s19, 1
          %s149 = scalar_select %p148, %s19, 1
          %s150 = smul.addr %s149, 54
          %s151 = smul.addr %s150, 8
          %s152 = scalar_lea.vmem %s0, %s151
        $region28: #{tpu_custom_call.1} parent=23 // pred_fallthru
          _
      $region24: #{tpu_custom_call.1} parent=5 // pred_fallthru
        _
      %p153 = scmp.le.s32.totalorder 1, %s12
      %p154 = scmp.lt.s32.totalorder %s12, 3
      %p155 = pnand %p153, %p154
      %p156 = pneg %p155
      // Predicated region
      $region29: #{tpu_custom_call.1} parent=5 // pred_check
        _
      $region30: #{tpu_custom_call.1} parent=5 // pred_check_branch
        %158 = sbr.rel (%p155) target = $region32
      $region31: #{tpu_custom_call.1} parent=5 // pred_region
        %s159 = ssub.s32 %s12, 1
        %p160 = scmp.lt.s32.totalorder %s21, 1
        %s161 = scalar_select %p160, %s21, 1
        %s162 = smul.addr %s161, 54
        %s163 = smul.addr %s162, 8
        %s164 = scalar_lea.vmem %s0, %s163
        %p165 = pneg %p50
        %p166 = pneg %p47
        %p167 = pneg %p71
        %p168 = pneg %p68
        %p169 = pneg %p92
        %p170 = pneg %p89
        %p171 = pneg %p120
        %p172 = pneg %p117
        %s173 = sand.u32 %s107, 1
        %s174 = scalar_lea.sflag [#allocation4], %s173
        %s175 = sand.u32 %s107, 1
        %s176 = smul.addr %s175, 256
        %s177 = scalar_lea.vmem [#allocation3], %s176
        %p178 = scmp.lt.s32.totalorder %s21, 1
        %s179 = scalar_select %p178, %s21, 1
        %s180 = smul.addr %s179, 54
        %s181 = smul.addr %s180, 8
        %s182 = scalar_lea.vmem %s0, %s181
        %s183 = smul.u32 32, %s22
        %s184 = smul.u32 %s22, 16
        %s185 = smul.u32 %s184, 24
        %s186 = scalar_lea.vmem %s182, %s185
        %v187 = vld [vmem:[%s186] sm:$0xff]
        %v188 = vld [vmem:[%s186 + $0x8] sm:$0xff]
        %v189 = vld [vmem:[%s186 + $0x18] sm:$0xff]
        %v190 = vld [vmem:[%s186 + $0x20] sm:$0xff]
        %v191 = vld [vmem:[%s186 + $0x30] sm:$0xff]
        %v192 = vld [vmem:[%s186 + $0x38] sm:$0xff]
        %v193 = vld [vmem:[%s186 + $0x48] sm:$0xff]
        %v194 = vld [vmem:[%s186 + $0x50] sm:$0xff]
        %v195 = vld [vmem:[%s186 + $0x60] sm:$0xff]
        %v196 = vld [vmem:[%s186 + $0x68] sm:$0xff]
        %v197 = vld [vmem:[%s186 + $0x78] sm:$0xff]
        %v198 = vld [vmem:[%s186 + $0x80] sm:$0xff]
        %v199 = vld [vmem:[%s186 + $0x90] sm:$0xff]
        %v200 = vld [vmem:[%s186 + $0x98] sm:$0xff]
        %v201 = vld [vmem:[%s186 + $0xa8] sm:$0xff]
        %v202 = vld [vmem:[%s186 + $0xb0] sm:$0xff]
        %v203 = vld [vmem:[%s186 + $0xc0] sm:$0xff]
        %v204 = vld [vmem:[%s186 + $0xc8] sm:$0xff]
        %v205 = vld [vmem:[%s186 + $0xd8] sm:$0xff]
        %v206 = vld [vmem:[%s186 + $0xe0] sm:$0xff]
        %v207 = vld [vmem:[%s186 + $0xf0] sm:$0xff]
        %v208 = vld [vmem:[%s186 + $0xf8] sm:$0xff]
        %v209 = vld [vmem:[%s186 + $0x108] sm:$0xff]
        %v210 = vld [vmem:[%s186 + $0x110] sm:$0xff]
        %v211 = vld [vmem:[%s186 + $0x120] sm:$0xff]
        %v212 = vld [vmem:[%s186 + $0x128] sm:$0xff]
        %v213 = vld [vmem:[%s186 + $0x138] sm:$0xff]
        %v214 = vld [vmem:[%s186 + $0x140] sm:$0xff]
        %v215 = vld [vmem:[%s186 + $0x150] sm:$0xff]
        %v216 = vld [vmem:[%s186 + $0x158] sm:$0xff]
        %v217 = vld [vmem:[%s186 + $0x168] sm:$0xff]
        %v218 = vld [vmem:[%s186 + $0x170] sm:$0xff]
        %vm219 = vcmask 64512
        %220 = vst.msk [vmem:[#allocation2] sm:$0xff] %vm219, %v187
        %221 = vst.msk [vmem:[#allocation2 + $0x8] sm:$0xff] %vm219, %v188
        %222 = vst.msk [vmem:[#allocation2 + $0x10] sm:$0xff] %vm219, %v189
        %223 = vst.msk [vmem:[#allocation2 + $0x18] sm:$0xff] %vm219, %v190
        %224 = vst.msk [vmem:[#allocation2 + $0x20] sm:$0xff] %vm219, %v191
        %225 = vst.msk [vmem:[#allocation2 + $0x28] sm:$0xff] %vm219, %v192
        %226 = vst.msk [vmem:[#allocation2 + $0x30] sm:$0xff] %vm219, %v193
        %227 = vst.msk [vmem:[#allocation2 + $0x38] sm:$0xff] %vm219, %v194
        %228 = vst.msk [vmem:[#allocation2 + $0x40] sm:$0xff] %vm219, %v195
        %229 = vst.msk [vmem:[#allocation2 + $0x48] sm:$0xff] %vm219, %v196
        %230 = vst.msk [vmem:[#allocation2 + $0x50] sm:$0xff] %vm219, %v197
        %231 = vst.msk [vmem:[#allocation2 + $0x58] sm:$0xff] %vm219, %v198
        %232 = vst.msk [vmem:[#allocation2 + $0x60] sm:$0xff] %vm219, %v199
        %233 = vst.msk [vmem:[#allocation2 + $0x68] sm:$0xff] %vm219, %v200
        %234 = vst.msk [vmem:[#allocation2 + $0x70] sm:$0xff] %vm219, %v201
        %235 = vst.msk [vmem:[#allocation2 + $0x78] sm:$0xff] %vm219, %v202
        %236 = vst.msk [vmem:[#allocation2 + $0x80] sm:$0xff] %vm219, %v203
        %237 = vst.msk [vmem:[#allocation2 + $0x88] sm:$0xff] %vm219, %v204
        %238 = vst.msk [vmem:[#allocation2 + $0x90] sm:$0xff] %vm219, %v205
        %239 = vst.msk [vmem:[#allocation2 + $0x98] sm:$0xff] %vm219, %v206
        %240 = vst.msk [vmem:[#allocation2 + $0xa0] sm:$0xff] %vm219, %v207
        %241 = vst.msk [vmem:[#allocation2 + $0xa8] sm:$0xff] %vm219, %v208
        %242 = vst.msk [vmem:[#allocation2 + $0xb0] sm:$0xff] %vm219, %v209
        %243 = vst.msk [vmem:[#allocation2 + $0xb8] sm:$0xff] %vm219, %v210
        %244 = vst.msk [vmem:[#allocation2 + $0xc0] sm:$0xff] %vm219, %v211
        %245 = vst.msk [vmem:[#allocation2 + $0xc8] sm:$0xff] %vm219, %v212
        %246 = vst.msk [vmem:[#allocation2 + $0xd0] sm:$0xff] %vm219, %v213
        %247 = vst.msk [vmem:[#allocation2 + $0xd8] sm:$0xff] %vm219, %v214
        %248 = vst.msk [vmem:[#allocation2 + $0xe0] sm:$0xff] %vm219, %v215
        %249 = vst.msk [vmem:[#allocation2 + $0xe8] sm:$0xff] %vm219, %v216
        %250 = vst.msk [vmem:[#allocation2 + $0xf0] sm:$0xff] %vm219, %v217
        %251 = vst.msk [vmem:[#allocation2 + $0xf8] sm:$0xff] %vm219, %v218
        %v252 = vld [vmem:[%s186 + $0x1] sm:$0xff]
        %v253 = vld [vmem:[%s186 + $0x9] sm:$0xff]
        %v254 = vld [vmem:[%s186 + $0x19] sm:$0xff]
        %v255 = vld [vmem:[%s186 + $0x21] sm:$0xff]
        %v256 = vld [vmem:[%s186 + $0x31] sm:$0xff]
        %v257 = vld [vmem:[%s186 + $0x39] sm:$0xff]
        %v258 = vld [vmem:[%s186 + $0x49] sm:$0xff]
        %v259 = vld [vmem:[%s186 + $0x51] sm:$0xff]
        %v260 = vld [vmem:[%s186 + $0x61] sm:$0xff]
        %v261 = vld [vmem:[%s186 + $0x69] sm:$0xff]
        %v262 = vld [vmem:[%s186 + $0x79] sm:$0xff]
        %v263 = vld [vmem:[%s186 + $0x81] sm:$0xff]
        %v264 = vld [vmem:[%s186 + $0x91] sm:$0xff]
        %v265 = vld [vmem:[%s186 + $0x99] sm:$0xff]
        %v266 = vld [vmem:[%s186 + $0xa9] sm:$0xff]
        %v267 = vld [vmem:[%s186 + $0xb1] sm:$0xff]
        %v268 = vld [vmem:[%s186 + $0xc1] sm:$0xff]
        %v269 = vld [vmem:[%s186 + $0xc9] sm:$0xff]
        %v270 = vld [vmem:[%s186 + $0xd9] sm:$0xff]
        %v271 = vld [vmem:[%s186 + $0xe1] sm:$0xff]
        %v272 = vld [vmem:[%s186 + $0xf1] sm:$0xff]
        %v273 = vld [vmem:[%s186 + $0xf9] sm:$0xff]
        %v274 = vld [vmem:[%s186 + $0x109] sm:$0xff]
        %v275 = vld [vmem:[%s186 + $0x111] sm:$0xff]
        %v276 = vld [vmem:[%s186 + $0x121] sm:$0xff]
        %v277 = vld [vmem:[%s186 + $0x129] sm:$0xff]
        %v278 = vld [vmem:[%s186 + $0x139] sm:$0xff]
        %v279 = vld [vmem:[%s186 + $0x141] sm:$0xff]
        %v280 = vld [vmem:[%s186 + $0x151] sm:$0xff]
        %v281 = vld [vmem:[%s186 + $0x159] sm:$0xff]
        %v282 = vld [vmem:[%s186 + $0x169] sm:$0xff]
        %v283 = vld [vmem:[%s186 + $0x171] sm:$0xff]
        %316 = vrot.lane.b32.xlu0 %v252, 8
        %v317 = vpop.permute.xlu0 %316
        %318 = vrot.lane.b32.xlu0 %v253, 8
        %v319 = vpop.permute.xlu0 %318
        %320 = vrot.lane.b32.xlu0 %v254, 8
        %v321 = vpop.permute.xlu0 %320
        %322 = vrot.lane.b32.xlu0 %v255, 8
        %v323 = vpop.permute.xlu0 %322
        %324 = vrot.lane.b32.xlu0 %v256, 8
        %v325 = vpop.permute.xlu0 %324
        %326 = vrot.lane.b32.xlu0 %v257, 8
        %v327 = vpop.permute.xlu0 %326
        %328 = vrot.lane.b32.xlu0 %v258, 8
        %v329 = vpop.permute.xlu0 %328
        %330 = vrot.lane.b32.xlu0 %v259, 8
        %v331 = vpop.permute.xlu0 %330
        %332 = vrot.lane.b32.xlu0 %v260, 8
        %v333 = vpop.permute.xlu0 %332
        %334 = vrot.lane.b32.xlu0 %v261, 8
        %v335 = vpop.permute.xlu0 %334
        %336 = vrot.lane.b32.xlu0 %v262, 8
        %v337 = vpop.permute.xlu0 %336
        %338 = vrot.lane.b32.xlu0 %v263, 8
        %v339 = vpop.permute.xlu0 %338
        %340 = vrot.lane.b32.xlu0 %v264, 8
        %v341 = vpop.permute.xlu0 %340
        %342 = vrot.lane.b32.xlu0 %v265, 8
        %v343 = vpop.permute.xlu0 %342
        %344 = vrot.lane.b32.xlu0 %v266, 8
        %v345 = vpop.permute.xlu0 %344
        %346 = vrot.lane.b32.xlu0 %v267, 8
        %v347 = vpop.permute.xlu0 %346
        %348 = vrot.lane.b32.xlu0 %v268, 8
        %v349 = vpop.permute.xlu0 %348
        %350 = vrot.lane.b32.xlu0 %v269, 8
        %v351 = vpop.permute.xlu0 %350
        %352 = vrot.lane.b32.xlu0 %v270, 8
        %v353 = vpop.permute.xlu0 %352
        %354 = vrot.lane.b32.xlu0 %v271, 8
        %v355 = vpop.permute.xlu0 %354
        %356 = vrot.lane.b32.xlu0 %v272, 8
        %v357 = vpop.permute.xlu0 %356
        %358 = vrot.lane.b32.xlu0 %v273, 8
        %v359 = vpop.permute.xlu0 %358
        %360 = vrot.lane.b32.xlu0 %v274, 8
        %v361 = vpop.permute.xlu0 %360
        %362 = vrot.lane.b32.xlu0 %v275, 8
        %v363 = vpop.permute.xlu0 %362
        %364 = vrot.lane.b32.xlu0 %v276, 8
        %v365 = vpop.permute.xlu0 %364
        %366 = vrot.lane.b32.xlu0 %v277, 8
        %v367 = vpop.permute.xlu0 %366
        %368 = vrot.lane.b32.xlu0 %v278, 8
        %v369 = vpop.permute.xlu0 %368
        %370 = vrot.lane.b32.xlu0 %v279, 8
        %v371 = vpop.permute.xlu0 %370
        %372 = vrot.lane.b32.xlu0 %v280, 8
        %v373 = vpop.permute.xlu0 %372
        %374 = vrot.lane.b32.xlu0 %v281, 8
        %v375 = vpop.permute.xlu0 %374
        %376 = vrot.lane.b32.xlu0 %v282, 8
        %v377 = vpop.permute.xlu0 %376
        %378 = vrot.lane.b32.xlu0 %v283, 8
        %v379 = vpop.permute.xlu0 %378
        %vm412 = vcmask 130112
        %413 = vst.msk [vmem:[#allocation2] sm:$0xff] %vm412, %v317
        %414 = vst.msk [vmem:[#allocation2 + $0x8] sm:$0xff] %vm412, %v319
        %415 = vst.msk [vmem:[#allocation2 + $0x10] sm:$0xff] %vm412, %v321
        %416 = vst.msk [vmem:[#allocation2 + $0x18] sm:$0xff] %vm412, %v323
        %417 = vst.msk [vmem:[#allocation2 + $0x20] sm:$0xff] %vm412, %v325
        %418 = vst.msk [vmem:[#allocation2 + $0x28] sm:$0xff] %vm412, %v327
        %419 = vst.msk [vmem:[#allocation2 + $0x30] sm:$0xff] %vm412, %v329
        %420 = vst.msk [vmem:[#allocation2 + $0x38] sm:$0xff] %vm412, %v331
        %421 = vst.msk [vmem:[#allocation2 + $0x40] sm:$0xff] %vm412, %v333
        %422 = vst.msk [vmem:[#allocation2 + $0x48] sm:$0xff] %vm412, %v335
        %423 = vst.msk [vmem:[#allocation2 + $0x50] sm:$0xff] %vm412, %v337
        %424 = vst.msk [vmem:[#allocation2 + $0x58] sm:$0xff] %vm412, %v339
        %425 = vst.msk [vmem:[#allocation2 + $0x60] sm:$0xff] %vm412, %v341
        %426 = vst.msk [vmem:[#allocation2 + $0x68] sm:$0xff] %vm412, %v343
        %427 = vst.msk [vmem:[#allocation2 + $0x70] sm:$0xff] %vm412, %v345
        %428 = vst.msk [vmem:[#allocation2 + $0x78] sm:$0xff] %vm412, %v347
        %429 = vst.msk [vmem:[#allocation2 + $0x80] sm:$0xff] %vm412, %v349
        %430 = vst.msk [vmem:[#allocation2 + $0x88] sm:$0xff] %vm412, %v351
        %431 = vst.msk [vmem:[#allocation2 + $0x90] sm:$0xff] %vm412, %v353
        %432 = vst.msk [vmem:[#allocation2 + $0x98] sm:$0xff] %vm412, %v355
        %433 = vst.msk [vmem:[#allocation2 + $0xa0] sm:$0xff] %vm412, %v357
        %434 = vst.msk [vmem:[#allocation2 + $0xa8] sm:$0xff] %vm412, %v359
        %435 = vst.msk [vmem:[#allocation2 + $0xb0] sm:$0xff] %vm412, %v361
        %436 = vst.msk [vmem:[#allocation2 + $0xb8] sm:$0xff] %vm412, %v363
        %437 = vst.msk [vmem:[#allocation2 + $0xc0] sm:$0xff] %vm412, %v365
        %438 = vst.msk [vmem:[#allocation2 + $0xc8] sm:$0xff] %vm412, %v367
        %439 = vst.msk [vmem:[#allocation2 + $0xd0] sm:$0xff] %vm412, %v369
        %440 = vst.msk [vmem:[#allocation2 + $0xd8] sm:$0xff] %vm412, %v371
        %441 = vst.msk [vmem:[#allocation2 + $0xe0] sm:$0xff] %vm412, %v373
        %442 = vst.msk [vmem:[#allocation2 + $0xe8] sm:$0xff] %vm412, %v375
        %443 = vst.msk [vmem:[#allocation2 + $0xf0] sm:$0xff] %vm412, %v377
        %444 = vst.msk [vmem:[#allocation2 + $0xf8] sm:$0xff] %vm412, %v379
        %v445 = vld [vmem:[%s186 + $0x2] sm:$0xff]
        %v446 = vld [vmem:[%s186 + $0xa] sm:$0xff]
        %v447 = vld [vmem:[%s186 + $0x1a] sm:$0xff]
        %v448 = vld [vmem:[%s186 + $0x22] sm:$0xff]
        %v449 = vld [vmem:[%s186 + $0x32] sm:$0xff]
        %v450 = vld [vmem:[%s186 + $0x3a] sm:$0xff]
        %v451 = vld [vmem:[%s186 + $0x4a] sm:$0xff]
        %v452 = vld [vmem:[%s186 + $0x52] sm:$0xff]
        %v453 = vld [vmem:[%s186 + $0x62] sm:$0xff]
        %v454 = vld [vmem:[%s186 + $0x6a] sm:$0xff]
        %v455 = vld [vmem:[%s186 + $0x7a] sm:$0xff]
        %v456 = vld [vmem:[%s186 + $0x82] sm:$0xff]
        %v457 = vld [vmem:[%s186 + $0x92] sm:$0xff]
        %v458 = vld [vmem:[%s186 + $0x9a] sm:$0xff]
        %v459 = vld [vmem:[%s186 + $0xaa] sm:$0xff]
        %v460 = vld [vmem:[%s186 + $0xb2] sm:$0xff]
        %v461 = vld [vmem:[%s186 + $0xc2] sm:$0xff]
        %v462 = vld [vmem:[%s186 + $0xca] sm:$0xff]
        %v463 = vld [vmem:[%s186 + $0xda] sm:$0xff]
        %v464 = vld [vmem:[%s186 + $0xe2] sm:$0xff]
        %v465 = vld [vmem:[%s186 + $0xf2] sm:$0xff]
        %v466 = vld [vmem:[%s186 + $0xfa] sm:$0xff]
        %v467 = vld [vmem:[%s186 + $0x10a] sm:$0xff]
        %v468 = vld [vmem:[%s186 + $0x112] sm:$0xff]
        %v469 = vld [vmem:[%s186 + $0x122] sm:$0xff]
        %v470 = vld [vmem:[%s186 + $0x12a] sm:$0xff]
        %v471 = vld [vmem:[%s186 + $0x13a] sm:$0xff]
        %v472 = vld [vmem:[%s186 + $0x142] sm:$0xff]
        %v473 = vld [vmem:[%s186 + $0x152] sm:$0xff]
        %v474 = vld [vmem:[%s186 + $0x15a] sm:$0xff]
        %v475 = vld [vmem:[%s186 + $0x16a] sm:$0xff]
        %v476 = vld [vmem:[%s186 + $0x172] sm:$0xff]
        %509 = vrot.lane.b32.xlu0 %v445, 16
        %v510 = vpop.permute.xlu0 %509
        %511 = vrot.lane.b32.xlu0 %v446, 16
        %v512 = vpop.permute.xlu0 %511
        %513 = vrot.lane.b32.xlu0 %v447, 16
        %v514 = vpop.permute.xlu0 %513
        %515 = vrot.lane.b32.xlu0 %v448, 16
        %v516 = vpop.permute.xlu0 %515
        %517 = vrot.lane.b32.xlu0 %v449, 16
        %v518 = vpop.permute.xlu0 %517
        %519 = vrot.lane.b32.xlu0 %v450, 16
        %v520 = vpop.permute.xlu0 %519
        %521 = vrot.lane.b32.xlu0 %v451, 16
        %v522 = vpop.permute.xlu0 %521
        %523 = vrot.lane.b32.xlu0 %v452, 16
        %v524 = vpop.permute.xlu0 %523
        %525 = vrot.lane.b32.xlu0 %v453, 16
        %v526 = vpop.permute.xlu0 %525
        %527 = vrot.lane.b32.xlu0 %v454, 16
        %v528 = vpop.permute.xlu0 %527
        %529 = vrot.lane.b32.xlu0 %v455, 16
        %v530 = vpop.permute.xlu0 %529
        %531 = vrot.lane.b32.xlu0 %v456, 16
        %v532 = vpop.permute.xlu0 %531
        %533 = vrot.lane.b32.xlu0 %v457, 16
        %v534 = vpop.permute.xlu0 %533
        %535 = vrot.lane.b32.xlu0 %v458, 16
        %v536 = vpop.permute.xlu0 %535
        %537 = vrot.lane.b32.xlu0 %v459, 16
        %v538 = vpop.permute.xlu0 %537
        %539 = vrot.lane.b32.xlu0 %v460, 16
        %v540 = vpop.permute.xlu0 %539
        %541 = vrot.lane.b32.xlu0 %v461, 16
        %v542 = vpop.permute.xlu0 %541
        %543 = vrot.lane.b32.xlu0 %v462, 16
        %v544 = vpop.permute.xlu0 %543
        %545 = vrot.lane.b32.xlu0 %v463, 16
        %v546 = vpop.permute.xlu0 %545
        %547 = vrot.lane.b32.xlu0 %v464, 16
        %v548 = vpop.permute.xlu0 %547
        %549 = vrot.lane.b32.xlu0 %v465, 16
        %v550 = vpop.permute.xlu0 %549
        %551 = vrot.lane.b32.xlu0 %v466, 16
        %v552 = vpop.permute.xlu0 %551
        %553 = vrot.lane.b32.xlu0 %v467, 16
        %v554 = vpop.permute.xlu0 %553
        %555 = vrot.lane.b32.xlu0 %v468, 16
        %v556 = vpop.permute.xlu0 %555
        %557 = vrot.lane.b32.xlu0 %v469, 16
        %v558 = vpop.permute.xlu0 %557
        %559 = vrot.lane.b32.xlu0 %v470, 16
        %v560 = vpop.permute.xlu0 %559
        %561 = vrot.lane.b32.xlu0 %v471, 16
        %v562 = vpop.permute.xlu0 %561
        %563 = vrot.lane.b32.xlu0 %v472, 16
        %v564 = vpop.permute.xlu0 %563
        %565 = vrot.lane.b32.xlu0 %v473, 16
        %v566 = vpop.permute.xlu0 %565
        %567 = vrot.lane.b32.xlu0 %v474, 16
        %v568 = vpop.permute.xlu0 %567
        %569 = vrot.lane.b32.xlu0 %v475, 16
        %v570 = vpop.permute.xlu0 %569
        %571 = vrot.lane.b32.xlu0 %v476, 16
        %v572 = vpop.permute.xlu0 %571
        %vm605 = vcmask 195712
        %606 = vst.msk [vmem:[#allocation2] sm:$0xff] %vm605, %v510
        %607 = vst.msk [vmem:[#allocation2 + $0x8] sm:$0xff] %vm605, %v512
        %608 = vst.msk [vmem:[#allocation2 + $0x10] sm:$0xff] %vm605, %v514
        %609 = vst.msk [vmem:[#allocation2 + $0x18] sm:$0xff] %vm605, %v516
        %610 = vst.msk [vmem:[#allocation2 + $0x20] sm:$0xff] %vm605, %v518
        %611 = vst.msk [vmem:[#allocation2 + $0x28] sm:$0xff] %vm605, %v520
        %612 = vst.msk [vmem:[#allocation2 + $0x30] sm:$0xff] %vm605, %v522
        %613 = vst.msk [vmem:[#allocation2 + $0x38] sm:$0xff] %vm605, %v524
        %614 = vst.msk [vmem:[#allocation2 + $0x40] sm:$0xff] %vm605, %v526
        %615 = vst.msk [vmem:[#allocation2 + $0x48] sm:$0xff] %vm605, %v528
        %616 = vst.msk [vmem:[#allocation2 + $0x50] sm:$0xff] %vm605, %v530
        %617 = vst.msk [vmem:[#allocation2 + $0x58] sm:$0xff] %vm605, %v532
        %618 = vst.msk [vmem:[#allocation2 + $0x60] sm:$0xff] %vm605, %v534
        %619 = vst.msk [vmem:[#allocation2 + $0x68] sm:$0xff] %vm605, %v536
        %620 = vst.msk [vmem:[#allocation2 + $0x70] sm:$0xff] %vm605, %v538
        %621 = vst.msk [vmem:[#allocation2 + $0x78] sm:$0xff] %vm605, %v540
        %622 = vst.msk [vmem:[#allocation2 + $0x80] sm:$0xff] %vm605, %v542
        %623 = vst.msk [vmem:[#allocation2 + $0x88] sm:$0xff] %vm605, %v544
        %624 = vst.msk [vmem:[#allocation2 + $0x90] sm:$0xff] %vm605, %v546
        %625 = vst.msk [vmem:[#allocation2 + $0x98] sm:$0xff] %vm605, %v548
        %626 = vst.msk [vmem:[#allocation2 + $0xa0] sm:$0xff] %vm605, %v550
        %627 = vst.msk [vmem:[#allocation2 + $0xa8] sm:$0xff] %vm605, %v552
        %628 = vst.msk [vmem:[#allocation2 + $0xb0] sm:$0xff] %vm605, %v554
        %629 = vst.msk [vmem:[#allocation2 + $0xb8] sm:$0xff] %vm605, %v556
        %630 = vst.msk [vmem:[#allocation2 + $0xc0] sm:$0xff] %vm605, %v558
        %631 = vst.msk [vmem:[#allocation2 + $0xc8] sm:$0xff] %vm605, %v560
        %632 = vst.msk [vmem:[#allocation2 + $0xd0] sm:$0xff] %vm605, %v562
        %633 = vst.msk [vmem:[#allocation2 + $0xd8] sm:$0xff] %vm605, %v564
        %634 = vst.msk [vmem:[#allocation2 + $0xe0] sm:$0xff] %vm605, %v566
        %635 = vst.msk [vmem:[#allocation2 + $0xe8] sm:$0xff] %vm605, %v568
        %636 = vst.msk [vmem:[#allocation2 + $0xf0] sm:$0xff] %vm605, %v570
        %637 = vst.msk [vmem:[#allocation2 + $0xf8] sm:$0xff] %vm605, %v572
        %s638 = sadd.s32 %s184, 1
        %s639 = smul.u32 %s638, 24
        %s640 = scalar_lea.vmem %s182, %s639
        %v641 = vld [vmem:[%s640] sm:$0xff]
        %v642 = vld [vmem:[%s640 + $0x8] sm:$0xff]
        %v643 = vld [vmem:[%s640 + $0x18] sm:$0xff]
        %v644 = vld [vmem:[%s640 + $0x20] sm:$0xff]
        %v645 = vld [vmem:[%s640 + $0x30] sm:$0xff]
        %v646 = vld [vmem:[%s640 + $0x38] sm:$0xff]
        %v647 = vld [vmem:[%s640 + $0x48] sm:$0xff]
        %v648 = vld [vmem:[%s640 + $0x50] sm:$0xff]
        %v649 = vld [vmem:[%s640 + $0x60] sm:$0xff]
        %v650 = vld [vmem:[%s640 + $0x68] sm:$0xff]
        %v651 = vld [vmem:[%s640 + $0x78] sm:$0xff]
        %v652 = vld [vmem:[%s640 + $0x80] sm:$0xff]
        %v653 = vld [vmem:[%s640 + $0x90] sm:$0xff]
        %v654 = vld [vmem:[%s640 + $0x98] sm:$0xff]
        %v655 = vld [vmem:[%s640 + $0xa8] sm:$0xff]
        %v656 = vld [vmem:[%s640 + $0xb0] sm:$0xff]
        %v657 = vld [vmem:[%s640 + $0xc0] sm:$0xff]
        %v658 = vld [vmem:[%s640 + $0xc8] sm:$0xff]
        %v659 = vld [vmem:[%s640 + $0xd8] sm:$0xff]
        %v660 = vld [vmem:[%s640 + $0xe0] sm:$0xff]
        %v661 = vld [vmem:[%s640 + $0xf0] sm:$0xff]
        %v662 = vld [vmem:[%s640 + $0xf8] sm:$0xff]
        %v663 = vld [vmem:[%s640 + $0x108] sm:$0xff]
        %v664 = vld [vmem:[%s640 + $0x110] sm:$0xff]
        %v665 = vld [vmem:[%s640 + $0x120] sm:$0xff]
        %v666 = vld [vmem:[%s640 + $0x128] sm:$0xff]
        %v667 = vld [vmem:[%s640 + $0x138] sm:$0xff]
        %v668 = vld [vmem:[%s640 + $0x140] sm:$0xff]
        %v669 = vld [vmem:[%s640 + $0x150] sm:$0xff]
        %v670 = vld [vmem:[%s640 + $0x158] sm:$0xff]
        %v671 = vld [vmem:[%s640 + $0x168] sm:$0xff]
        %v672 = vld [vmem:[%s640 + $0x170] sm:$0xff]
        %705 = vrot.lane.b32.xlu0 %v641, 24
        %v706 = vpop.permute.xlu0 %705
        %707 = vrot.lane.b32.xlu0 %v642, 24
        %v708 = vpop.permute.xlu0 %707
        %709 = vrot.lane.b32.xlu0 %v643, 24
        %v710 = vpop.permute.xlu0 %709
        %711 = vrot.lane.b32.xlu0 %v644, 24
        %v712 = vpop.permute.xlu0 %711
        %713 = vrot.lane.b32.xlu0 %v645, 24
        %v714 = vpop.permute.xlu0 %713
        %715 = vrot.lane.b32.xlu0 %v646, 24
        %v716 = vpop.permute.xlu0 %715
        %717 = vrot.lane.b32.xlu0 %v647, 24
        %v718 = vpop.permute.xlu0 %717
        %719 = vrot.lane.b32.xlu0 %v648, 24
        %v720 = vpop.permute.xlu0 %719
        %721 = vrot.lane.b32.xlu0 %v649, 24
        %v722 = vpop.permute.xlu0 %721
        %723 = vrot.lane.b32.xlu0 %v650, 24
        %v724 = vpop.permute.xlu0 %723
        %725 = vrot.lane.b32.xlu0 %v651, 24
        %v726 = vpop.permute.xlu0 %725
        %727 = vrot.lane.b32.xlu0 %v652, 24
        %v728 = vpop.permute.xlu0 %727
        %729 = vrot.lane.b32.xlu0 %v653, 24
        %v730 = vpop.permute.xlu0 %729
        %731 = vrot.lane.b32.xlu0 %v654, 24
        %v732 = vpop.permute.xlu0 %731
        %733 = vrot.lane.b32.xlu0 %v655, 24
        %v734 = vpop.permute.xlu0 %733
        %735 = vrot.lane.b32.xlu0 %v656, 24
        %v736 = vpop.permute.xlu0 %735
        %737 = vrot.lane.b32.xlu0 %v657, 24
        %v738 = vpop.permute.xlu0 %737
        %739 = vrot.lane.b32.xlu0 %v658, 24
        %v740 = vpop.permute.xlu0 %739
        %741 = vrot.lane.b32.xlu0 %v659, 24
        %v742 = vpop.permute.xlu0 %741
        %743 = vrot.lane.b32.xlu0 %v660, 24
        %v744 = vpop.permute.xlu0 %743
        %745 = vrot.lane.b32.xlu0 %v661, 24
        %v746 = vpop.permute.xlu0 %745
        %747 = vrot.lane.b32.xlu0 %v662, 24
        %v748 = vpop.permute.xlu0 %747
        %749 = vrot.lane.b32.xlu0 %v663, 24
        %v750 = vpop.permute.xlu0 %749
        %751 = vrot.lane.b32.xlu0 %v664, 24
        %v752 = vpop.permute.xlu0 %751
        %753 = vrot.lane.b32.xlu0 %v665, 24
        %v754 = vpop.permute.xlu0 %753
        %755 = vrot.lane.b32.xlu0 %v666, 24
        %v756 = vpop.permute.xlu0 %755
        %757 = vrot.lane.b32.xlu0 %v667, 24
        %v758 = vpop.permute.xlu0 %757
        %759 = vrot.lane.b32.xlu0 %v668, 24
        %v760 = vpop.permute.xlu0 %759
        %761 = vrot.lane.b32.xlu0 %v669, 24
        %v762 = vpop.permute.xlu0 %761
        %763 = vrot.lane.b32.xlu0 %v670, 24
        %v764 = vpop.permute.xlu0 %763
        %765 = vrot.lane.b32.xlu0 %v671, 24
        %v766 = vpop.permute.xlu0 %765
        %767 = vrot.lane.b32.xlu0 %v672, 24
        %v768 = vpop.permute.xlu0 %767
        %vm801 = vcmask 261312
        %802 = vst.msk [vmem:[#allocation2] sm:$0xff] %vm801, %v706
        %803 = vst.msk [vmem:[#allocation2 + $0x8] sm:$0xff] %vm801, %v708
        %804 = vst.msk [vmem:[#allocation2 + $0x10] sm:$0xff] %vm801, %v710
        %805 = vst.msk [vmem:[#allocation2 + $0x18] sm:$0xff] %vm801, %v712
        %806 = vst.msk [vmem:[#allocation2 + $0x20] sm:$0xff] %vm801, %v714
        %807 = vst.msk [vmem:[#allocation2 + $0x28] sm:$0xff] %vm801, %v716
        %808 = vst.msk [vmem:[#allocation2 + $0x30] sm:$0xff] %vm801, %v718
        %809 = vst.msk [vmem:[#allocation2 + $0x38] sm:$0xff] %vm801, %v720
        %810 = vst.msk [vmem:[#allocation2 + $0x40] sm:$0xff] %vm801, %v722
        %811 = vst.msk [vmem:[#allocation2 + $0x48] sm:$0xff] %vm801, %v724
        %812 = vst.msk [vmem:[#allocation2 + $0x50] sm:$0xff] %vm801, %v726
        %813 = vst.msk [vmem:[#allocation2 + $0x58] sm:$0xff] %vm801, %v728
        %814 = vst.msk [vmem:[#allocation2 + $0x60] sm:$0xff] %vm801, %v730
        %815 = vst.msk [vmem:[#allocation2 + $0x68] sm:$0xff] %vm801, %v732
        %816 = vst.msk [vmem:[#allocation2 + $0x70] sm:$0xff] %vm801, %v734
        %817 = vst.msk [vmem:[#allocation2 + $0x78] sm:$0xff] %vm801, %v736
        %818 = vst.msk [vmem:[#allocation2 + $0x80] sm:$0xff] %vm801, %v738
        %819 = vst.msk [vmem:[#allocation2 + $0x88] sm:$0xff] %vm801, %v740
        %820 = vst.msk [vmem:[#allocation2 + $0x90] sm:$0xff] %vm801, %v742
        %821 = vst.msk [vmem:[#allocation2 + $0x98] sm:$0xff] %vm801, %v744
        %822 = vst.msk [vmem:[#allocation2 + $0xa0] sm:$0xff] %vm801, %v746
        %823 = vst.msk [vmem:[#allocation2 + $0xa8] sm:$0xff] %vm801, %v748
        %824 = vst.msk [vmem:[#allocation2 + $0xb0] sm:$0xff] %vm801, %v750
        %825 = vst.msk [vmem:[#allocation2 + $0xb8] sm:$0xff] %vm801, %v752
        %826 = vst.msk [vmem:[#allocation2 + $0xc0] sm:$0xff] %vm801, %v754
        %827 = vst.msk [vmem:[#allocation2 + $0xc8] sm:$0xff] %vm801, %v756
        %828 = vst.msk [vmem:[#allocation2 + $0xd0] sm:$0xff] %vm801, %v758
        %829 = vst.msk [vmem:[#allocation2 + $0xd8] sm:$0xff] %vm801, %v760
        %830 = vst.msk [vmem:[#allocation2 + $0xe0] sm:$0xff] %vm801, %v762
        %831 = vst.msk [vmem:[#allocation2 + $0xe8] sm:$0xff] %vm801, %v764
        %832 = vst.msk [vmem:[#allocation2 + $0xf0] sm:$0xff] %vm801, %v766
        %833 = vst.msk [vmem:[#allocation2 + $0xf8] sm:$0xff] %vm801, %v768
        %v834 = vld [vmem:[%s640 + $0x1] sm:$0xff]
        %v835 = vld [vmem:[%s640 + $0x9] sm:$0xff]
        %v836 = vld [vmem:[%s640 + $0x19] sm:$0xff]
        %v837 = vld [vmem:[%s640 + $0x21] sm:$0xff]
        %v838 = vld [vmem:[%s640 + $0x31] sm:$0xff]
        %v839 = vld [vmem:[%s640 + $0x39] sm:$0xff]
        %v840 = vld [vmem:[%s640 + $0x49] sm:$0xff]
        %v841 = vld [vmem:[%s640 + $0x51] sm:$0xff]
        %v842 = vld [vmem:[%s640 + $0x61] sm:$0xff]
        %v843 = vld [vmem:[%s640 + $0x69] sm:$0xff]
        %v844 = vld [vmem:[%s640 + $0x79] sm:$0xff]
        %v845 = vld [vmem:[%s640 + $0x81] sm:$0xff]
        %v846 = vld [vmem:[%s640 + $0x91] sm:$0xff]
        %v847 = vld [vmem:[%s640 + $0x99] sm:$0xff]
        %v848 = vld [vmem:[%s640 + $0xa9] sm:$0xff]
        %v849 = vld [vmem:[%s640 + $0xb1] sm:$0xff]
        %v850 = vld [vmem:[%s640 + $0xc1] sm:$0xff]
        %v851 = vld [vmem:[%s640 + $0xc9] sm:$0xff]
        %v852 = vld [vmem:[%s640 + $0xd9] sm:$0xff]
        %v853 = vld [vmem:[%s640 + $0xe1] sm:$0xff]
        %v854 = vld [vmem:[%s640 + $0xf1] sm:$0xff]
        %v855 = vld [vmem:[%s640 + $0xf9] sm:$0xff]
        %v856 = vld [vmem:[%s640 + $0x109] sm:$0xff]
        %v857 = vld [vmem:[%s640 + $0x111] sm:$0xff]
        %v858 = vld [vmem:[%s640 + $0x121] sm:$0xff]
        %v859 = vld [vmem:[%s640 + $0x129] sm:$0xff]
        %v860 = vld [vmem:[%s640 + $0x139] sm:$0xff]
        %v861 = vld [vmem:[%s640 + $0x141] sm:$0xff]
        %v862 = vld [vmem:[%s640 + $0x151] sm:$0xff]
        %v863 = vld [vmem:[%s640 + $0x159] sm:$0xff]
        %v864 = vld [vmem:[%s640 + $0x169] sm:$0xff]
        %v865 = vld [vmem:[%s640 + $0x171] sm:$0xff]
        %898 = vrot.lane.b32.xlu0 %v834, 32
        %v899 = vpop.permute.xlu0 %898
        %900 = vrot.lane.b32.xlu0 %v835, 32
        %v901 = vpop.permute.xlu0 %900
        %902 = vrot.lane.b32.xlu0 %v836, 32
        %v903 = vpop.permute.xlu0 %902
        %904 = vrot.lane.b32.xlu0 %v837, 32
        %v905 = vpop.permute.xlu0 %904
        %906 = vrot.lane.b32.xlu0 %v838, 32
        %v907 = vpop.permute.xlu0 %906
        %908 = vrot.lane.b32.xlu0 %v839, 32
        %v909 = vpop.permute.xlu0 %908
        %910 = vrot.lane.b32.xlu0 %v840, 32
        %v911 = vpop.permute.xlu0 %910
        %912 = vrot.lane.b32.xlu0 %v841, 32
        %v913 = vpop.permute.xlu0 %912
        %914 = vrot.lane.b32.xlu0 %v842, 32
        %v915 = vpop.permute.xlu0 %914
        %916 = vrot.lane.b32.xlu0 %v843, 32
        %v917 = vpop.permute.xlu0 %916
        %918 = vrot.lane.b32.xlu0 %v844, 32
        %v919 = vpop.permute.xlu0 %918
        %920 = vrot.lane.b32.xlu0 %v845, 32
        %v921 = vpop.permute.xlu0 %920
        %922 = vrot.lane.b32.xlu0 %v846, 32
        %v923 = vpop.permute.xlu0 %922
        %924 = vrot.lane.b32.xlu0 %v847, 32
        %v925 = vpop.permute.xlu0 %924
        %926 = vrot.lane.b32.xlu0 %v848, 32
        %v927 = vpop.permute.xlu0 %926
        %928 = vrot.lane.b32.xlu0 %v849, 32
        %v929 = vpop.permute.xlu0 %928
        %930 = vrot.lane.b32.xlu0 %v850, 32
        %v931 = vpop.permute.xlu0 %930
        %932 = vrot.lane.b32.xlu0 %v851, 32
        %v933 = vpop.permute.xlu0 %932
        %934 = vrot.lane.b32.xlu0 %v852, 32
        %v935 = vpop.permute.xlu0 %934
        %936 = vrot.lane.b32.xlu0 %v853, 32
        %v937 = vpop.permute.xlu0 %936
        %938 = vrot.lane.b32.xlu0 %v854, 32
        %v939 = vpop.permute.xlu0 %938
        %940 = vrot.lane.b32.xlu0 %v855, 32
        %v941 = vpop.permute.xlu0 %940
        %942 = vrot.lane.b32.xlu0 %v856, 32
        %v943 = vpop.permute.xlu0 %942
        %944 = vrot.lane.b32.xlu0 %v857, 32
        %v945 = vpop.permute.xlu0 %944
        %946 = vrot.lane.b32.xlu0 %v858, 32
        %v947 = vpop.permute.xlu0 %946
        %948 = vrot.lane.b32.xlu0 %v859, 32
        %v949 = vpop.permute.xlu0 %948
        %950 = vrot.lane.b32.xlu0 %v860, 32
        %v951 = vpop.permute.xlu0 %950
        %952 = vrot.lane.b32.xlu0 %v861, 32
        %v953 = vpop.permute.xlu0 %952
        %954 = vrot.lane.b32.xlu0 %v862, 32
        %v955 = vpop.permute.xlu0 %954
        %956 = vrot.lane.b32.xlu0 %v863, 32
        %v957 = vpop.permute.xlu0 %956
        %958 = vrot.lane.b32.xlu0 %v864, 32
        %v959 = vpop.permute.xlu0 %958
        %960 = vrot.lane.b32.xlu0 %v865, 32
        %v961 = vpop.permute.xlu0 %960
        %vm994 = vcmask 326912
        %995 = vst.msk [vmem:[#allocation2] sm:$0xff] %vm994, %v899
        %996 = vst.msk [vmem:[#allocation2 + $0x8] sm:$0xff] %vm994, %v901
        %997 = vst.msk [vmem:[#allocation2 + $0x10] sm:$0xff] %vm994, %v903
        %998 = vst.msk [vmem:[#allocation2 + $0x18] sm:$0xff] %vm994, %v905
        %999 = vst.msk [vmem:[#allocation2 + $0x20] sm:$0xff] %vm994, %v907
        %1000 = vst.msk [vmem:[#allocation2 + $0x28] sm:$0xff] %vm994, %v909
        %1001 = vst.msk [vmem:[#allocation2 + $0x30] sm:$0xff] %vm994, %v911
        %1002 = vst.msk [vmem:[#allocation2 + $0x38] sm:$0xff] %vm994, %v913
        %1003 = vst.msk [vmem:[#allocation2 + $0x40] sm:$0xff] %vm994, %v915
        %1004 = vst.msk [vmem:[#allocation2 + $0x48] sm:$0xff] %vm994, %v917
        %1005 = vst.msk [vmem:[#allocation2 + $0x50] sm:$0xff] %vm994, %v919
        %1006 = vst.msk [vmem:[#allocation2 + $0x58] sm:$0xff] %vm994, %v921
        %1007 = vst.msk [vmem:[#allocation2 + $0x60] sm:$0xff] %vm994, %v923
        %1008 = vst.msk [vmem:[#allocation2 + $0x68] sm:$0xff] %vm994, %v925
        %1009 = vst.msk [vmem:[#allocation2 + $0x70] sm:$0xff] %vm994, %v927
        %1010 = vst.msk [vmem:[#allocation2 + $0x78] sm:$0xff] %vm994, %v929
        %1011 = vst.msk [vmem:[#allocation2 + $0x80] sm:$0xff] %vm994, %v931
        %1012 = vst.msk [vmem:[#allocation2 + $0x88] sm:$0xff] %vm994, %v933
        %1013 = vst.msk [vmem:[#allocation2 + $0x90] sm:$0xff] %vm994, %v935
        %1014 = vst.msk [vmem:[#allocation2 + $0x98] sm:$0xff] %vm994, %v937
        %1015 = vst.msk [vmem:[#allocation2 + $0xa0] sm:$0xff] %vm994, %v939
        %1016 = vst.msk [vmem:[#allocation2 + $0xa8] sm:$0xff] %vm994, %v941
        %1017 = vst.msk [vmem:[#allocation2 + $0xb0] sm:$0xff] %vm994, %v943
        %1018 = vst.msk [vmem:[#allocation2 + $0xb8] sm:$0xff] %vm994, %v945
        %1019 = vst.msk [vmem:[#allocation2 + $0xc0] sm:$0xff] %vm994, %v947
        %1020 = vst.msk [vmem:[#allocation2 + $0xc8] sm:$0xff] %vm994, %v949
        %1021 = vst.msk [vmem:[#allocation2 + $0xd0] sm:$0xff] %vm994, %v951
        %1022 = vst.msk [vmem:[#allocation2 + $0xd8] sm:$0xff] %vm994, %v953
        %1023 = vst.msk [vmem:[#allocation2 + $0xe0] sm:$0xff] %vm994, %v955
        %1024 = vst.msk [vmem:[#allocation2 + $0xe8] sm:$0xff] %vm994, %v957
        %1025 = vst.msk [vmem:[#allocation2 + $0xf0] sm:$0xff] %vm994, %v959
        %1026 = vst.msk [vmem:[#allocation2 + $0xf8] sm:$0xff] %vm994, %v961
        %v1027 = vld [vmem:[%s640 + $0x2] sm:$0xff]
        %v1028 = vld [vmem:[%s640 + $0xa] sm:$0xff]
        %v1029 = vld [vmem:[%s640 + $0x1a] sm:$0xff]
        %v1030 = vld [vmem:[%s640 + $0x22] sm:$0xff]
        %v1031 = vld [vmem:[%s640 + $0x32] sm:$0xff]
        %v1032 = vld [vmem:[%s640 + $0x3a] sm:$0xff]
        %v1033 = vld [vmem:[%s640 + $0x4a] sm:$0xff]
        %v1034 = vld [vmem:[%s640 + $0x52] sm:$0xff]
        %v1035 = vld [vmem:[%s640 + $0x62] sm:$0xff]
        %v1036 = vld [vmem:[%s640 + $0x6a] sm:$0xff]
        %v1037 = vld [vmem:[%s640 + $0x7a] sm:$0xff]
        %v1038 = vld [vmem:[%s640 + $0x82] sm:$0xff]
        %v1039 = vld [vmem:[%s640 + $0x92] sm:$0xff]
        %v1040 = vld [vmem:[%s640 + $0x9a] sm:$0xff]
        %v1041 = vld [vmem:[%s640 + $0xaa] sm:$0xff]
        %v1042 = vld [vmem:[%s640 + $0xb2] sm:$0xff]
        %v1043 = vld [vmem:[%s640 + $0xc2] sm:$0xff]
        %v1044 = vld [vmem:[%s640 + $0xca] sm:$0xff]
        %v1045 = vld [vmem:[%s640 + $0xda] sm:$0xff]
        %v1046 = vld [vmem:[%s640 + $0xe2] sm:$0xff]
        %v1047 = vld [vmem:[%s640 + $0xf2] sm:$0xff]
        %v1048 = vld [vmem:[%s640 + $0xfa] sm:$0xff]
        %v1049 = vld [vmem:[%s640 + $0x10a] sm:$0xff]
        %v1050 = vld [vmem:[%s640 + $0x112] sm:$0xff]
        %v1051 = vld [vmem:[%s640 + $0x122] sm:$0xff]
        %v1052 = vld [vmem:[%s640 + $0x12a] sm:$0xff]
        %v1053 = vld [vmem:[%s640 + $0x13a] sm:$0xff]
        %v1054 = vld [vmem:[%s640 + $0x142] sm:$0xff]
        %v1055 = vld [vmem:[%s640 + $0x152] sm:$0xff]
        %v1056 = vld [vmem:[%s640 + $0x15a] sm:$0xff]
        %v1057 = vld [vmem:[%s640 + $0x16a] sm:$0xff]
        %v1058 = vld [vmem:[%s640 + $0x172] sm:$0xff]
        %1091 = vrot.lane.b32.xlu0 %v1027, 40
        %v1092 = vpop.permute.xlu0 %1091
        %1093 = vrot.lane.b32.xlu0 %v1028, 40
        %v1094 = vpop.permute.xlu0 %1093
        %1095 = vrot.lane.b32.xlu0 %v1029, 40
        %v1096 = vpop.permute.xlu0 %1095
        %1097 = vrot.lane.b32.xlu0 %v1030, 40
        %v1098 = vpop.permute.xlu0 %1097
        %1099 = vrot.lane.b32.xlu0 %v1031, 40
        %v1100 = vpop.permute.xlu0 %1099
        %1101 = vrot.lane.b32.xlu0 %v1032, 40
        %v1102 = vpop.permute.xlu0 %1101
        %1103 = vrot.lane.b32.xlu0 %v1033, 40
        %v1104 = vpop.permute.xlu0 %1103
        %1105 = vrot.lane.b32.xlu0 %v1034, 40
        %v1106 = vpop.permute.xlu0 %1105
        %1107 = vrot.lane.b32.xlu0 %v1035, 40
        %v1108 = vpop.permute.xlu0 %1107
        %1109 = vrot.lane.b32.xlu0 %v1036, 40
        %v1110 = vpop.permute.xlu0 %1109
        %1111 = vrot.lane.b32.xlu0 %v1037, 40
        %v1112 = vpop.permute.xlu0 %1111
        %1113 = vrot.lane.b32.xlu0 %v1038, 40
        %v1114 = vpop.permute.xlu0 %1113
        %1115 = vrot.lane.b32.xlu0 %v1039, 40
        %v1116 = vpop.permute.xlu0 %1115
        %1117 = vrot.lane.b32.xlu0 %v1040, 40
        %v1118 = vpop.permute.xlu0 %1117
        %1119 = vrot.lane.b32.xlu0 %v1041, 40
        %v1120 = vpop.permute.xlu0 %1119
        %1121 = vrot.lane.b32.xlu0 %v1042, 40
        %v1122 = vpop.permute.xlu0 %1121
        %1123 = vrot.lane.b32.xlu0 %v1043, 40
        %v1124 = vpop.permute.xlu0 %1123
        %1125 = vrot.lane.b32.xlu0 %v1044, 40
        %v1126 = vpop.permute.xlu0 %1125
        %1127 = vrot.lane.b32.xlu0 %v1045, 40
        %v1128 = vpop.permute.xlu0 %1127
        %1129 = vrot.lane.b32.xlu0 %v1046, 40
        %v1130 = vpop.permute.xlu0 %1129
        %1131 = vrot.lane.b32.xlu0 %v1047, 40
        %v1132 = vpop.permute.xlu0 %1131
        %1133 = vrot.lane.b32.xlu0 %v1048, 40
        %v1134 = vpop.permute.xlu0 %1133
        %1135 = vrot.lane.b32.xlu0 %v1049, 40
        %v1136 = vpop.permute.xlu0 %1135
        %1137 = vrot.lane.b32.xlu0 %v1050, 40
        %v1138 = vpop.permute.xlu0 %1137
        %1139 = vrot.lane.b32.xlu0 %v1051, 40
        %v1140 = vpop.permute.xlu0 %1139
        %1141 = vrot.lane.b32.xlu0 %v1052, 40
        %v1142 = vpop.permute.xlu0 %1141
        %1143 = vrot.lane.b32.xlu0 %v1053, 40
        %v1144 = vpop.permute.xlu0 %1143
        %1145 = vrot.lane.b32.xlu0 %v1054, 40
        %v1146 = vpop.permute.xlu0 %1145
        %1147 = vrot.lane.b32.xlu0 %v1055, 40
        %v1148 = vpop.permute.xlu0 %1147
        %1149 = vrot.lane.b32.xlu0 %v1056, 40
        %v1150 = vpop.permute.xlu0 %1149
        %1151 = vrot.lane.b32.xlu0 %v1057, 40
        %v1152 = vpop.permute.xlu0 %1151
        %1153 = vrot.lane.b32.xlu0 %v1058, 40
        %v1154 = vpop.permute.xlu0 %1153
        %vm1187 = vcmask 392512
        %1188 = vst.msk [vmem:[#allocation2] sm:$0xff] %vm1187, %v1092
        %1189 = vst.msk [vmem:[#allocation2 + $0x8] sm:$0xff] %vm1187, %v1094
        %1190 = vst.msk [vmem:[#allocation2 + $0x10] sm:$0xff] %vm1187, %v1096
        %1191 = vst.msk [vmem:[#allocation2 + $0x18] sm:$0xff] %vm1187, %v1098
        %1192 = vst.msk [vmem:[#allocation2 + $0x20] sm:$0xff] %vm1187, %v1100
        %1193 = vst.msk [vmem:[#allocation2 + $0x28] sm:$0xff] %vm1187, %v1102
        %1194 = vst.msk [vmem:[#allocation2 + $0x30] sm:$0xff] %vm1187, %v1104
        %1195 = vst.msk [vmem:[#allocation2 + $0x38] sm:$0xff] %vm1187, %v1106
        %1196 = vst.msk [vmem:[#allocation2 + $0x40] sm:$0xff] %vm1187, %v1108
        %1197 = vst.msk [vmem:[#allocation2 + $0x48] sm:$0xff] %vm1187, %v1110
        %1198 = vst.msk [vmem:[#allocation2 + $0x50] sm:$0xff] %vm1187, %v1112
        %1199 = vst.msk [vmem:[#allocation2 + $0x58] sm:$0xff] %vm1187, %v1114
        %1200 = vst.msk [vmem:[#allocation2 + $0x60] sm:$0xff] %vm1187, %v1116
        %1201 = vst.msk [vmem:[#allocation2 + $0x68] sm:$0xff] %vm1187, %v1118
        %1202 = vst.msk [vmem:[#allocation2 + $0x70] sm:$0xff] %vm1187, %v1120
        %1203 = vst.msk [vmem:[#allocation2 + $0x78] sm:$0xff] %vm1187, %v1122
        %1204 = vst.msk [vmem:[#allocation2 + $0x80] sm:$0xff] %vm1187, %v1124
        %1205 = vst.msk [vmem:[#allocation2 + $0x88] sm:$0xff] %vm1187, %v1126
        %1206 = vst.msk [vmem:[#allocation2 + $0x90] sm:$0xff] %vm1187, %v1128
        %1207 = vst.msk [vmem:[#allocation2 + $0x98] sm:$0xff] %vm1187, %v1130
        %1208 = vst.msk [vmem:[#allocation2 + $0xa0] sm:$0xff] %vm1187, %v1132
        %1209 = vst.msk [vmem:[#allocation2 + $0xa8] sm:$0xff] %vm1187, %v1134
        %1210 = vst.msk [vmem:[#allocation2 + $0xb0] sm:$0xff] %vm1187, %v1136
        %1211 = vst.msk [vmem:[#allocation2 + $0xb8] sm:$0xff] %vm1187, %v1138
        %1212 = vst.msk [vmem:[#allocation2 + $0xc0] sm:$0xff] %vm1187, %v1140
        %1213 = vst.msk [vmem:[#allocation2 + $0xc8] sm:$0xff] %vm1187, %v1142
        %1214 = vst.msk [vmem:[#allocation2 + $0xd0] sm:$0xff] %vm1187, %v1144
        %1215 = vst.msk [vmem:[#allocation2 + $0xd8] sm:$0xff] %vm1187, %v1146
        %1216 = vst.msk [vmem:[#allocation2 + $0xe0] sm:$0xff] %vm1187, %v1148
        %1217 = vst.msk [vmem:[#allocation2 + $0xe8] sm:$0xff] %vm1187, %v1150
        %1218 = vst.msk [vmem:[#allocation2 + $0xf0] sm:$0xff] %vm1187, %v1152
        %1219 = vst.msk [vmem:[#allocation2 + $0xf8] sm:$0xff] %vm1187, %v1154
        %s1220 = sadd.s32 %s184, 2
        %s1221 = smul.u32 %s1220, 24
        %s1222 = scalar_lea.vmem %s182, %s1221
        %v1223 = vld [vmem:[%s1222] sm:$0xff]
        %v1224 = vld [vmem:[%s1222 + $0x8] sm:$0xff]
        %v1225 = vld [vmem:[%s1222 + $0x18] sm:$0xff]
        %v1226 = vld [vmem:[%s1222 + $0x20] sm:$0xff]
        %v1227 = vld [vmem:[%s1222 + $0x30] sm:$0xff]
        %v1228 = vld [vmem:[%s1222 + $0x38] sm:$0xff]
        %v1229 = vld [vmem:[%s1222 + $0x48] sm:$0xff]
        %v1230 = vld [vmem:[%s1222 + $0x50] sm:$0xff]
        %v1231 = vld [vmem:[%s1222 + $0x60] sm:$0xff]
        %v1232 = vld [vmem:[%s1222 + $0x68] sm:$0xff]
        %v1233 = vld [vmem:[%s1222 + $0x78] sm:$0xff]
        %v1234 = vld [vmem:[%s1222 + $0x80] sm:$0xff]
        %v1235 = vld [vmem:[%s1222 + $0x90] sm:$0xff]
        %v1236 = vld [vmem:[%s1222 + $0x98] sm:$0xff]
        %v1237 = vld [vmem:[%s1222 + $0xa8] sm:$0xff]
        %v1238 = vld [vmem:[%s1222 + $0xb0] sm:$0xff]
        %v1239 = vld [vmem:[%s1222 + $0xc0] sm:$0xff]
        %v1240 = vld [vmem:[%s1222 + $0xc8] sm:$0xff]
        %v1241 = vld [vmem:[%s1222 + $0xd8] sm:$0xff]
        %v1242 = vld [vmem:[%s1222 + $0xe0] sm:$0xff]
        %v1243 = vld [vmem:[%s1222 + $0xf0] sm:$0xff]
        %v1244 = vld [vmem:[%s1222 + $0xf8] sm:$0xff]
        %v1245 = vld [vmem:[%s1222 + $0x108] sm:$0xff]
        %v1246 = vld [vmem:[%s1222 + $0x110] sm:$0xff]
        %v1247 = vld [vmem:[%s1222 + $0x120] sm:$0xff]
        %v1248 = vld [vmem:[%s1222 + $0x128] sm:$0xff]
        %v1249 = vld [vmem:[%s1222 + $0x138] sm:$0xff]
        %v1250 = vld [vmem:[%s1222 + $0x140] sm:$0xff]
        %v1251 = vld [vmem:[%s1222 + $0x150] sm:$0xff]
        %v1252 = vld [vmem:[%s1222 + $0x158] sm:$0xff]
        %v1253 = vld [vmem:[%s1222 + $0x168] sm:$0xff]
        %v1254 = vld [vmem:[%s1222 + $0x170] sm:$0xff]
        %1287 = vrot.lane.b32.xlu0 %v1223, 48
        %v1288 = vpop.permute.xlu0 %1287
        %1289 = vrot.lane.b32.xlu0 %v1224, 48
        %v1290 = vpop.permute.xlu0 %1289
        %1291 = vrot.lane.b32.xlu0 %v1225, 48
        %v1292 = vpop.permute.xlu0 %1291
        %1293 = vrot.lane.b32.xlu0 %v1226, 48
        %v1294 = vpop.permute.xlu0 %1293
        %1295 = vrot.lane.b32.xlu0 %v1227, 48
        %v1296 = vpop.permute.xlu0 %1295
        %1297 = vrot.lane.b32.xlu0 %v1228, 48
        %v1298 = vpop.permute.xlu0 %1297
        %1299 = vrot.lane.b32.xlu0 %v1229, 48
        %v1300 = vpop.permute.xlu0 %1299
        %1301 = vrot.lane.b32.xlu0 %v1230, 48
        %v1302 = vpop.permute.xlu0 %1301
        %1303 = vrot.lane.b32.xlu0 %v1231, 48
        %v1304 = vpop.permute.xlu0 %1303
        %1305 = vrot.lane.b32.xlu0 %v1232, 48
        %v1306 = vpop.permute.xlu0 %1305
        %1307 = vrot.lane.b32.xlu0 %v1233, 48
        %v1308 = vpop.permute.xlu0 %1307
        %1309 = vrot.lane.b32.xlu0 %v1234, 48
        %v1310 = vpop.permute.xlu0 %1309
        %1311 = vrot.lane.b32.xlu0 %v1235, 48
        %v1312 = vpop.permute.xlu0 %1311
        %1313 = vrot.lane.b32.xlu0 %v1236, 48
        %v1314 = vpop.permute.xlu0 %1313
        %1315 = vrot.lane.b32.xlu0 %v1237, 48
        %v1316 = vpop.permute.xlu0 %1315
        %1317 = vrot.lane.b32.xlu0 %v1238, 48
        %v1318 = vpop.permute.xlu0 %1317
        %1319 = vrot.lane.b32.xlu0 %v1239, 48
        %v1320 = vpop.permute.xlu0 %1319
        %1321 = vrot.lane.b32.xlu0 %v1240, 48
        %v1322 = vpop.permute.xlu0 %1321
        %1323 = vrot.lane.b32.xlu0 %v1241, 48
        %v1324 = vpop.permute.xlu0 %1323
        %1325 = vrot.lane.b32.xlu0 %v1242, 48
        %v1326 = vpop.permute.xlu0 %1325
        %1327 = vrot.lane.b32.xlu0 %v1243, 48
        %v1328 = vpop.permute.xlu0 %1327
        %1329 = vrot.lane.b32.xlu0 %v1244, 48
        %v1330 = vpop.permute.xlu0 %1329
        %1331 = vrot.lane.b32.xlu0 %v1245, 48
        %v1332 = vpop.permute.xlu0 %1331
        %1333 = vrot.lane.b32.xlu0 %v1246, 48
        %v1334 = vpop.permute.xlu0 %1333
        %1335 = vrot.lane.b32.xlu0 %v1247, 48
        %v1336 = vpop.permute.xlu0 %1335
        %1337 = vrot.lane.b32.xlu0 %v1248, 48
        %v1338 = vpop.permute.xlu0 %1337
        %1339 = vrot.lane.b32.xlu0 %v1249, 48
        %v1340 = vpop.permute.xlu0 %1339
        %1341 = vrot.lane.b32.xlu0 %v1250, 48
        %v1342 = vpop.permute.xlu0 %1341
        %1343 = vrot.lane.b32.xlu0 %v1251, 48
        %v1344 = vpop.permute.xlu0 %1343
        %1345 = vrot.lane.b32.xlu0 %v1252, 48
        %v1346 = vpop.permute.xlu0 %1345
        %1347 = vrot.lane.b32.xlu0 %v1253, 48
        %v1348 = vpop.permute.xlu0 %1347
        %1349 = vrot.lane.b32.xlu0 %v1254, 48
        %v1350 = vpop.permute.xlu0 %1349
        %vm1383 = vcmask 458112
        %1384 = vst.msk [vmem:[#allocation2] sm:$0xff] %vm1383, %v1288
        %1385 = vst.msk [vmem:[#allocation2 + $0x8] sm:$0xff] %vm1383, %v1290
        %1386 = vst.msk [vmem:[#allocation2 + $0x10] sm:$0xff] %vm1383, %v1292
        %1387 = vst.msk [vmem:[#allocation2 + $0x18] sm:$0xff] %vm1383, %v1294
        %1388 = vst.msk [vmem:[#allocation2 + $0x20] sm:$0xff] %vm1383, %v1296
        %1389 = vst.msk [vmem:[#allocation2 + $0x28] sm:$0xff] %vm1383, %v1298
        %1390 = vst.msk [vmem:[#allocation2 + $0x30] sm:$0xff] %vm1383, %v1300
        %1391 = vst.msk [vmem:[#allocation2 + $0x38] sm:$0xff] %vm1383, %v1302
        %1392 = vst.msk [vmem:[#allocation2 + $0x40] sm:$0xff] %vm1383, %v1304
        %1393 = vst.msk [vmem:[#allocation2 + $0x48] sm:$0xff] %vm1383, %v1306
        %1394 = vst.msk [vmem:[#allocation2 + $0x50] sm:$0xff] %vm1383, %v1308
        %1395 = vst.msk [vmem:[#allocation2 + $0x58] sm:$0xff] %vm1383, %v1310
        %1396 = vst.msk [vmem:[#allocation2 + $0x60] sm:$0xff] %vm1383, %v1312
        %1397 = vst.msk [vmem:[#allocation2 + $0x68] sm:$0xff] %vm1383, %v1314
        %1398 = vst.msk [vmem:[#allocation2 + $0x70] sm:$0xff] %vm1383, %v1316
        %1399 = vst.msk [vmem:[#allocation2 + $0x78] sm:$0xff] %vm1383, %v1318
        %1400 = vst.msk [vmem:[#allocation2 + $0x80] sm:$0xff] %vm1383, %v1320
        %1401 = vst.msk [vmem:[#allocation2 + $0x88] sm:$0xff] %vm1383, %v1322
        %1402 = vst.msk [vmem:[#allocation2 + $0x90] sm:$0xff] %vm1383, %v1324
        %1403 = vst.msk [vmem:[#allocation2 + $0x98] sm:$0xff] %vm1383, %v1326
        %1404 = vst.msk [vmem:[#allocation2 + $0xa0] sm:$0xff] %vm1383, %v1328
        %1405 = vst.msk [vmem:[#allocation2 + $0xa8] sm:$0xff] %vm1383, %v1330
        %1406 = vst.msk [vmem:[#allocation2 + $0xb0] sm:$0xff] %vm1383, %v1332
        %1407 = vst.msk [vmem:[#allocation2 + $0xb8] sm:$0xff] %vm1383, %v1334
        %1408 = vst.msk [vmem:[#allocation2 + $0xc0] sm:$0xff] %vm1383, %v1336
        %1409 = vst.msk [vmem:[#allocation2 + $0xc8] sm:$0xff] %vm1383, %v1338
        %1410 = vst.msk [vmem:[#allocation2 + $0xd0] sm:$0xff] %vm1383, %v1340
        %1411 = vst.msk [vmem:[#allocation2 + $0xd8] sm:$0xff] %vm1383, %v1342
        %1412 = vst.msk [vmem:[#allocation2 + $0xe0] sm:$0xff] %vm1383, %v1344
        %1413 = vst.msk [vmem:[#allocation2 + $0xe8] sm:$0xff] %vm1383, %v1346
        %1414 = vst.msk [vmem:[#allocation2 + $0xf0] sm:$0xff] %vm1383, %v1348
        %1415 = vst.msk [vmem:[#allocation2 + $0xf8] sm:$0xff] %vm1383, %v1350
        %v1416 = vld [vmem:[%s1222 + $0x1] sm:$0xff]
        %v1417 = vld [vmem:[%s1222 + $0x9] sm:$0xff]
        %v1418 = vld [vmem:[%s1222 + $0x19] sm:$0xff]
        %v1419 = vld [vmem:[%s1222 + $0x21] sm:$0xff]
        %v1420 = vld [vmem:[%s1222 + $0x31] sm:$0xff]
        %v1421 = vld [vmem:[%s1222 + $0x39] sm:$0xff]
        %v1422 = vld [vmem:[%s1222 + $0x49] sm:$0xff]
        %v1423 = vld [vmem:[%s1222 + $0x51] sm:$0xff]
        %v1424 = vld [vmem:[%s1222 + $0x61] sm:$0xff]
        %v1425 = vld [vmem:[%s1222 + $0x69] sm:$0xff]
        %v1426 = vld [vmem:[%s1222 + $0x79] sm:$0xff]
        %v1427 = vld [vmem:[%s1222 + $0x81] sm:$0xff]
        %v1428 = vld [vmem:[%s1222 + $0x91] sm:$0xff]
        %v1429 = vld [vmem:[%s1222 + $0x99] sm:$0xff]
        %v1430 = vld [vmem:[%s1222 + $0xa9] sm:$0xff]
        %v1431 = vld [vmem:[%s1222 + $0xb1] sm:$0xff]
        %v1432 = vld [vmem:[%s1222 + $0xc1] sm:$0xff]
        %v1433 = vld [vmem:[%s1222 + $0xc9] sm:$0xff]
        %v1434 = vld [vmem:[%s1222 + $0xd9] sm:$0xff]
        %v1435 = vld [vmem:[%s1222 + $0xe1] sm:$0xff]
        %v1436 = vld [vmem:[%s1222 + $0xf1] sm:$0xff]
        %v1437 = vld [vmem:[%s1222 + $0xf9] sm:$0xff]
        %v1438 = vld [vmem:[%s1222 + $0x109] sm:$0xff]
        %v1439 = vld [vmem:[%s1222 + $0x111] sm:$0xff]
        %v1440 = vld [vmem:[%s1222 + $0x121] sm:$0xff]
        %v1441 = vld [vmem:[%s1222 + $0x129] sm:$0xff]
        %v1442 = vld [vmem:[%s1222 + $0x139] sm:$0xff]
        %v1443 = vld [vmem:[%s1222 + $0x141] sm:$0xff]
        %v1444 = vld [vmem:[%s1222 + $0x151] sm:$0xff]
        %v1445 = vld [vmem:[%s1222 + $0x159] sm:$0xff]
        %v1446 = vld [vmem:[%s1222 + $0x169] sm:$0xff]
        %v1447 = vld [vmem:[%s1222 + $0x171] sm:$0xff]
        %1480 = vrot.lane.b32.xlu0 %v1416, 56
        %v1481 = vpop.permute.xlu0 %1480
        %1482 = vrot.lane.b32.xlu0 %v1417, 56
        %v1483 = vpop.permute.xlu0 %1482
        %1484 = vrot.lane.b32.xlu0 %v1418, 56
        %v1485 = vpop.permute.xlu0 %1484
        %1486 = vrot.lane.b32.xlu0 %v1419, 56
        %v1487 = vpop.permute.xlu0 %1486
        %1488 = vrot.lane.b32.xlu0 %v1420, 56
        %v1489 = vpop.permute.xlu0 %1488
        %1490 = vrot.lane.b32.xlu0 %v1421, 56
        %v1491 = vpop.permute.xlu0 %1490
        %1492 = vrot.lane.b32.xlu0 %v1422, 56
        %v1493 = vpop.permute.xlu0 %1492
        %1494 = vrot.lane.b32.xlu0 %v1423, 56
        %v1495 = vpop.permute.xlu0 %1494
        %1496 = vrot.lane.b32.xlu0 %v1424, 56
        %v1497 = vpop.permute.xlu0 %1496
        %1498 = vrot.lane.b32.xlu0 %v1425, 56
        %v1499 = vpop.permute.xlu0 %1498
        %1500 = vrot.lane.b32.xlu0 %v1426, 56
        %v1501 = vpop.permute.xlu0 %1500
        %1502 = vrot.lane.b32.xlu0 %v1427, 56
        %v1503 = vpop.permute.xlu0 %1502
        %1504 = vrot.lane.b32.xlu0 %v1428, 56
        %v1505 = vpop.permute.xlu0 %1504
        %1506 = vrot.lane.b32.xlu0 %v1429, 56
        %v1507 = vpop.permute.xlu0 %1506
        %1508 = vrot.lane.b32.xlu0 %v1430, 56
        %v1509 = vpop.permute.xlu0 %1508
        %1510 = vrot.lane.b32.xlu0 %v1431, 56
        %v1511 = vpop.permute.xlu0 %1510
        %1512 = vrot.lane.b32.xlu0 %v1432, 56
        %v1513 = vpop.permute.xlu0 %1512
        %1514 = vrot.lane.b32.xlu0 %v1433, 56
        %v1515 = vpop.permute.xlu0 %1514
        %1516 = vrot.lane.b32.xlu0 %v1434, 56
        %v1517 = vpop.permute.xlu0 %1516
        %1518 = vrot.lane.b32.xlu0 %v1435, 56
        %v1519 = vpop.permute.xlu0 %1518
        %1520 = vrot.lane.b32.xlu0 %v1436, 56
        %v1521 = vpop.permute.xlu0 %1520
        %1522 = vrot.lane.b32.xlu0 %v1437, 56
        %v1523 = vpop.permute.xlu0 %1522
        %1524 = vrot.lane.b32.xlu0 %v1438, 56
        %v1525 = vpop.permute.xlu0 %1524
        %1526 = vrot.lane.b32.xlu0 %v1439, 56
        %v1527 = vpop.permute.xlu0 %1526
        %1528 = vrot.lane.b32.xlu0 %v1440, 56
        %v1529 = vpop.permute.xlu0 %1528
        %1530 = vrot.lane.b32.xlu0 %v1441, 56
        %v1531 = vpop.permute.xlu0 %1530
        %1532 = vrot.lane.b32.xlu0 %v1442, 56
        %v1533 = vpop.permute.xlu0 %1532
        %1534 = vrot.lane.b32.xlu0 %v1443, 56
        %v1535 = vpop.permute.xlu0 %1534
        %1536 = vrot.lane.b32.xlu0 %v1444, 56
        %v1537 = vpop.permute.xlu0 %1536
        %1538 = vrot.lane.b32.xlu0 %v1445, 56
        %v1539 = vpop.permute.xlu0 %1538
        %1540 = vrot.lane.b32.xlu0 %v1446, 56
        %v1541 = vpop.permute.xlu0 %1540
        %1542 = vrot.lane.b32.xlu0 %v1447, 56
        %v1543 = vpop.permute.xlu0 %1542
        %vm1576 = vcmask 523712
        %1577 = vst.msk [vmem:[#allocation2] sm:$0xff] %vm1576, %v1481
        %1578 = vst.msk [vmem:[#allocation2 + $0x8] sm:$0xff] %vm1576, %v1483
        %1579 = vst.msk [vmem:[#allocation2 + $0x10] sm:$0xff] %vm1576, %v1485
        %1580 = vst.msk [vmem:[#allocation2 + $0x18] sm:$0xff] %vm1576, %v1487
        %1581 = vst.msk [vmem:[#allocation2 + $0x20] sm:$0xff] %vm1576, %v1489
        %1582 = vst.msk [vmem:[#allocation2 + $0x28] sm:$0xff] %vm1576, %v1491
        %1583 = vst.msk [vmem:[#allocation2 + $0x30] sm:$0xff] %vm1576, %v1493
        %1584 = vst.msk [vmem:[#allocation2 + $0x38] sm:$0xff] %vm1576, %v1495
        %1585 = vst.msk [vmem:[#allocation2 + $0x40] sm:$0xff] %vm1576, %v1497
        %1586 = vst.msk [vmem:[#allocation2 + $0x48] sm:$0xff] %vm1576, %v1499
        %1587 = vst.msk [vmem:[#allocation2 + $0x50] sm:$0xff] %vm1576, %v1501
        %1588 = vst.msk [vmem:[#allocation2 + $0x58] sm:$0xff] %vm1576, %v1503
        %1589 = vst.msk [vmem:[#allocation2 + $0x60] sm:$0xff] %vm1576, %v1505
        %1590 = vst.msk [vmem:[#allocation2 + $0x68] sm:$0xff] %vm1576, %v1507
        %1591 = vst.msk [vmem:[#allocation2 + $0x70] sm:$0xff] %vm1576, %v1509
        %1592 = vst.msk [vmem:[#allocation2 + $0x78] sm:$0xff] %vm1576, %v1511
        %1593 = vst.msk [vmem:[#allocation2 + $0x80] sm:$0xff] %vm1576, %v1513
        %1594 = vst.msk [vmem:[#allocation2 + $0x88] sm:$0xff] %vm1576, %v1515
        %1595 = vst.msk [vmem:[#allocation2 + $0x90] sm:$0xff] %vm1576, %v1517
        %1596 = vst.msk [vmem:[#allocation2 + $0x98] sm:$0xff] %vm1576, %v1519
        %1597 = vst.msk [vmem:[#allocation2 + $0xa0] sm:$0xff] %vm1576, %v1521
        %1598 = vst.msk [vmem:[#allocation2 + $0xa8] sm:$0xff] %vm1576, %v1523
        %1599 = vst.msk [vmem:[#allocation2 + $0xb0] sm:$0xff] %vm1576, %v1525
        %1600 = vst.msk [vmem:[#allocation2 + $0xb8] sm:$0xff] %vm1576, %v1527
        %1601 = vst.msk [vmem:[#allocation2 + $0xc0] sm:$0xff] %vm1576, %v1529
        %1602 = vst.msk [vmem:[#allocation2 + $0xc8] sm:$0xff] %vm1576, %v1531
        %1603 = vst.msk [vmem:[#allocation2 + $0xd0] sm:$0xff] %vm1576, %v1533
        %1604 = vst.msk [vmem:[#allocation2 + $0xd8] sm:$0xff] %vm1576, %v1535
        %1605 = vst.msk [vmem:[#allocation2 + $0xe0] sm:$0xff] %vm1576, %v1537
        %1606 = vst.msk [vmem:[#allocation2 + $0xe8] sm:$0xff] %vm1576, %v1539
        %1607 = vst.msk [vmem:[#allocation2 + $0xf0] sm:$0xff] %vm1576, %v1541
        %1608 = vst.msk [vmem:[#allocation2 + $0xf8] sm:$0xff] %vm1576, %v1543
        %v1609 = vld [vmem:[%s1222 + $0x2] sm:$0xff]
        %v1610 = vld [vmem:[%s1222 + $0xa] sm:$0xff]
        %v1611 = vld [vmem:[%s1222 + $0x1a] sm:$0xff]
        %v1612 = vld [vmem:[%s1222 + $0x22] sm:$0xff]
        %v1613 = vld [vmem:[%s1222 + $0x32] sm:$0xff]
        %v1614 = vld [vmem:[%s1222 + $0x3a] sm:$0xff]
        %v1615 = vld [vmem:[%s1222 + $0x4a] sm:$0xff]
        %v1616 = vld [vmem:[%s1222 + $0x52] sm:$0xff]
        %v1617 = vld [vmem:[%s1222 + $0x62] sm:$0xff]
        %v1618 = vld [vmem:[%s1222 + $0x6a] sm:$0xff]
        %v1619 = vld [vmem:[%s1222 + $0x7a] sm:$0xff]
        %v1620 = vld [vmem:[%s1222 + $0x82] sm:$0xff]
        %v1621 = vld [vmem:[%s1222 + $0x92] sm:$0xff]
        %v1622 = vld [vmem:[%s1222 + $0x9a] sm:$0xff]
        %v1623 = vld [vmem:[%s1222 + $0xaa] sm:$0xff]
        %v1624 = vld [vmem:[%s1222 + $0xb2] sm:$0xff]
        %v1625 = vld [vmem:[%s1222 + $0xc2] sm:$0xff]
        %v1626 = vld [vmem:[%s1222 + $0xca] sm:$0xff]
        %v1627 = vld [vmem:[%s1222 + $0xda] sm:$0xff]
        %v1628 = vld [vmem:[%s1222 + $0xe2] sm:$0xff]
        %v1629 = vld [vmem:[%s1222 + $0xf2] sm:$0xff]
        %v1630 = vld [vmem:[%s1222 + $0xfa] sm:$0xff]
        %v1631 = vld [vmem:[%s1222 + $0x10a] sm:$0xff]
        %v1632 = vld [vmem:[%s1222 + $0x112] sm:$0xff]
        %v1633 = vld [vmem:[%s1222 + $0x122] sm:$0xff]
        %v1634 = vld [vmem:[%s1222 + $0x12a] sm:$0xff]
        %v1635 = vld [vmem:[%s1222 + $0x13a] sm:$0xff]
        %v1636 = vld [vmem:[%s1222 + $0x142] sm:$0xff]
        %v1637 = vld [vmem:[%s1222 + $0x152] sm:$0xff]
        %v1638 = vld [vmem:[%s1222 + $0x15a] sm:$0xff]
        %v1639 = vld [vmem:[%s1222 + $0x16a] sm:$0xff]
        %v1640 = vld [vmem:[%s1222 + $0x172] sm:$0xff]
        %1673 = vrot.lane.b32.xlu0 %v1609, 64
        %v1674 = vpop.permute.xlu0 %1673
        %1675 = vrot.lane.b32.xlu0 %v1610, 64
        %v1676 = vpop.permute.xlu0 %1675
        %1677 = vrot.lane.b32.xlu0 %v1611, 64
        %v1678 = vpop.permute.xlu0 %1677
        %1679 = vrot.lane.b32.xlu0 %v1612, 64
        %v1680 = vpop.permute.xlu0 %1679
        %1681 = vrot.lane.b32.xlu0 %v1613, 64
        %v1682 = vpop.permute.xlu0 %1681
        %1683 = vrot.lane.b32.xlu0 %v1614, 64
        %v1684 = vpop.permute.xlu0 %1683
        %1685 = vrot.lane.b32.xlu0 %v1615, 64
        %v1686 = vpop.permute.xlu0 %1685
        %1687 = vrot.lane.b32.xlu0 %v1616, 64
        %v1688 = vpop.permute.xlu0 %1687
        %1689 = vrot.lane.b32.xlu0 %v1617, 64
        %v1690 = vpop.permute.xlu0 %1689
        %1691 = vrot.lane.b32.xlu0 %v1618, 64
        %v1692 = vpop.permute.xlu0 %1691
        %1693 = vrot.lane.b32.xlu0 %v1619, 64
        %v1694 = vpop.permute.xlu0 %1693
        %1695 = vrot.lane.b32.xlu0 %v1620, 64
        %v1696 = vpop.permute.xlu0 %1695
        %1697 = vrot.lane.b32.xlu0 %v1621, 64
        %v1698 = vpop.permute.xlu0 %1697
        %1699 = vrot.lane.b32.xlu0 %v1622, 64
        %v1700 = vpop.permute.xlu0 %1699
        %1701 = vrot.lane.b32.xlu0 %v1623, 64
        %v1702 = vpop.permute.xlu0 %1701
        %1703 = vrot.lane.b32.xlu0 %v1624, 64
        %v1704 = vpop.permute.xlu0 %1703
        %1705 = vrot.lane.b32.xlu0 %v1625, 64
        %v1706 = vpop.permute.xlu0 %1705
        %1707 = vrot.lane.b32.xlu0 %v1626, 64
        %v1708 = vpop.permute.xlu0 %1707
        %1709 = vrot.lane.b32.xlu0 %v1627, 64
        %v1710 = vpop.permute.xlu0 %1709
        %1711 = vrot.lane.b32.xlu0 %v1628, 64
        %v1712 = vpop.permute.xlu0 %1711
        %1713 = vrot.lane.b32.xlu0 %v1629, 64
        %v1714 = vpop.permute.xlu0 %1713
        %1715 = vrot.lane.b32.xlu0 %v1630, 64
        %v1716 = vpop.permute.xlu0 %1715
        %1717 = vrot.lane.b32.xlu0 %v1631, 64
        %v1718 = vpop.permute.xlu0 %1717
        %1719 = vrot.lane.b32.xlu0 %v1632, 64
        %v1720 = vpop.permute.xlu0 %1719
        %1721 = vrot.lane.b32.xlu0 %v1633, 64
        %v1722 = vpop.permute.xlu0 %1721
        %1723 = vrot.lane.b32.xlu0 %v1634, 64
        %v1724 = vpop.permute.xlu0 %1723
        %1725 = vrot.lane.b32.xlu0 %v1635, 64
        %v1726 = vpop.permute.xlu0 %1725
        %1727 = vrot.lane.b32.xlu0 %v1636, 64
        %v1728 = vpop.permute.xlu0 %1727
        %1729 = vrot.lane.b32.xlu0 %v1637, 64
        %v1730 = vpop.permute.xlu0 %1729
        %1731 = vrot.lane.b32.xlu0 %v1638, 64
        %v1732 = vpop.permute.xlu0 %1731
        %1733 = vrot.lane.b32.xlu0 %v1639, 64
        %v1734 = vpop.permute.xlu0 %1733
        %1735 = vrot.lane.b32.xlu0 %v1640, 64
        %v1736 = vpop.permute.xlu0 %1735
        %vm1769 = vcmask 589312
        %1770 = vst.msk [vmem:[#allocation2] sm:$0xff] %vm1769, %v1674
        %1771 = vst.msk [vmem:[#allocation2 + $0x8] sm:$0xff] %vm1769, %v1676
        %1772 = vst.msk [vmem:[#allocation2 + $0x10] sm:$0xff] %vm1769, %v1678
        %1773 = vst.msk [vmem:[#allocation2 + $0x18] sm:$0xff] %vm1769, %v1680
        %1774 = vst.msk [vmem:[#allocation2 + $0x20] sm:$0xff] %vm1769, %v1682
        %1775 = vst.msk [vmem:[#allocation2 + $0x28] sm:$0xff] %vm1769, %v1684
        %1776 = vst.msk [vmem:[#allocation2 + $0x30] sm:$0xff] %vm1769, %v1686
        %1777 = vst.msk [vmem:[#allocation2 + $0x38] sm:$0xff] %vm1769, %v1688
        %1778 = vst.msk [vmem:[#allocation2 + $0x40] sm:$0xff] %vm1769, %v1690
        %1779 = vst.msk [vmem:[#allocation2 + $0x48] sm:$0xff] %vm1769, %v1692
        %1780 = vst.msk [vmem:[#allocation2 + $0x50] sm:$0xff] %vm1769, %v1694
        %1781 = vst.msk [vmem:[#allocation2 + $0x58] sm:$0xff] %vm1769, %v1696
        %1782 = vst.msk [vmem:[#allocation2 + $0x60] sm:$0xff] %vm1769, %v1698
        %1783 = vst.msk [vmem:[#allocation2 + $0x68] sm:$0xff] %vm1769, %v1700
        %1784 = vst.msk [vmem:[#allocation2 + $0x70] sm:$0xff] %vm1769, %v1702
        %1785 = vst.msk [vmem:[#allocation2 + $0x78] sm:$0xff] %vm1769, %v1704
        %1786 = vst.msk [vmem:[#allocation2 + $0x80] sm:$0xff] %vm1769, %v1706
        %1787 = vst.msk [vmem:[#allocation2 + $0x88] sm:$0xff] %vm1769, %v1708
        %1788 = vst.msk [vmem:[#allocation2 + $0x90] sm:$0xff] %vm1769, %v1710
        %1789 = vst.msk [vmem:[#allocation2 + $0x98] sm:$0xff] %vm1769, %v1712
        %1790 = vst.msk [vmem:[#allocation2 + $0xa0] sm:$0xff] %vm1769, %v1714
        %1791 = vst.msk [vmem:[#allocation2 + $0xa8] sm:$0xff] %vm1769, %v1716
        %1792 = vst.msk [vmem:[#allocation2 + $0xb0] sm:$0xff] %vm1769, %v1718
        %1793 = vst.msk [vmem:[#allocation2 + $0xb8] sm:$0xff] %vm1769, %v1720
        %1794 = vst.msk [vmem:[#allocation2 + $0xc0] sm:$0xff] %vm1769, %v1722
        %1795 = vst.msk [vmem:[#allocation2 + $0xc8] sm:$0xff] %vm1769, %v1724
        %1796 = vst.msk [vmem:[#allocation2 + $0xd0] sm:$0xff] %vm1769, %v1726
        %1797 = vst.msk [vmem:[#allocation2 + $0xd8] sm:$0xff] %vm1769, %v1728
        %1798 = vst.msk [vmem:[#allocation2 + $0xe0] sm:$0xff] %vm1769, %v1730
        %1799 = vst.msk [vmem:[#allocation2 + $0xe8] sm:$0xff] %vm1769, %v1732
        %1800 = vst.msk [vmem:[#allocation2 + $0xf0] sm:$0xff] %vm1769, %v1734
        %1801 = vst.msk [vmem:[#allocation2 + $0xf8] sm:$0xff] %vm1769, %v1736
        %v1802 = vld [vmem:[#allocation2] sm:$0xff]
        %v1803 = vld [vmem:[#allocation2 + $0x8] sm:$0xff]
        %v1804 = vld [vmem:[#allocation2 + $0x10] sm:$0xff]
        %v1805 = vld [vmem:[#allocation2 + $0x18] sm:$0xff]
        %v1806 = vld [vmem:[#allocation2 + $0x20] sm:$0xff]
        %v1807 = vld [vmem:[#allocation2 + $0x28] sm:$0xff]
        %v1808 = vld [vmem:[#allocation2 + $0x30] sm:$0xff]
        %v1809 = vld [vmem:[#allocation2 + $0x38] sm:$0xff]
        %v1810 = vld [vmem:[#allocation2 + $0x40] sm:$0xff]
        %v1811 = vld [vmem:[#allocation2 + $0x48] sm:$0xff]
        %v1812 = vld [vmem:[#allocation2 + $0x50] sm:$0xff]
        %v1813 = vld [vmem:[#allocation2 + $0x58] sm:$0xff]
        %v1814 = vld [vmem:[#allocation2 + $0x60] sm:$0xff]
        %v1815 = vld [vmem:[#allocation2 + $0x68] sm:$0xff]
        %v1816 = vld [vmem:[#allocation2 + $0x70] sm:$0xff]
        %v1817 = vld [vmem:[#allocation2 + $0x78] sm:$0xff]
        %v1818 = vld [vmem:[#allocation2 + $0x80] sm:$0xff]
        %v1819 = vld [vmem:[#allocation2 + $0x88] sm:$0xff]
        %v1820 = vld [vmem:[#allocation2 + $0x90] sm:$0xff]
        %v1821 = vld [vmem:[#allocation2 + $0x98] sm:$0xff]
        %v1822 = vld [vmem:[#allocation2 + $0xa0] sm:$0xff]
        %v1823 = vld [vmem:[#allocation2 + $0xa8] sm:$0xff]
        %v1824 = vld [vmem:[#allocation2 + $0xb0] sm:$0xff]
        %v1825 = vld [vmem:[#allocation2 + $0xb8] sm:$0xff]
        %v1826 = vld [vmem:[#allocation2 + $0xc0] sm:$0xff]
        %v1827 = vld [vmem:[#allocation2 + $0xc8] sm:$0xff]
        %v1828 = vld [vmem:[#allocation2 + $0xd0] sm:$0xff]
        %v1829 = vld [vmem:[#allocation2 + $0xd8] sm:$0xff]
        %v1830 = vld [vmem:[#allocation2 + $0xe0] sm:$0xff]
        %v1831 = vld [vmem:[#allocation2 + $0xe8] sm:$0xff]
        %v1832 = vld [vmem:[#allocation2 + $0xf0] sm:$0xff]
        %v1833 = vld [vmem:[#allocation2 + $0xf8] sm:$0xff]
        %v1834 = vld [vmem:[%s1] sm:$0xff]
        %v1835 = vld [vmem:[%s1 + $0x8] sm:$0xff]
        %v1836 = vld [vmem:[%s1 + $0x10] sm:$0xff]
        %v1837 = vld [vmem:[%s1 + $0x18] sm:$0xff]
        %v1838 = vld [vmem:[%s1 + $0x20] sm:$0xff]
        %v1839 = vld [vmem:[%s1 + $0x28] sm:$0xff]
        %v1840 = vld [vmem:[%s1 + $0x30] sm:$0xff]
        %v1841 = vld [vmem:[%s1 + $0x38] sm:$0xff]
        %v1842 = vld [vmem:[%s1 + $0x40] sm:$0xff]
        %v1843 = vld [vmem:[%s2] sm:$0x1]
        %v1845 = vlaneseq
        %v1846 = vshrl.u32 %v1845, 7
        %v1847 = vsub.s32 0, %v1846
        %v1848 = vrot.slane %v1843, %v1847
        %vm1850 = vcmask 588800
        %v1852 = vsel %vm1850, %v1802, 0
        %v1855 = vsel %vm1850, %v1803, 0
        %v1858 = vsel %vm1850, %v1804, 0
        %v1861 = vsel %vm1850, %v1805, 0
        %v1864 = vsel %vm1850, %v1806, 0
        %v1867 = vsel %vm1850, %v1807, 0
        %v1870 = vsel %vm1850, %v1808, 0
        %v1873 = vsel %vm1850, %v1809, 0
        %v1876 = vsel %vm1850, %v1810, 0
        %v1879 = vsel %vm1850, %v1811, 0
        %v1882 = vsel %vm1850, %v1812, 0
        %v1885 = vsel %vm1850, %v1813, 0
        %v1888 = vsel %vm1850, %v1814, 0
        %v1891 = vsel %vm1850, %v1815, 0
        %v1894 = vsel %vm1850, %v1816, 0
        %v1897 = vsel %vm1850, %v1817, 0
        %v1900 = vsel %vm1850, %v1818, 0
        %v1903 = vsel %vm1850, %v1819, 0
        %v1906 = vsel %vm1850, %v1820, 0
        %v1909 = vsel %vm1850, %v1821, 0
        %v1912 = vsel %vm1850, %v1822, 0
        %v1915 = vsel %vm1850, %v1823, 0
        %v1918 = vsel %vm1850, %v1824, 0
        %v1921 = vsel %vm1850, %v1825, 0
        %v1924 = vsel %vm1850, %v1826, 0
        %v1927 = vsel %vm1850, %v1827, 0
        %v1930 = vsel %vm1850, %v1828, 0
        %v1933 = vsel %vm1850, %v1829, 0
        %v1936 = vsel %vm1850, %v1830, 0
        %v1939 = vsel %vm1850, %v1831, 0
        %v1942 = vsel %vm1850, %v1832, 0
        %v1945 = vsel %vm1850, %v1833, 0
        %1947 = vmatprep.subr.mxu0 0.0
        %1948 = vmatpush1.msra.mxu0 %v1834
        %1949 = vmatprep.subr.mxu0 0.0
        %1950 = vmatpush1.msra.mxu0 %v1835
        %1951 = vmatprep.subr.mxu0 0.0
        %1952 = vmatpush1.msra.mxu0 %v1836
        %1953 = vmatprep.subr.mxu0 0.0
        %1954 = vmatpush1.msra.mxu0 %v1837
        %1955 = vmatprep.subr.mxu0 0.0
        %1956 = vmatpush1.msra.mxu0 %v1838
        %1957 = vmatprep.subr.mxu0 0.0
        %1958 = vmatpush1.msra.mxu0 %v1839
        %1959 = vmatprep.subr.mxu0 0.0
        %1960 = vmatpush1.msra.mxu0 %v1840
        %1961 = vmatprep.subr.mxu0 0.0
        %1962 = vmatpush1.msra.mxu0 %v1841
        %1963 = vmatprep.subr.mxu0 0.0
        %1964 = vmatpush1.msra.mxu0 %v1842
        %1965 = vmatprep.subr.mxu0 0.0
        %1966 = vmatpush1.msra.mxu0 0.0
        %1967 = vmatprep.subr.mxu0 0.0
        %1968 = vmatpush1.msra.mxu0 0.0
        %1969 = vmatprep.subr.mxu0 0.0
        %1970 = vmatpush1.msra.mxu0 0.0
        %1971 = vmatprep.subr.mxu0 0.0
        %1972 = vmatpush1.msra.mxu0 0.0
        %1973 = vmatprep.subr.mxu0 0.0
        %1974 = vmatpush1.msra.mxu0 0.0
        %1975 = vmatprep.subr.mxu0 0.0
        %1976 = vmatpush1.msra.mxu0 0.0
        %1977 = vmatprep.subr.mxu0 0.0
        %1978 = vmatpush1.msra.mxu0 0.0
        %1979 = vmatprep.subr.mxu0 0.0
        %1980 = vmatpush1.msra.mxu0 0.0
        %1981 = vmatprep.subr.mxu0 0.0
        %1982 = vmatpush1.msra.mxu0 0.0
        %1983 = vmatprep.subr.mxu0 0.0
        %1984 = vmatpush1.msra.mxu0 0.0
        %1985 = vmatprep.subr.mxu0 0.0
        %1986 = vmatpush1.msra.mxu0 0.0
        %1987 = vmatprep.subr.mxu0 0.0
        %1988 = vmatpush1.msra.mxu0 0.0
        %1989 = vmatprep.subr.mxu0 0.0
        %1990 = vmatpush1.msra.mxu0 0.0
        %1991 = vmatprep.subr.mxu0 0.0
        %1992 = vmatpush1.msra.mxu0 0.0
        %1993 = vmatprep.subr.mxu0 0.0
        %1994 = vmatpush1.msra.mxu0 0.0
        %1995 = vmatprep.subr.mxu0 0.0
        %1996 = vmatpush1.msra.mxu0 0.0
        %1997 = vmatprep.subr.mxu0 0.0
        %1998 = vmatpush1.msra.mxu0 0.0
        %1999 = vmatprep.subr.mxu0 0.0
        %2000 = vmatpush1.msra.mxu0 0.0
        %2001 = vmatprep.subr.mxu0 0.0
        %2002 = vmatpush1.msra.mxu0 0.0
        %2003 = vmatprep.subr.mxu0 0.0
        %2004 = vmatpush1.msra.mxu0 0.0
        %2005 = vmatprep.subr.mxu0 0.0
        %2006 = vmatpush1.msra.mxu0 0.0
        %2007 = vmatprep.subr.mxu0 0.0
        %2008 = vmatpush1.msra.mxu0 0.0
        %2009 = vmatprep.subr.mxu0 0.0
        %2010 = vmatpush1.msra.mxu0 0.0
        %2011 = vmatprep.mubr.f32.mxu0 0.0
        %2012 = vmatmul.mubr.f32.gmra.mrb[0].mxu0 %v1852
        %v2013 = vpop.f32.mrb[0].mxu0
        %v2014 = vadd.f32 %v1848, %v2013
        %v2015 = vpop.f32.mrb[0].mxu0
        %2016 = vmatprep.mubr.f32.mxu0 0.0
        %2017 = vmatmul.mubr.f32.gmra.mrb[0].mxu0 %v1855
        %v2018 = vpop.f32.mrb[0].mxu0
        %v2019 = vadd.f32 %v1848, %v2018
        %v2020 = vpop.f32.mrb[0].mxu0
        %2021 = vmatprep.mubr.f32.mxu0 0.0
        %2022 = vmatmul.mubr.f32.gmra.mrb[0].mxu0 %v1858
        %v2023 = vpop.f32.mrb[0].mxu0
        %v2024 = vadd.f32 %v1848, %v2023
        %v2025 = vpop.f32.mrb[0].mxu0
        %2026 = vmatprep.mubr.f32.mxu0 0.0
        %2027 = vmatmul.mubr.f32.gmra.mrb[0].mxu0 %v1861
        %v2028 = vpop.f32.mrb[0].mxu0
        %v2029 = vadd.f32 %v1848, %v2028
        %v2030 = vpop.f32.mrb[0].mxu0
        %2031 = vmatprep.mubr.f32.mxu0 0.0
        %2032 = vmatmul.mubr.f32.gmra.mrb[0].mxu0 %v1864
        %v2033 = vpop.f32.mrb[0].mxu0
        %v2034 = vadd.f32 %v1848, %v2033
        %v2035 = vpop.f32.mrb[0].mxu0
        %2036 = vmatprep.mubr.f32.mxu0 0.0
        %2037 = vmatmul.mubr.f32.gmra.mrb[0].mxu0 %v1867
        %v2038 = vpop.f32.mrb[0].mxu0
        %v2039 = vadd.f32 %v1848, %v2038
        %v2040 = vpop.f32.mrb[0].mxu0
        %2041 = vmatprep.mubr.f32.mxu0 0.0
        %2042 = vmatmul.mubr.f32.gmra.mrb[0].mxu0 %v1870
        %v2043 = vpop.f32.mrb[0].mxu0
        %v2044 = vadd.f32 %v1848, %v2043
        %v2045 = vpop.f32.mrb[0].mxu0
        %2046 = vmatprep.mubr.f32.mxu0 0.0
        %2047 = vmatmul.mubr.f32.gmra.mrb[0].mxu0 %v1873
        %v2048 = vpop.f32.mrb[0].mxu0
        %v2049 = vadd.f32 %v1848, %v2048
        %v2050 = vpop.f32.mrb[0].mxu0
        %2051 = vmatprep.mubr.f32.mxu0 0.0
        %2052 = vmatmul.mubr.f32.gmra.mrb[0].mxu0 %v1876
        %v2053 = vpop.f32.mrb[0].mxu0
        %v2054 = vadd.f32 %v1848, %v2053
        %v2055 = vpop.f32.mrb[0].mxu0
        %2056 = vmatprep.mubr.f32.mxu0 0.0
        %2057 = vmatmul.mubr.f32.gmra.mrb[0].mxu0 %v1879
        %v2058 = vpop.f32.mrb[0].mxu0
        %v2059 = vadd.f32 %v1848, %v2058
        %v2060 = vpop.f32.mrb[0].mxu0
        %2061 = vmatprep.mubr.f32.mxu0 0.0
        %2062 = vmatmul.mubr.f32.gmra.mrb[0].mxu0 %v1882
        %v2063 = vpop.f32.mrb[0].mxu0
        %v2064 = vadd.f32 %v1848, %v2063
        %v2065 = vpop.f32.mrb[0].mxu0
        %2066 = vmatprep.mubr.f32.mxu0 0.0
        %2067 = vmatmul.mubr.f32.gmra.mrb[0].mxu0 %v1885
        %v2068 = vpop.f32.mrb[0].mxu0
        %v2069 = vadd.f32 %v1848, %v2068
        %v2070 = vpop.f32.mrb[0].mxu0
        %2071 = vmatprep.mubr.f32.mxu0 0.0
        %2072 = vmatmul.mubr.f32.gmra.mrb[0].mxu0 %v1888
        %v2073 = vpop.f32.mrb[0].mxu0
        %v2074 = vadd.f32 %v1848, %v2073
        %v2075 = vpop.f32.mrb[0].mxu0
        %2076 = vmatprep.mubr.f32.mxu0 0.0
        %2077 = vmatmul.mubr.f32.gmra.mrb[0].mxu0 %v1891
        %v2078 = vpop.f32.mrb[0].mxu0
        %v2079 = vadd.f32 %v1848, %v2078
        %v2080 = vpop.f32.mrb[0].mxu0
        %2081 = vmatprep.mubr.f32.mxu0 0.0
        %2082 = vmatmul.mubr.f32.gmra.mrb[0].mxu0 %v1894
        %v2083 = vpop.f32.mrb[0].mxu0
        %v2084 = vadd.f32 %v1848, %v2083
        %v2085 = vpop.f32.mrb[0].mxu0
        %2086 = vmatprep.mubr.f32.mxu0 0.0
        %2087 = vmatmul.mubr.f32.gmra.mrb[0].mxu0 %v1897
        %v2088 = vpop.f32.mrb[0].mxu0
        %v2089 = vadd.f32 %v1848, %v2088
        %v2090 = vpop.f32.mrb[0].mxu0
        %2091 = vmatprep.mubr.f32.mxu0 0.0
        %2092 = vmatmul.mubr.f32.gmra.mrb[0].mxu0 %v1900
        %v2093 = vpop.f32.mrb[0].mxu0
        %v2094 = vadd.f32 %v1848, %v2093
        %v2095 = vpop.f32.mrb[0].mxu0
        %2096 = vmatprep.mubr.f32.mxu0 0.0
        %2097 = vmatmul.mubr.f32.gmra.mrb[0].mxu0 %v1903
        %v2098 = vpop.f32.mrb[0].mxu0
        %v2099 = vadd.f32 %v1848, %v2098
        %v2100 = vpop.f32.mrb[0].mxu0
        %2101 = vmatprep.mubr.f32.mxu0 0.0
        %2102 = vmatmul.mubr.f32.gmra.mrb[0].mxu0 %v1906
        %v2103 = vpop.f32.mrb[0].mxu0
        %v2104 = vadd.f32 %v1848, %v2103
        %v2105 = vpop.f32.mrb[0].mxu0
        %2106 = vmatprep.mubr.f32.mxu0 0.0
        %2107 = vmatmul.mubr.f32.gmra.mrb[0].mxu0 %v1909
        %v2108 = vpop.f32.mrb[0].mxu0
        %v2109 = vadd.f32 %v1848, %v2108
        %v2110 = vpop.f32.mrb[0].mxu0
        %2111 = vmatprep.mubr.f32.mxu0 0.0
        %2112 = vmatmul.mubr.f32.gmra.mrb[0].mxu0 %v1912
        %v2113 = vpop.f32.mrb[0].mxu0
        %v2114 = vadd.f32 %v1848, %v2113
        %v2115 = vpop.f32.mrb[0].mxu0
        %2116 = vmatprep.mubr.f32.mxu0 0.0
        %2117 = vmatmul.mubr.f32.gmra.mrb[0].mxu0 %v1915
        %v2118 = vpop.f32.mrb[0].mxu0
        %v2119 = vadd.f32 %v1848, %v2118
        %v2120 = vpop.f32.mrb[0].mxu0
        %2121 = vmatprep.mubr.f32.mxu0 0.0
        %2122 = vmatmul.mubr.f32.gmra.mrb[0].mxu0 %v1918
        %v2123 = vpop.f32.mrb[0].mxu0
        %v2124 = vadd.f32 %v1848, %v2123
        %v2125 = vpop.f32.mrb[0].mxu0
        %2126 = vmatprep.mubr.f32.mxu0 0.0
        %2127 = vmatmul.mubr.f32.gmra.mrb[0].mxu0 %v1921
        %v2128 = vpop.f32.mrb[0].mxu0
        %v2129 = vadd.f32 %v1848, %v2128
        %v2130 = vpop.f32.mrb[0].mxu0
        %2131 = vmatprep.mubr.f32.mxu0 0.0
        %2132 = vmatmul.mubr.f32.gmra.mrb[0].mxu0 %v1924
        %v2133 = vpop.f32.mrb[0].mxu0
        %v2134 = vadd.f32 %v1848, %v2133
        %v2135 = vpop.f32.mrb[0].mxu0
        %2136 = vmatprep.mubr.f32.mxu0 0.0
        %2137 = vmatmul.mubr.f32.gmra.mrb[0].mxu0 %v1927
        %v2138 = vpop.f32.mrb[0].mxu0
        %v2139 = vadd.f32 %v1848, %v2138
        %v2140 = vpop.f32.mrb[0].mxu0
        %2141 = vmatprep.mubr.f32.mxu0 0.0
        %2142 = vmatmul.mubr.f32.gmra.mrb[0].mxu0 %v1930
        %v2143 = vpop.f32.mrb[0].mxu0
        %v2144 = vadd.f32 %v1848, %v2143
        %v2145 = vpop.f32.mrb[0].mxu0
        %2146 = vmatprep.mubr.f32.mxu0 0.0
        %2147 = vmatmul.mubr.f32.gmra.mrb[0].mxu0 %v1933
        %v2148 = vpop.f32.mrb[0].mxu0
        %v2149 = vadd.f32 %v1848, %v2148
        %v2150 = vpop.f32.mrb[0].mxu0
        %2151 = vmatprep.mubr.f32.mxu0 0.0
        %2152 = vmatmul.mubr.f32.gmra.mrb[0].mxu0 %v1936
        %v2153 = vpop.f32.mrb[0].mxu0
        %v2154 = vadd.f32 %v1848, %v2153
        %v2155 = vpop.f32.mrb[0].mxu0
        %2156 = vmatprep.mubr.f32.mxu0 0.0
        %2157 = vmatmul.mubr.f32.gmra.mrb[0].mxu0 %v1939
        %v2158 = vpop.f32.mrb[0].mxu0
        %v2159 = vadd.f32 %v1848, %v2158
        %v2160 = vpop.f32.mrb[0].mxu0
        %2161 = vmatprep.mubr.f32.mxu0 0.0
        %2162 = vmatmul.mubr.f32.gmra.mrb[0].mxu0 %v1942
        %v2163 = vpop.f32.mrb[0].mxu0
        %v2164 = vadd.f32 %v1848, %v2163
        %v2165 = vpop.f32.mrb[0].mxu0
        %2166 = vmatprep.mubr.f32.mxu0 0.0
        %2167 = vmatmul.mubr.f32.gmra.mrb[0].mxu0 %v1945
        %v2168 = vpop.f32.mrb[0].mxu0
        %v2169 = vadd.f32 %v1848, %v2168
        %v2170 = vpop.f32.mrb[0].mxu0
        %2171 = vdwg.mxu0
        %v2172 = vmax.f32 %v2014, 0.0
        %v2173 = vmax.f32 %v2019, 0.0
        %v2174 = vmax.f32 %v2024, 0.0
        %v2175 = vmax.f32 %v2029, 0.0
        %v2176 = vmax.f32 %v2034, 0.0
        %v2177 = vmax.f32 %v2039, 0.0
        %v2178 = vmax.f32 %v2044, 0.0
        %v2179 = vmax.f32 %v2049, 0.0
        %v2180 = vmax.f32 %v2054, 0.0
        %v2181 = vmax.f32 %v2059, 0.0
        %v2182 = vmax.f32 %v2064, 0.0
        %v2183 = vmax.f32 %v2069, 0.0
        %v2184 = vmax.f32 %v2074, 0.0
        %v2185 = vmax.f32 %v2079, 0.0
        %v2186 = vmax.f32 %v2084, 0.0
        %v2187 = vmax.f32 %v2089, 0.0
        %v2188 = vmax.f32 %v2094, 0.0
        %v2189 = vmax.f32 %v2099, 0.0
        %v2190 = vmax.f32 %v2104, 0.0
        %v2191 = vmax.f32 %v2109, 0.0
        %v2192 = vmax.f32 %v2114, 0.0
        %v2193 = vmax.f32 %v2119, 0.0
        %v2194 = vmax.f32 %v2124, 0.0
        %v2195 = vmax.f32 %v2129, 0.0
        %v2196 = vmax.f32 %v2134, 0.0
        %v2197 = vmax.f32 %v2139, 0.0
        %v2198 = vmax.f32 %v2144, 0.0
        %v2199 = vmax.f32 %v2149, 0.0
        %v2200 = vmax.f32 %v2154, 0.0
        %v2201 = vmax.f32 %v2159, 0.0
        %v2202 = vmax.f32 %v2164, 0.0
        %v2203 = vmax.f32 %v2169, 0.0
        %2204 = vst [vmem:[%s177] sm:$0xff] %v2172
        %2205 = vst [vmem:[%s177 + $0x8] sm:$0xff] %v2173
        %2206 = vst [vmem:[%s177 + $0x10] sm:$0xff] %v2174
        %2207 = vst [vmem:[%s177 + $0x18] sm:$0xff] %v2175
        %2208 = vst [vmem:[%s177 + $0x20] sm:$0xff] %v2176
        %2209 = vst [vmem:[%s177 + $0x28] sm:$0xff] %v2177
        %2210 = vst [vmem:[%s177 + $0x30] sm:$0xff] %v2178
        %2211 = vst [vmem:[%s177 + $0x38] sm:$0xff] %v2179
        %2212 = vst [vmem:[%s177 + $0x40] sm:$0xff] %v2180
        %2213 = vst [vmem:[%s177 + $0x48] sm:$0xff] %v2181
        %2214 = vst [vmem:[%s177 + $0x50] sm:$0xff] %v2182
        %2215 = vst [vmem:[%s177 + $0x58] sm:$0xff] %v2183
        %2216 = vst [vmem:[%s177 + $0x60] sm:$0xff] %v2184
        %2217 = vst [vmem:[%s177 + $0x68] sm:$0xff] %v2185
        %2218 = vst [vmem:[%s177 + $0x70] sm:$0xff] %v2186
        %2219 = vst [vmem:[%s177 + $0x78] sm:$0xff] %v2187
        %2220 = vst [vmem:[%s177 + $0x80] sm:$0xff] %v2188
        %2221 = vst [vmem:[%s177 + $0x88] sm:$0xff] %v2189
        %2222 = vst [vmem:[%s177 + $0x90] sm:$0xff] %v2190
        %2223 = vst [vmem:[%s177 + $0x98] sm:$0xff] %v2191
        %2224 = vst [vmem:[%s177 + $0xa0] sm:$0xff] %v2192
        %2225 = vst [vmem:[%s177 + $0xa8] sm:$0xff] %v2193
        %2226 = vst [vmem:[%s177 + $0xb0] sm:$0xff] %v2194
        %2227 = vst [vmem:[%s177 + $0xb8] sm:$0xff] %v2195
        %2228 = vst [vmem:[%s177 + $0xc0] sm:$0xff] %v2196
        %2229 = vst [vmem:[%s177 + $0xc8] sm:$0xff] %v2197
        %2230 = vst [vmem:[%s177 + $0xd0] sm:$0xff] %v2198
        %2231 = vst [vmem:[%s177 + $0xd8] sm:$0xff] %v2199
        %2232 = vst [vmem:[%s177 + $0xe0] sm:$0xff] %v2200
        %2233 = vst [vmem:[%s177 + $0xe8] sm:$0xff] %v2201
        %2234 = vst [vmem:[%s177 + $0xf0] sm:$0xff] %v2202
        %2235 = vst [vmem:[%s177 + $0xf8] sm:$0xff] %v2203
        %s2236 = sand.u32 %s107, 1
        %s2237 = scalar_lea.sflag [#allocation4], %s2236
        %s2238 = sand.u32 %s107, 1
        %s2239 = smul.addr %s2238, 256
        %s2240 = scalar_lea.vmem [#allocation3], %s2239
        // Predicated region
        $region33: #{tpu_custom_call.1} parent=31 // pred_check
          %p2241 = pneg %p117
        $region34: #{tpu_custom_call.1} parent=31 // pred_check_branch
          %2243 = sbr.rel (%p2241) target = $region36
        $region35: #{tpu_custom_call.1} parent=31 // pred_region
          %s2244 = smul.u32 32, %s22
          %s2246 = ssub.s32 4096, 4096
          %2247 = vsyncadd %s2237, %s2246
          %s2248 = smul.addr %s21, 32
          %s2249 = sadd.s32 %s2244, %s2248
          %s2250 = smul.addr %s2249, 128
          %s2251 = scalar_lea.hbm %s3, %s2250
          %s2252 = sshll.u32 %s2240, 4
          %s2253 = int_to_ptr.vmem [resolvable:$true] %s2252
          %2258 = dma.vmem_to_hbm [thread:$0]  %s2253, 4096, %s2251, %s2237, 128, 128, 8
        $region36: #{tpu_custom_call.1} parent=31 // pred_fallthru
          _
      $region32: #{tpu_custom_call.1} parent=5 // pred_fallthru
        _
      %p2259 = scmp.le.s32.totalorder 2, %s12
      // Predicated region
      $region37: #{tpu_custom_call.1} parent=5 // pred_check
        %p2260 = pneg %p2259
      $region38: #{tpu_custom_call.1} parent=5 // pred_check_branch
        %2262 = sbr.rel (%p2260) target = $region40
      $region39: #{tpu_custom_call.1} parent=5 // pred_region
        %s2263 = ssub.s32 %s12, 2
        // Predicated region
        $region41: #{tpu_custom_call.1} parent=39 // pred_check
          %p2264 = pneg %p123
        $region42: #{tpu_custom_call.1} parent=39 // pred_check_branch
          %2266 = sbr.rel (%p2264) target = $region44
        $region43: #{tpu_custom_call.1} parent=39 // pred_region
          %s2267 = sand.u32 %s108, 1
          %s2268 = scalar_lea.sflag [#allocation4], %s2267
          %s2269 = sand.u32 %s108, 1
          %s2270 = smul.addr %s2269, 256
          %s2271 = scalar_lea.vmem [#allocation3], %s2270
          %2272 = dma.done %s2268, 4096
        $region44: #{tpu_custom_call.1} parent=39 // pred_fallthru
          _
      $region40: #{tpu_custom_call.1} parent=5 // pred_fallthru
        _
    $region6: #{tpu_custom_call.1} parent=1 // loop_footer
      %s16 = sadd.s32 1, %s12
    $region7: #{tpu_custom_call.1} parent=1 // loop_footer_branch
      %11 = sbr.rel target = $region3
    $region8: #{tpu_custom_call.1} parent=1 // loop_exit
      _
    %2273 = vsyncpa [#allocation4], 1
    %s2274 = scalar_lea.sflag [#allocation4], 1
    %2275 = vsyncpa %s2274, 1

</llo_original>
